<compile_context>
chip_gen: v5e
topology: v5e:2x2
jax: 0.10.0
libtpu: 0.0.40
codegen_flags: <defaults>
</compile_context>

<pallas_src>
import jax
import jax.numpy as jnp
from jax.experimental import pallas as pl
from jax.experimental.pallas import tpu as pltpu


# ----------------------------------------------------------------------------
# Fused kernel: GRU pair (target_encoder + decoder) + biLSTM pair (fwd + bwd)
# + fc Linear, all in one pallas_call.
# ----------------------------------------------------------------------------
def _catseq_kernel(u_gru_ref, u_lstm_ref,
                   w_ih_gru_ref, w_hh_gru_ref, b_ih_gru_ref, b_hh_gru_ref,
                   w_ih_lstm_ref, w_hh_lstm_ref, b_lstm_ref,
                   fcw_ref, fcb_ref,
                   gru_out_ref, lstm_out_ref, logits_ref,
                   pre_gru_ref, pre_lstm_ref):
    T, B, _ = u_gru_ref.shape
    H2 = gru_out_ref.shape[-1]            # 2*H  (stacked-pair state width)

    # ---- Prologue: one batched input projection per RNN pair (+ b_ih) ----
    ug = u_gru_ref[...].reshape(T * B, u_gru_ref.shape[-1])
    pre_gru_ref[...] = (
        jnp.dot(ug, w_ih_gru_ref[...], preferred_element_type=jnp.float32)
        + b_ih_gru_ref[...]).reshape(T, B, 3 * H2)

    ul = u_lstm_ref[...].reshape(T * B, u_lstm_ref.shape[-1])
    pre_lstm_ref[...] = (
        jnp.dot(ul, w_ih_lstm_ref[...], preferred_element_type=jnp.float32)
        + b_lstm_ref[...]).reshape(T, B, 4 * H2)

    b_hh_gru = b_hh_gru_ref[...]          # (1, 3*H2), hoisted out of the loop

    def step(t, carry):
        hg, hl, cl = carry

        # --- GRU pair (block-diag stacked; gate cols [r_A r_B z_A z_B n_A n_B])
        ghg = (jnp.dot(hg, w_hh_gru_ref[...],
                       preferred_element_type=jnp.float32) + b_hh_gru)
        pg = pre_gru_ref[t]                                  # (B, 3*H2)
        sg = jax.nn.sigmoid(pg + ghg)                        # full-slab sigmoid
        r = sg[:, 0:H2]
        z = sg[:, H2:2 * H2]
        n = jnp.tanh(pg[:, 2 * H2:] + r * ghg[:, 2 * H2:])
        hg_new = (1.0 - z) * n + z * hg
        gru_out_ref[t] = hg_new.astype(gru_out_ref.dtype)

        # --- biLSTM pair (block-diag stacked; gate cols [i f g o] x [fwd,bwd])
        gl = pre_lstm_ref[t] + jnp.dot(hl, w_hh_lstm_ref[...],
                                       preferred_element_type=jnp.float32)
        sl = jax.nn.sigmoid(gl)                              # full-slab sigmoid
        i_g = sl[:, 0:H2]
        f_g = sl[:, H2:2 * H2]
        g_g = jnp.tanh(gl[:, 2 * H2:3 * H2])
        o_g = sl[:, 3 * H2:]
        cl_new = f_g * cl + i_g * g_g
        hl_new = o_g * jnp.tanh(cl_new)
        lstm_out_ref[t] = hl_new.astype(lstm_out_ref.dtype)

        return (hg_new, hl_new, cl_new)

    zeros = jnp.zeros((B, H2), jnp.float32)
    jax.lax.fori_loop(0, T, step, (zeros, zeros, zeros), unroll=min(T, 8))

    # ---- Epilogue: fc on the VMEM-resident hidden states.
    # fc weight is zero-padded to (2H, V): rows 0:H (target-encoder half) are
    # zero, rows H:2H carry the real fc weight, so no sub-lane slice is needed.
    hs = gru_out_ref[...].reshape(T * B, H2)
    V = fcw_ref.shape[-1]
    logits_ref[...] = (
        jnp.dot(hs, fcw_ref[...], preferred_element_type=jnp.float32)
        + fcb_ref[...]).reshape(T, B, V)


def catseq_fused_call(u_gru, u_lstm, fused, hidden_size, vocab_size):
    T, B, _ = u_gru.shape
    H2 = 2 * hidden_size
    return pl.pallas_call(
        _catseq_kernel,
        out_shape=(jax.ShapeDtypeStruct((T, B, H2), jnp.float32),   # GRU pair
                   jax.ShapeDtypeStruct((T, B, H2), jnp.float32),   # LSTM pair
                   jax.ShapeDtypeStruct((T, B, vocab_size), jnp.float32)),
        scratch_shapes=[pltpu.VMEM((T, B, 3 * H2), jnp.float32),
                        pltpu.VMEM((T, B, 4 * H2), jnp.float32)],
        compiler_params=pltpu.CompilerParams(
            vmem_limit_bytes=32 * 1024 * 1024),
    )(u_gru, u_lstm,
      fused["w_ih_gru"], fused["w_hh_gru"],
      fused["b_ih_gru"], fused["b_hh_gru"],
      fused["w_ih_lstm"], fused["w_hh_lstm"], fused["b_lstm"],
      fused["fc_w_pad"], fused["fc_b"])


# ----------------------------------------------------------------------------
# Parameter construction (deterministic, in-script) and block-diag stacking
# ----------------------------------------------------------------------------
def _uniform(key, shape, bound):
    return jax.random.uniform(key, shape, jnp.float32, -bound, bound)


def init_params(key, input_size, hidden_size, vocab_size):
    """Per-module parameters in natural PyTorch fused-gate layout."""
    H, I, V = hidden_size, input_size, vocab_size
    k = 1.0 / jnp.sqrt(H)                 # PyTorch default RNN init bound
    keys = jax.random.split(key, 18)
    params = {
        # target_encoder: GRU, fused gates (r, z, n)
        "tgt_w_ih": _uniform(keys[0], (I, 3 * H), k),
        "tgt_w_hh": _uniform(keys[1], (H, 3 * H), k),
        "tgt_b_ih": _uniform(keys[2], (1, 3 * H), k),
        "tgt_b_hh": _uniform(keys[3], (1, 3 * H), k),
        # encoder: bidirectional LSTM, fused gates (i, f, g, o), [fwd, bwd]
        "enc_w_ih": _uniform(keys[4], (2, I, 4 * H), k),
        "enc_w_hh": _uniform(keys[5], (2, H, 4 * H), k),
        # b = b_ih + b_hh folded once (LSTM gates are linear in both biases)
        "enc_b": (_uniform(keys[6], (2, 1, 4 * H), k)
                  + _uniform(keys[7], (2, 1, 4 * H), k)),
        # decoder: GRU, fused gates (r, z, n)
        "dec_w_ih": _uniform(keys[8], (I, 3 * H), k),
        "dec_w_hh": _uniform(keys[9], (H, 3 * H), k),
        "dec_b_ih": _uniform(keys[10], (1, 3 * H), k),
        "dec_b_hh": _uniform(keys[11], (1, 3 * H), k),
    }
    # fc: xavier_normal_ (gain=1), stored as (H, V) so kernel does x @ W
    std = jnp.sqrt(2.0 / (H + V))
    params["fc_w"] = std * jax.random.normal(keys[12], (H, V), jnp.float32)
    params["fc_b"] = jnp.zeros((1, V), jnp.float32)
    return params


def _blockdiag(a, b):
    z1 = jnp.zeros((a.shape[0], b.shape[1]), a.dtype)
    z2 = jnp.zeros((b.shape[0], a.shape[1]), b.dtype)
    return jnp.concatenate([jnp.concatenate([a, z1], 1),
                            jnp.concatenate([z2, b], 1)], 0)


def _stack_gate_weights(wa, wb, n_gates, H):
    """(K, n_gates*H) x2 -> (2K, n_gates*2H); per-gate cols [gate_A | gate_B]."""
    return jnp.concatenate(
        [_blockdiag(wa[:, g * H:(g + 1) * H], wb[:, g * H:(g + 1) * H])
         for g in range(n_gates)], axis=1)


def _stack_gate_bias(ba, bb, n_gates, H):
    return jnp.concatenate(
        [jnp.concatenate([ba[:, g * H:(g + 1) * H],
                          bb[:, g * H:(g + 1) * H]], 1)
         for g in range(n_gates)], axis=1)


def build_fused_params(p, hidden_size, vocab_size):
    """Block-diagonal pair-stacked weights for the fused kernel."""
    H, V = hidden_size, vocab_size
    fused = {
        # GRU pair: A = target_encoder (consumes x), B = decoder (consumes y)
        "w_ih_gru": _stack_gate_weights(p["tgt_w_ih"], p["dec_w_ih"], 3, H),
        "w_hh_gru": _stack_gate_weights(p["tgt_w_hh"], p["dec_w_hh"], 3, H),
        "b_ih_gru": _stack_gate_bias(p["tgt_b_ih"], p["dec_b_ih"], 3, H),
        "b_hh_gru": _stack_gate_bias(p["tgt_b_hh"], p["dec_b_hh"], 3, H),
        # LSTM pair: fwd direction + (time-reversed) bwd direction
        "w_ih_lstm": _stack_gate_weights(p["enc_w_ih"][0], p["enc_w_ih"][1], 4, H),
        "w_hh_lstm": _stack_gate_weights(p["enc_w_hh"][0], p["enc_w_hh"][1], 4, H),
        "b_lstm": _stack_gate_bias(p["enc_b"][0], p["enc_b"][1], 4, H),
        # fc applies only to the decoder half of the stacked GRU state
        "fc_w_pad": jnp.concatenate([jnp.zeros((H, V), jnp.float32),
                                     p["fc_w"]], axis=0),      # (2H, V)
        "fc_b": p["fc_b"],
    }
    return fused


# ----------------------------------------------------------------------------
# CatSeq
# ----------------------------------------------------------------------------
class CatSeq:
    def __init__(self, input_size, hidden_size, batch_size, drop_rate,
                 vocab_size, key):
        self.input_size = input_size
        self.hidden_size = hidden_size
        self.batch_size = batch_size
        self.drop_rate = drop_rate
        self.vocab_size = vocab_size
        self.params = init_params(key, input_size, hidden_size, vocab_size)
        self.fused = build_fused_params(self.params, hidden_size, vocab_size)

    def forward(self, x, y):
        # Exact semantics of the PyTorch module: forward returns None.
        return None

    def pipeline(self, x, y):
        """Demo pipeline exercising all sub-module kernels in one pallas_call.

        x: (T, B, I) encoder input, y: (T, B, I) decoder input.
        Returns (target_enc, enc_out, dec_out, logits).
        """
        H = self.hidden_size
        # Pair the two GRUs on a shared time axis; pre-reverse the backward
        # LSTM direction's input so the kernel loop has no dynamic time index.
        u_gru = jnp.concatenate([x, y], axis=-1)           # (T, B, 2I)
        u_lstm = jnp.concatenate([x, x[::-1]], axis=-1)    # (T, B, 2I)

        gru_out, lstm_out, logits = catseq_fused_call(
            u_gru, u_lstm, self.fused, H, self.vocab_size)

        tgt = gru_out[:, :, :H]                            # target_encoder
        dec = gru_out[:, :, H:]                            # decoder hidden
        enc = jnp.concatenate([lstm_out[:, :, :H],         # fwd (time order)
                               lstm_out[:, :, H:][::-1]],  # bwd (un-reversed)
                              axis=-1)
        return tgt, enc, dec, logits


# ----------------------------------------------------------------------------
# Pure-JAX references for correctness checking (natural per-module layout)
# ----------------------------------------------------------------------------
def _gru_ref(x, w_ih, w_hh, b_ih, b_hh, h0):
    H = h0.shape[-1]

    def step(h, x_t):
        gx = x_t @ w_ih + b_ih
        gh = h @ w_hh + b_hh
        r = jax.nn.sigmoid(gx[:, :H] + gh[:, :H])
        z = jax.nn.sigmoid(gx[:, H:2 * H] + gh[:, H:2 * H])
        n = jnp.tanh(gx[:, 2 * H:] + r * gh[:, 2 * H:])
        h_new = (1.0 - z) * n + z * h
        return h_new, h_new

    _, ys = jax.lax.scan(step, h0, x)
    return ys


def _lstm_ref(x, w_ih, w_hh, b, h0, c0, reverse=False):
    H = h0.shape[-1]
    xs = x[::-1] if reverse else x

    def step(carry, x_t):
        h, c = carry
        g = x_t @ w_ih + h @ w_hh + b
        i_g = jax.nn.sigmoid(g[:, :H])
        f_g = jax.nn.sigmoid(g[:, H:2 * H])
        g_g = jnp.tanh(g[:, 2 * H:3 * H])
        o_g = jax.nn.sigmoid(g[:, 3 * H:])
        c_new = f_g * c + i_g * g_g
        h_new = o_g * jnp.tanh(c_new)
        return (h_new, c_new), h_new

    _, ys = jax.lax.scan(step, (h0, c0), xs)
    return ys[::-1] if reverse else ys


# ----------------------------------------------------------------------------
if __name__ == "__main__":
    T, B, I, H, V = 8, 8, 16, 32, 64

    key = jax.random.PRNGKey(0)
    k_model, k_x, k_y = jax.random.split(key, 3)

    model = CatSeq(input_size=I, hidden_size=H, batch_size=B,
                   drop_rate=0.1, vocab_size=V, key=k_model)

    x = jax.random.normal(k_x, (T, B, I), jnp.float32)
    y = jax.random.normal(k_y, (T, B, I), jnp.float32)

    # The literal CatSeq.forward is a no-op returning None (matched exactly).
    assert model.forward(x, y) is None

    pipe = jax.jit(model.pipeline)
    tgt, enc, dec, logits = jax.block_until_ready(pipe(x, y))
    assert tgt.shape == (T, B, H)
    assert enc.shape == (T, B, 2 * H)
    assert dec.shape == (T, B, H)
    assert logits.shape == (T, B, V)

    # Numerical sanity check against pure-JAX scan references.
    p = model.params
    h0 = jnp.zeros((B, H), jnp.float32)
    c0 = jnp.zeros((B, H), jnp.float32)
    tgt_ref = _gru_ref(x, p["tgt_w_ih"], p["tgt_w_hh"],
                       p["tgt_b_ih"], p["tgt_b_hh"], h0)
    enc_f_ref = _lstm_ref(x, p["enc_w_ih"][0], p["enc_w_hh"][0],
                          p["enc_b"][0], h0, c0, reverse=False)
    enc_b_ref = _lstm_ref(x, p["enc_w_ih"][1], p["enc_w_hh"][1],
                          p["enc_b"][1], h0, c0, reverse=True)
    enc_ref = jnp.concatenate([enc_f_ref, enc_b_ref], axis=-1)
    dec_ref = _gru_ref(y, p["dec_w_ih"], p["dec_w_hh"],
                       p["dec_b_ih"], p["dec_b_hh"], h0)
    logits_ref = (dec_ref.reshape(T * B, H) @ p["fc_w"]
                  + p["fc_b"]).reshape(T, B, V)

    assert jnp.allclose(tgt, tgt_ref, atol=1e-4, rtol=1e-4)
    assert jnp.allclose(enc, enc_ref, atol=1e-4, rtol=1e-4)
    assert jnp.allclose(dec, dec_ref, atol=1e-4, rtol=1e-4)
    assert jnp.allclose(logits, logits_ref, atol=1e-4, rtol=1e-4)

    print("KERNEL_OK")
</pallas_src>

<mosaic_0001>
module attributes {stable_mosaic.version = 11 : i64} {
  func.func @_catseq_kernel(%arg0: memref<8x8x32xf32, #tpu.memory_space<vmem>>, %arg1: memref<8x8x32xf32, #tpu.memory_space<vmem>>, %arg2: memref<32x192xf32, #tpu.memory_space<vmem>>, %arg3: memref<64x192xf32, #tpu.memory_space<vmem>>, %arg4: memref<1x192xf32, #tpu.memory_space<vmem>>, %arg5: memref<1x192xf32, #tpu.memory_space<vmem>>, %arg6: memref<32x256xf32, #tpu.memory_space<vmem>>, %arg7: memref<64x256xf32, #tpu.memory_space<vmem>>, %arg8: memref<1x256xf32, #tpu.memory_space<vmem>>, %arg9: memref<64x64xf32, #tpu.memory_space<vmem>>, %arg10: memref<1x64xf32, #tpu.memory_space<vmem>>, %arg11: memref<8x8x64xf32, #tpu.memory_space<vmem>>, %arg12: memref<8x8x64xf32, #tpu.memory_space<vmem>>, %arg13: memref<8x8x64xf32, #tpu.memory_space<vmem>>, %arg14: memref<8x8x192xf32, #tpu.memory_space<vmem>>, %arg15: memref<8x8x256xf32, #tpu.memory_space<vmem>>) attributes {dimension_semantics = [], scalar_prefetch = 0 : i64, scratch_operands = 2 : i64, tpu.core_type = #tpu.core_type<tc>} {
    %c0 = arith.constant 0 : index
    %c0_0 = arith.constant 0 : index
    %c0_1 = arith.constant 0 : index
    %0 = vector.load %arg0[%c0, %c0_0, %c0_1] : memref<8x8x32xf32, #tpu.memory_space<vmem>>, vector<8x8x32xf32>
    %1 = vector.shape_cast %0 : vector<8x8x32xf32> to vector<64x32xf32>
    %c0_2 = arith.constant 0 : index
    %c0_3 = arith.constant 0 : index
    %2 = vector.load %arg2[%c0_2, %c0_3] : memref<32x192xf32, #tpu.memory_space<vmem>>, vector<32x192xf32>
    %cst = arith.constant dense<0.000000e+00> : vector<64x192xf32>
    %3 = tpu.matmul %1, %2, %cst {dimension_numbers = #tpu.dot_dimension_numbers<[1], [0], [0], [1], [0, 0, 1, 1], [], []>} : vector<64x32xf32>, vector<32x192xf32>, vector<64x192xf32> -> vector<64x192xf32>
    %c0_4 = arith.constant 0 : index
    %c0_5 = arith.constant 0 : index
    %4 = vector.load %arg4[%c0_4, %c0_5] : memref<1x192xf32, #tpu.memory_space<vmem>>, vector<1x192xf32>
    %5 = vector.broadcast %4 : vector<1x192xf32> to vector<64x192xf32>
    %6 = arith.addf %3, %5 : vector<64x192xf32>
    %7 = vector.shape_cast %6 : vector<64x192xf32> to vector<8x8x192xf32>
    %c0_6 = arith.constant 0 : index
    %c0_7 = arith.constant 0 : index
    %c0_8 = arith.constant 0 : index
    %8 = vector.load %arg14[%c0_6, %c0_7, %c0_8] : memref<8x8x192xf32, #tpu.memory_space<vmem>>, vector<8x8x192xf32>
    tpu.vector_store %arg14[%c0_6, %c0_7, %c0_8], %7 {strides = array<i32>} : memref<8x8x192xf32, #tpu.memory_space<vmem>>, vector<8x8x192xf32>,
    %c0_9 = arith.constant 0 : index
    %c0_10 = arith.constant 0 : index
    %c0_11 = arith.constant 0 : index
    %9 = vector.load %arg1[%c0_9, %c0_10, %c0_11] : memref<8x8x32xf32, #tpu.memory_space<vmem>>, vector<8x8x32xf32>
    %10 = vector.shape_cast %9 : vector<8x8x32xf32> to vector<64x32xf32>
    %c0_12 = arith.constant 0 : index
    %c0_13 = arith.constant 0 : index
    %11 = vector.load %arg6[%c0_12, %c0_13] : memref<32x256xf32, #tpu.memory_space<vmem>>, vector<32x256xf32>
    %cst_14 = arith.constant dense<0.000000e+00> : vector<64x256xf32>
    %12 = tpu.matmul %10, %11, %cst_14 {dimension_numbers = #tpu.dot_dimension_numbers<[1], [0], [0], [1], [0, 0, 1, 1], [], []>} : vector<64x32xf32>, vector<32x256xf32>, vector<64x256xf32> -> vector<64x256xf32>
    %c0_15 = arith.constant 0 : index
    %c0_16 = arith.constant 0 : index
    %13 = vector.load %arg8[%c0_15, %c0_16] : memref<1x256xf32, #tpu.memory_space<vmem>>, vector<1x256xf32>
    %14 = vector.broadcast %13 : vector<1x256xf32> to vector<64x256xf32>
    %15 = arith.addf %12, %14 : vector<64x256xf32>
    %16 = vector.shape_cast %15 : vector<64x256xf32> to vector<8x8x256xf32>
    %c0_17 = arith.constant 0 : index
    %c0_18 = arith.constant 0 : index
    %c0_19 = arith.constant 0 : index
    %17 = vector.load %arg15[%c0_17, %c0_18, %c0_19] : memref<8x8x256xf32, #tpu.memory_space<vmem>>, vector<8x8x256xf32>
    tpu.vector_store %arg15[%c0_17, %c0_18, %c0_19], %16 {strides = array<i32>} : memref<8x8x256xf32, #tpu.memory_space<vmem>>, vector<8x8x256xf32>,
    %c0_20 = arith.constant 0 : index
    %c0_21 = arith.constant 0 : index
    %18 = vector.load %arg5[%c0_20, %c0_21] : memref<1x192xf32, #tpu.memory_space<vmem>>, vector<1x192xf32>
    %cst_22 = arith.constant 0.000000e+00 : f32
    %19 = vector.broadcast %cst_22 : f32 to vector<8x64xf32>
    %c0_i32 = arith.constant 0 : i32
    %c0_23 = arith.constant 0 : index
    %c0_24 = arith.constant 0 : index
    %20 = vector.load %arg3[%c0_23, %c0_24] : memref<64x192xf32, #tpu.memory_space<vmem>>, vector<64x192xf32>
    %cst_25 = arith.constant dense<0.000000e+00> : vector<8x192xf32>
    %21 = tpu.matmul %19, %20, %cst_25 {dimension_numbers = #tpu.dot_dimension_numbers<[1], [0], [0], [1], [0, 0, 1, 1], [], []>} : vector<8x64xf32>, vector<64x192xf32>, vector<8x192xf32> -> vector<8x192xf32>
    %22 = vector.broadcast %18 : vector<1x192xf32> to vector<8x192xf32>
    %23 = arith.addf %21, %22 : vector<8x192xf32>
    %24 = arith.index_cast %c0_i32 : i32 to index
    %c0_26 = arith.constant 0 : index
    %c0_27 = arith.constant 0 : index
    %25 = vector.load %arg14[%24, %c0_26, %c0_27] : memref<8x8x192xf32, #tpu.memory_space<vmem>>, vector<1x8x192xf32>
    %26 = vector.shape_cast %25 : vector<1x8x192xf32> to vector<8x192xf32>
    %27 = arith.addf %26, %23 : vector<8x192xf32>
    %28 = arith.negf %27 : vector<8x192xf32>
    %29 = math.exp %28 : vector<8x192xf32>
    %cst_28 = arith.constant 1.000000e+00 : f32
    %30 = vector.broadcast %cst_28 : f32 to vector<8x192xf32>
    %31 = arith.addf %30, %29 : vector<8x192xf32>
    %32 = arith.divf %30, %31 : vector<8x192xf32>
    %33 = vector.extract_strided_slice %32 {offsets = [0, 0], sizes = [8, 64], strides = [1, 1]} : vector<8x192xf32> to vector<8x64xf32>
    %34 = vector.extract_strided_slice %32 {offsets = [0, 64], sizes = [8, 64], strides = [1, 1]} : vector<8x192xf32> to vector<8x64xf32>
    %35 = vector.extract_strided_slice %26 {offsets = [0, 128], sizes = [8, 64], strides = [1, 1]} : vector<8x192xf32> to vector<8x64xf32>
    %36 = vector.extract_strided_slice %23 {offsets = [0, 128], sizes = [8, 64], strides = [1, 1]} : vector<8x192xf32> to vector<8x64xf32>
    %37 = arith.mulf %33, %36 : vector<8x64xf32>
    %38 = arith.addf %35, %37 : vector<8x64xf32>
    %39 = math.tanh %38 : vector<8x64xf32>
    %cst_29 = arith.constant 1.000000e+00 : f32
    %40 = vector.broadcast %cst_29 : f32 to vector<8x64xf32>
    %41 = arith.subf %40, %34 : vector<8x64xf32>
    %42 = arith.mulf %41, %39 : vector<8x64xf32>
    %43 = arith.mulf %34, %19 : vector<8x64xf32>
    %44 = arith.addf %42, %43 : vector<8x64xf32>
    %45 = arith.index_cast %c0_i32 : i32 to index
    %c0_30 = arith.constant 0 : index
    %c0_31 = arith.constant 0 : index
    %46 = vector.load %arg11[%45, %c0_30, %c0_31] : memref<8x8x64xf32, #tpu.memory_space<vmem>>, vector<1x8x64xf32>
    %47 = vector.shape_cast %46 : vector<1x8x64xf32> to vector<8x64xf32>
    %48 = vector.shape_cast %44 : vector<8x64xf32> to vector<1x8x64xf32>
    tpu.vector_store %arg11[%45, %c0_30, %c0_31], %48 {strides = array<i32>} : memref<8x8x64xf32, #tpu.memory_space<vmem>>, vector<1x8x64xf32>,
    %49 = arith.index_cast %c0_i32 : i32 to index
    %c0_32 = arith.constant 0 : index
    %c0_33 = arith.constant 0 : index
    %50 = vector.load %arg15[%49, %c0_32, %c0_33] : memref<8x8x256xf32, #tpu.memory_space<vmem>>, vector<1x8x256xf32>
    %51 = vector.shape_cast %50 : vector<1x8x256xf32> to vector<8x256xf32>
    %c0_34 = arith.constant 0 : index
    %c0_35 = arith.constant 0 : index
    %52 = vector.load %arg7[%c0_34, %c0_35] : memref<64x256xf32, #tpu.memory_space<vmem>>, vector<64x256xf32>
    %cst_36 = arith.constant dense<0.000000e+00> : vector<8x256xf32>
    %53 = tpu.matmul %19, %52, %cst_36 {dimension_numbers = #tpu.dot_dimension_numbers<[1], [0], [0], [1], [0, 0, 1, 1], [], []>} : vector<8x64xf32>, vector<64x256xf32>, vector<8x256xf32> -> vector<8x256xf32>
    %54 = arith.addf %51, %53 : vector<8x256xf32>
    %55 = arith.negf %54 : vector<8x256xf32>
    %56 = math.exp %55 : vector<8x256xf32>
    %cst_37 = arith.constant 1.000000e+00 : f32
    %57 = vector.broadcast %cst_37 : f32 to vector<8x256xf32>
    %58 = arith.addf %57, %56 : vector<8x256xf32>
    %59 = arith.divf %57, %58 : vector<8x256xf32>
    %60 = vector.extract_strided_slice %59 {offsets = [0, 0], sizes = [8, 64], strides = [1, 1]} : vector<8x256xf32> to vector<8x64xf32>
    %61 = vector.extract_strided_slice %59 {offsets = [0, 64], sizes = [8, 64], strides = [1, 1]} : vector<8x256xf32> to vector<8x64xf32>
    %62 = vector.extract_strided_slice %54 {offsets = [0, 128], sizes = [8, 64], strides = [1, 1]} : vector<8x256xf32> to vector<8x64xf32>
    %63 = math.tanh %62 : vector<8x64xf32>
    %64 = vector.extract_strided_slice %59 {offsets = [0, 192], sizes = [8, 64], strides = [1, 1]} : vector<8x256xf32> to vector<8x64xf32>
    %65 = arith.mulf %61, %19 : vector<8x64xf32>
    %66 = arith.mulf %60, %63 : vector<8x64xf32>
    %67 = arith.addf %65, %66 : vector<8x64xf32>
    %68 = math.tanh %67 : vector<8x64xf32>
    %69 = arith.mulf %64, %68 : vector<8x64xf32>
    %70 = arith.index_cast %c0_i32 : i32 to index
    %c0_38 = arith.constant 0 : index
    %c0_39 = arith.constant 0 : index
    %71 = vector.load %arg12[%70, %c0_38, %c0_39] : memref<8x8x64xf32, #tpu.memory_space<vmem>>, vector<1x8x64xf32>
    %72 = vector.shape_cast %71 : vector<1x8x64xf32> to vector<8x64xf32>
    %73 = vector.shape_cast %69 : vector<8x64xf32> to vector<1x8x64xf32>
    tpu.vector_store %arg12[%70, %c0_38, %c0_39], %73 {strides = array<i32>} : memref<8x8x64xf32, #tpu.memory_space<vmem>>, vector<1x8x64xf32>,
    %c1_i32 = arith.constant 1 : i32
    %c0_40 = arith.constant 0 : index
    %c0_41 = arith.constant 0 : index
    %74 = vector.load %arg3[%c0_40, %c0_41] : memref<64x192xf32, #tpu.memory_space<vmem>>, vector<64x192xf32>
    %cst_42 = arith.constant dense<0.000000e+00> : vector<8x192xf32>
    %75 = tpu.matmul %44, %74, %cst_42 {dimension_numbers = #tpu.dot_dimension_numbers<[1], [0], [0], [1], [0, 0, 1, 1], [], []>} : vector<8x64xf32>, vector<64x192xf32>, vector<8x192xf32> -> vector<8x192xf32>
    %76 = vector.broadcast %18 : vector<1x192xf32> to vector<8x192xf32>
    %77 = arith.addf %75, %76 : vector<8x192xf32>
    %78 = arith.index_cast %c1_i32 : i32 to index
    %c0_43 = arith.constant 0 : index
    %c0_44 = arith.constant 0 : index
    %79 = vector.load %arg14[%78, %c0_43, %c0_44] : memref<8x8x192xf32, #tpu.memory_space<vmem>>, vector<1x8x192xf32>
    %80 = vector.shape_cast %79 : vector<1x8x192xf32> to vector<8x192xf32>
    %81 = arith.addf %80, %77 : vector<8x192xf32>
    %82 = arith.negf %81 : vector<8x192xf32>
    %83 = math.exp %82 : vector<8x192xf32>
    %cst_45 = arith.constant 1.000000e+00 : f32
    %84 = vector.broadcast %cst_45 : f32 to vector<8x192xf32>
    %85 = arith.addf %84, %83 : vector<8x192xf32>
    %86 = arith.divf %84, %85 : vector<8x192xf32>
    %87 = vector.extract_strided_slice %86 {offsets = [0, 0], sizes = [8, 64], strides = [1, 1]} : vector<8x192xf32> to vector<8x64xf32>
    %88 = vector.extract_strided_slice %86 {offsets = [0, 64], sizes = [8, 64], strides = [1, 1]} : vector<8x192xf32> to vector<8x64xf32>
    %89 = vector.extract_strided_slice %80 {offsets = [0, 128], sizes = [8, 64], strides = [1, 1]} : vector<8x192xf32> to vector<8x64xf32>
    %90 = vector.extract_strided_slice %77 {offsets = [0, 128], sizes = [8, 64], strides = [1, 1]} : vector<8x192xf32> to vector<8x64xf32>
    %91 = arith.mulf %87, %90 : vector<8x64xf32>
    %92 = arith.addf %89, %91 : vector<8x64xf32>
    %93 = math.tanh %92 : vector<8x64xf32>
    %cst_46 = arith.constant 1.000000e+00 : f32
    %94 = vector.broadcast %cst_46 : f32 to vector<8x64xf32>
    %95 = arith.subf %94, %88 : vector<8x64xf32>
    %96 = arith.mulf %95, %93 : vector<8x64xf32>
    %97 = arith.mulf %88, %44 : vector<8x64xf32>
    %98 = arith.addf %96, %97 : vector<8x64xf32>
    %99 = arith.index_cast %c1_i32 : i32 to index
    %c0_47 = arith.constant 0 : index
    %c0_48 = arith.constant 0 : index
    %100 = vector.load %arg11[%99, %c0_47, %c0_48] : memref<8x8x64xf32, #tpu.memory_space<vmem>>, vector<1x8x64xf32>
    %101 = vector.shape_cast %100 : vector<1x8x64xf32> to vector<8x64xf32>
    %102 = vector.shape_cast %98 : vector<8x64xf32> to vector<1x8x64xf32>
    tpu.vector_store %arg11[%99, %c0_47, %c0_48], %102 {strides = array<i32>} : memref<8x8x64xf32, #tpu.memory_space<vmem>>, vector<1x8x64xf32>,
    %103 = arith.index_cast %c1_i32 : i32 to index
    %c0_49 = arith.constant 0 : index
    %c0_50 = arith.constant 0 : index
    %104 = vector.load %arg15[%103, %c0_49, %c0_50] : memref<8x8x256xf32, #tpu.memory_space<vmem>>, vector<1x8x256xf32>
    %105 = vector.shape_cast %104 : vector<1x8x256xf32> to vector<8x256xf32>
    %c0_51 = arith.constant 0 : index
    %c0_52 = arith.constant 0 : index
    %106 = vector.load %arg7[%c0_51, %c0_52] : memref<64x256xf32, #tpu.memory_space<vmem>>, vector<64x256xf32>
    %cst_53 = arith.constant dense<0.000000e+00> : vector<8x256xf32>
    %107 = tpu.matmul %69, %106, %cst_53 {dimension_numbers = #tpu.dot_dimension_numbers<[1], [0], [0], [1], [0, 0, 1, 1], [], []>} : vector<8x64xf32>, vector<64x256xf32>, vector<8x256xf32> -> vector<8x256xf32>
    %108 = arith.addf %105, %107 : vector<8x256xf32>
    %109 = arith.negf %108 : vector<8x256xf32>
    %110 = math.exp %109 : vector<8x256xf32>
    %cst_54 = arith.constant 1.000000e+00 : f32
    %111 = vector.broadcast %cst_54 : f32 to vector<8x256xf32>
    %112 = arith.addf %111, %110 : vector<8x256xf32>
    %113 = arith.divf %111, %112 : vector<8x256xf32>
    %114 = vector.extract_strided_slice %113 {offsets = [0, 0], sizes = [8, 64], strides = [1, 1]} : vector<8x256xf32> to vector<8x64xf32>
    %115 = vector.extract_strided_slice %113 {offsets = [0, 64], sizes = [8, 64], strides = [1, 1]} : vector<8x256xf32> to vector<8x64xf32>
    %116 = vector.extract_strided_slice %108 {offsets = [0, 128], sizes = [8, 64], strides = [1, 1]} : vector<8x256xf32> to vector<8x64xf32>
    %117 = math.tanh %116 : vector<8x64xf32>
    %118 = vector.extract_strided_slice %113 {offsets = [0, 192], sizes = [8, 64], strides = [1, 1]} : vector<8x256xf32> to vector<8x64xf32>
    %119 = arith.mulf %115, %67 : vector<8x64xf32>
    %120 = arith.mulf %114, %117 : vector<8x64xf32>
    %121 = arith.addf %119, %120 : vector<8x64xf32>
    %122 = math.tanh %121 : vector<8x64xf32>
    %123 = arith.mulf %118, %122 : vector<8x64xf32>
    %124 = arith.index_cast %c1_i32 : i32 to index
    %c0_55 = arith.constant 0 : index
    %c0_56 = arith.constant 0 : index
    %125 = vector.load %arg12[%124, %c0_55, %c0_56] : memref<8x8x64xf32, #tpu.memory_space<vmem>>, vector<1x8x64xf32>
    %126 = vector.shape_cast %125 : vector<1x8x64xf32> to vector<8x64xf32>
    %127 = vector.shape_cast %123 : vector<8x64xf32> to vector<1x8x64xf32>
    tpu.vector_store %arg12[%124, %c0_55, %c0_56], %127 {strides = array<i32>} : memref<8x8x64xf32, #tpu.memory_space<vmem>>, vector<1x8x64xf32>,
    %c2_i32 = arith.constant 2 : i32
    %c0_57 = arith.constant 0 : index
    %c0_58 = arith.constant 0 : index
    %128 = vector.load %arg3[%c0_57, %c0_58] : memref<64x192xf32, #tpu.memory_space<vmem>>, vector<64x192xf32>
    %cst_59 = arith.constant dense<0.000000e+00> : vector<8x192xf32>
    %129 = tpu.matmul %98, %128, %cst_59 {dimension_numbers = #tpu.dot_dimension_numbers<[1], [0], [0], [1], [0, 0, 1, 1], [], []>} : vector<8x64xf32>, vector<64x192xf32>, vector<8x192xf32> -> vector<8x192xf32>
    %130 = vector.broadcast %18 : vector<1x192xf32> to vector<8x192xf32>
    %131 = arith.addf %129, %130 : vector<8x192xf32>
    %132 = arith.index_cast %c2_i32 : i32 to index
    %c0_60 = arith.constant 0 : index
    %c0_61 = arith.constant 0 : index
    %133 = vector.load %arg14[%132, %c0_60, %c0_61] : memref<8x8x192xf32, #tpu.memory_space<vmem>>, vector<1x8x192xf32>
    %134 = vector.shape_cast %133 : vector<1x8x192xf32> to vector<8x192xf32>
    %135 = arith.addf %134, %131 : vector<8x192xf32>
    %136 = arith.negf %135 : vector<8x192xf32>
    %137 = math.exp %136 : vector<8x192xf32>
    %cst_62 = arith.constant 1.000000e+00 : f32
    %138 = vector.broadcast %cst_62 : f32 to vector<8x192xf32>
    %139 = arith.addf %138, %137 : vector<8x192xf32>
    %140 = arith.divf %138, %139 : vector<8x192xf32>
    %141 = vector.extract_strided_slice %140 {offsets = [0, 0], sizes = [8, 64], strides = [1, 1]} : vector<8x192xf32> to vector<8x64xf32>
    %142 = vector.extract_strided_slice %140 {offsets = [0, 64], sizes = [8, 64], strides = [1, 1]} : vector<8x192xf32> to vector<8x64xf32>
    %143 = vector.extract_strided_slice %134 {offsets = [0, 128], sizes = [8, 64], strides = [1, 1]} : vector<8x192xf32> to vector<8x64xf32>
    %144 = vector.extract_strided_slice %131 {offsets = [0, 128], sizes = [8, 64], strides = [1, 1]} : vector<8x192xf32> to vector<8x64xf32>
    %145 = arith.mulf %141, %144 : vector<8x64xf32>
    %146 = arith.addf %143, %145 : vector<8x64xf32>
    %147 = math.tanh %146 : vector<8x64xf32>
    %cst_63 = arith.constant 1.000000e+00 : f32
    %148 = vector.broadcast %cst_63 : f32 to vector<8x64xf32>
    %149 = arith.subf %148, %142 : vector<8x64xf32>
    %150 = arith.mulf %149, %147 : vector<8x64xf32>
    %151 = arith.mulf %142, %98 : vector<8x64xf32>
    %152 = arith.addf %150, %151 : vector<8x64xf32>
    %153 = arith.index_cast %c2_i32 : i32 to index
    %c0_64 = arith.constant 0 : index
    %c0_65 = arith.constant 0 : index
    %154 = vector.load %arg11[%153, %c0_64, %c0_65] : memref<8x8x64xf32, #tpu.memory_space<vmem>>, vector<1x8x64xf32>
    %155 = vector.shape_cast %154 : vector<1x8x64xf32> to vector<8x64xf32>
    %156 = vector.shape_cast %152 : vector<8x64xf32> to vector<1x8x64xf32>
    tpu.vector_store %arg11[%153, %c0_64, %c0_65], %156 {strides = array<i32>} : memref<8x8x64xf32, #tpu.memory_space<vmem>>, vector<1x8x64xf32>,
    %157 = arith.index_cast %c2_i32 : i32 to index
    %c0_66 = arith.constant 0 : index
    %c0_67 = arith.constant 0 : index
    %158 = vector.load %arg15[%157, %c0_66, %c0_67] : memref<8x8x256xf32, #tpu.memory_space<vmem>>, vector<1x8x256xf32>
    %159 = vector.shape_cast %158 : vector<1x8x256xf32> to vector<8x256xf32>
    %c0_68 = arith.constant 0 : index
    %c0_69 = arith.constant 0 : index
    %160 = vector.load %arg7[%c0_68, %c0_69] : memref<64x256xf32, #tpu.memory_space<vmem>>, vector<64x256xf32>
    %cst_70 = arith.constant dense<0.000000e+00> : vector<8x256xf32>
    %161 = tpu.matmul %123, %160, %cst_70 {dimension_numbers = #tpu.dot_dimension_numbers<[1], [0], [0], [1], [0, 0, 1, 1], [], []>} : vector<8x64xf32>, vector<64x256xf32>, vector<8x256xf32> -> vector<8x256xf32>
    %162 = arith.addf %159, %161 : vector<8x256xf32>
    %163 = arith.negf %162 : vector<8x256xf32>
    %164 = math.exp %163 : vector<8x256xf32>
    %cst_71 = arith.constant 1.000000e+00 : f32
    %165 = vector.broadcast %cst_71 : f32 to vector<8x256xf32>
    %166 = arith.addf %165, %164 : vector<8x256xf32>
    %167 = arith.divf %165, %166 : vector<8x256xf32>
    %168 = vector.extract_strided_slice %167 {offsets = [0, 0], sizes = [8, 64], strides = [1, 1]} : vector<8x256xf32> to vector<8x64xf32>
    %169 = vector.extract_strided_slice %167 {offsets = [0, 64], sizes = [8, 64], strides = [1, 1]} : vector<8x256xf32> to vector<8x64xf32>
    %170 = vector.extract_strided_slice %162 {offsets = [0, 128], sizes = [8, 64], strides = [1, 1]} : vector<8x256xf32> to vector<8x64xf32>
    %171 = math.tanh %170 : vector<8x64xf32>
    %172 = vector.extract_strided_slice %167 {offsets = [0, 192], sizes = [8, 64], strides = [1, 1]} : vector<8x256xf32> to vector<8x64xf32>
    %173 = arith.mulf %169, %121 : vector<8x64xf32>
    %174 = arith.mulf %168, %171 : vector<8x64xf32>
    %175 = arith.addf %173, %174 : vector<8x64xf32>
    %176 = math.tanh %175 : vector<8x64xf32>
    %177 = arith.mulf %172, %176 : vector<8x64xf32>
    %178 = arith.index_cast %c2_i32 : i32 to index
    %c0_72 = arith.constant 0 : index
    %c0_73 = arith.constant 0 : index
    %179 = vector.load %arg12[%178, %c0_72, %c0_73] : memref<8x8x64xf32, #tpu.memory_space<vmem>>, vector<1x8x64xf32>
    %180 = vector.shape_cast %179 : vector<1x8x64xf32> to vector<8x64xf32>
    %181 = vector.shape_cast %177 : vector<8x64xf32> to vector<1x8x64xf32>
    tpu.vector_store %arg12[%178, %c0_72, %c0_73], %181 {strides = array<i32>} : memref<8x8x64xf32, #tpu.memory_space<vmem>>, vector<1x8x64xf32>,
    %c3_i32 = arith.constant 3 : i32
    %c0_74 = arith.constant 0 : index
    %c0_75 = arith.constant 0 : index
    %182 = vector.load %arg3[%c0_74, %c0_75] : memref<64x192xf32, #tpu.memory_space<vmem>>, vector<64x192xf32>
    %cst_76 = arith.constant dense<0.000000e+00> : vector<8x192xf32>
    %183 = tpu.matmul %152, %182, %cst_76 {dimension_numbers = #tpu.dot_dimension_numbers<[1], [0], [0], [1], [0, 0, 1, 1], [], []>} : vector<8x64xf32>, vector<64x192xf32>, vector<8x192xf32> -> vector<8x192xf32>
    %184 = vector.broadcast %18 : vector<1x192xf32> to vector<8x192xf32>
    %185 = arith.addf %183, %184 : vector<8x192xf32>
    %186 = arith.index_cast %c3_i32 : i32 to index
    %c0_77 = arith.constant 0 : index
    %c0_78 = arith.constant 0 : index
    %187 = vector.load %arg14[%186, %c0_77, %c0_78] : memref<8x8x192xf32, #tpu.memory_space<vmem>>, vector<1x8x192xf32>
    %188 = vector.shape_cast %187 : vector<1x8x192xf32> to vector<8x192xf32>
    %189 = arith.addf %188, %185 : vector<8x192xf32>
    %190 = arith.negf %189 : vector<8x192xf32>
    %191 = math.exp %190 : vector<8x192xf32>
    %cst_79 = arith.constant 1.000000e+00 : f32
    %192 = vector.broadcast %cst_79 : f32 to vector<8x192xf32>
    %193 = arith.addf %192, %191 : vector<8x192xf32>
    %194 = arith.divf %192, %193 : vector<8x192xf32>
    %195 = vector.extract_strided_slice %194 {offsets = [0, 0], sizes = [8, 64], strides = [1, 1]} : vector<8x192xf32> to vector<8x64xf32>
    %196 = vector.extract_strided_slice %194 {offsets = [0, 64], sizes = [8, 64], strides = [1, 1]} : vector<8x192xf32> to vector<8x64xf32>
    %197 = vector.extract_strided_slice %188 {offsets = [0, 128], sizes = [8, 64], strides = [1, 1]} : vector<8x192xf32> to vector<8x64xf32>
    %198 = vector.extract_strided_slice %185 {offsets = [0, 128], sizes = [8, 64], strides = [1, 1]} : vector<8x192xf32> to vector<8x64xf32>
    %199 = arith.mulf %195, %198 : vector<8x64xf32>
    %200 = arith.addf %197, %199 : vector<8x64xf32>
    %201 = math.tanh %200 : vector<8x64xf32>
    %cst_80 = arith.constant 1.000000e+00 : f32
    %202 = vector.broadcast %cst_80 : f32 to vector<8x64xf32>
    %203 = arith.subf %202, %196 : vector<8x64xf32>
    %204 = arith.mulf %203, %201 : vector<8x64xf32>
    %205 = arith.mulf %196, %152 : vector<8x64xf32>
    %206 = arith.addf %204, %205 : vector<8x64xf32>
    %207 = arith.index_cast %c3_i32 : i32 to index
    %c0_81 = arith.constant 0 : index
    %c0_82 = arith.constant 0 : index
    %208 = vector.load %arg11[%207, %c0_81, %c0_82] : memref<8x8x64xf32, #tpu.memory_space<vmem>>, vector<1x8x64xf32>
    %209 = vector.shape_cast %208 : vector<1x8x64xf32> to vector<8x64xf32>
    %210 = vector.shape_cast %206 : vector<8x64xf32> to vector<1x8x64xf32>
    tpu.vector_store %arg11[%207, %c0_81, %c0_82], %210 {strides = array<i32>} : memref<8x8x64xf32, #tpu.memory_space<vmem>>, vector<1x8x64xf32>,
    %211 = arith.index_cast %c3_i32 : i32 to index
    %c0_83 = arith.constant 0 : index
    %c0_84 = arith.constant 0 : index
    %212 = vector.load %arg15[%211, %c0_83, %c0_84] : memref<8x8x256xf32, #tpu.memory_space<vmem>>, vector<1x8x256xf32>
    %213 = vector.shape_cast %212 : vector<1x8x256xf32> to vector<8x256xf32>
    %c0_85 = arith.constant 0 : index
    %c0_86 = arith.constant 0 : index
    %214 = vector.load %arg7[%c0_85, %c0_86] : memref<64x256xf32, #tpu.memory_space<vmem>>, vector<64x256xf32>
    %cst_87 = arith.constant dense<0.000000e+00> : vector<8x256xf32>
    %215 = tpu.matmul %177, %214, %cst_87 {dimension_numbers = #tpu.dot_dimension_numbers<[1], [0], [0], [1], [0, 0, 1, 1], [], []>} : vector<8x64xf32>, vector<64x256xf32>, vector<8x256xf32> -> vector<8x256xf32>
    %216 = arith.addf %213, %215 : vector<8x256xf32>
    %217 = arith.negf %216 : vector<8x256xf32>
    %218 = math.exp %217 : vector<8x256xf32>
    %cst_88 = arith.constant 1.000000e+00 : f32
    %219 = vector.broadcast %cst_88 : f32 to vector<8x256xf32>
    %220 = arith.addf %219, %218 : vector<8x256xf32>
    %221 = arith.divf %219, %220 : vector<8x256xf32>
    %222 = vector.extract_strided_slice %221 {offsets = [0, 0], sizes = [8, 64], strides = [1, 1]} : vector<8x256xf32> to vector<8x64xf32>
    %223 = vector.extract_strided_slice %221 {offsets = [0, 64], sizes = [8, 64], strides = [1, 1]} : vector<8x256xf32> to vector<8x64xf32>
    %224 = vector.extract_strided_slice %216 {offsets = [0, 128], sizes = [8, 64], strides = [1, 1]} : vector<8x256xf32> to vector<8x64xf32>
    %225 = math.tanh %224 : vector<8x64xf32>
    %226 = vector.extract_strided_slice %221 {offsets = [0, 192], sizes = [8, 64], strides = [1, 1]} : vector<8x256xf32> to vector<8x64xf32>
    %227 = arith.mulf %223, %175 : vector<8x64xf32>
    %228 = arith.mulf %222, %225 : vector<8x64xf32>
    %229 = arith.addf %227, %228 : vector<8x64xf32>
    %230 = math.tanh %229 : vector<8x64xf32>
    %231 = arith.mulf %226, %230 : vector<8x64xf32>
    %232 = arith.index_cast %c3_i32 : i32 to index
    %c0_89 = arith.constant 0 : index
    %c0_90 = arith.constant 0 : index
    %233 = vector.load %arg12[%232, %c0_89, %c0_90] : memref<8x8x64xf32, #tpu.memory_space<vmem>>, vector<1x8x64xf32>
    %234 = vector.shape_cast %233 : vector<1x8x64xf32> to vector<8x64xf32>
    %235 = vector.shape_cast %231 : vector<8x64xf32> to vector<1x8x64xf32>
    tpu.vector_store %arg12[%232, %c0_89, %c0_90], %235 {strides = array<i32>} : memref<8x8x64xf32, #tpu.memory_space<vmem>>, vector<1x8x64xf32>,
    %c4_i32 = arith.constant 4 : i32
    %c0_91 = arith.constant 0 : index
    %c0_92 = arith.constant 0 : index
    %236 = vector.load %arg3[%c0_91, %c0_92] : memref<64x192xf32, #tpu.memory_space<vmem>>, vector<64x192xf32>
    %cst_93 = arith.constant dense<0.000000e+00> : vector<8x192xf32>
    %237 = tpu.matmul %206, %236, %cst_93 {dimension_numbers = #tpu.dot_dimension_numbers<[1], [0], [0], [1], [0, 0, 1, 1], [], []>} : vector<8x64xf32>, vector<64x192xf32>, vector<8x192xf32> -> vector<8x192xf32>
    %238 = vector.broadcast %18 : vector<1x192xf32> to vector<8x192xf32>
    %239 = arith.addf %237, %238 : vector<8x192xf32>
    %240 = arith.index_cast %c4_i32 : i32 to index
    %c0_94 = arith.constant 0 : index
    %c0_95 = arith.constant 0 : index
    %241 = vector.load %arg14[%240, %c0_94, %c0_95] : memref<8x8x192xf32, #tpu.memory_space<vmem>>, vector<1x8x192xf32>
    %242 = vector.shape_cast %241 : vector<1x8x192xf32> to vector<8x192xf32>
    %243 = arith.addf %242, %239 : vector<8x192xf32>
    %244 = arith.negf %243 : vector<8x192xf32>
    %245 = math.exp %244 : vector<8x192xf32>
    %cst_96 = arith.constant 1.000000e+00 : f32
    %246 = vector.broadcast %cst_96 : f32 to vector<8x192xf32>
    %247 = arith.addf %246, %245 : vector<8x192xf32>
    %248 = arith.divf %246, %247 : vector<8x192xf32>
    %249 = vector.extract_strided_slice %248 {offsets = [0, 0], sizes = [8, 64], strides = [1, 1]} : vector<8x192xf32> to vector<8x64xf32>
    %250 = vector.extract_strided_slice %248 {offsets = [0, 64], sizes = [8, 64], strides = [1, 1]} : vector<8x192xf32> to vector<8x64xf32>
    %251 = vector.extract_strided_slice %242 {offsets = [0, 128], sizes = [8, 64], strides = [1, 1]} : vector<8x192xf32> to vector<8x64xf32>
    %252 = vector.extract_strided_slice %239 {offsets = [0, 128], sizes = [8, 64], strides = [1, 1]} : vector<8x192xf32> to vector<8x64xf32>
    %253 = arith.mulf %249, %252 : vector<8x64xf32>
    %254 = arith.addf %251, %253 : vector<8x64xf32>
    %255 = math.tanh %254 : vector<8x64xf32>
    %cst_97 = arith.constant 1.000000e+00 : f32
    %256 = vector.broadcast %cst_97 : f32 to vector<8x64xf32>
    %257 = arith.subf %256, %250 : vector<8x64xf32>
    %258 = arith.mulf %257, %255 : vector<8x64xf32>
    %259 = arith.mulf %250, %206 : vector<8x64xf32>
    %260 = arith.addf %258, %259 : vector<8x64xf32>
    %261 = arith.index_cast %c4_i32 : i32 to index
    %c0_98 = arith.constant 0 : index
    %c0_99 = arith.constant 0 : index
    %262 = vector.load %arg11[%261, %c0_98, %c0_99] : memref<8x8x64xf32, #tpu.memory_space<vmem>>, vector<1x8x64xf32>
    %263 = vector.shape_cast %262 : vector<1x8x64xf32> to vector<8x64xf32>
    %264 = vector.shape_cast %260 : vector<8x64xf32> to vector<1x8x64xf32>
    tpu.vector_store %arg11[%261, %c0_98, %c0_99], %264 {strides = array<i32>} : memref<8x8x64xf32, #tpu.memory_space<vmem>>, vector<1x8x64xf32>,
    %265 = arith.index_cast %c4_i32 : i32 to index
    %c0_100 = arith.constant 0 : index
    %c0_101 = arith.constant 0 : index
    %266 = vector.load %arg15[%265, %c0_100, %c0_101] : memref<8x8x256xf32, #tpu.memory_space<vmem>>, vector<1x8x256xf32>
    %267 = vector.shape_cast %266 : vector<1x8x256xf32> to vector<8x256xf32>
    %c0_102 = arith.constant 0 : index
    %c0_103 = arith.constant 0 : index
    %268 = vector.load %arg7[%c0_102, %c0_103] : memref<64x256xf32, #tpu.memory_space<vmem>>, vector<64x256xf32>
    %cst_104 = arith.constant dense<0.000000e+00> : vector<8x256xf32>
    %269 = tpu.matmul %231, %268, %cst_104 {dimension_numbers = #tpu.dot_dimension_numbers<[1], [0], [0], [1], [0, 0, 1, 1], [], []>} : vector<8x64xf32>, vector<64x256xf32>, vector<8x256xf32> -> vector<8x256xf32>
    %270 = arith.addf %267, %269 : vector<8x256xf32>
    %271 = arith.negf %270 : vector<8x256xf32>
    %272 = math.exp %271 : vector<8x256xf32>
    %cst_105 = arith.constant 1.000000e+00 : f32
    %273 = vector.broadcast %cst_105 : f32 to vector<8x256xf32>
    %274 = arith.addf %273, %272 : vector<8x256xf32>
    %275 = arith.divf %273, %274 : vector<8x256xf32>
    %276 = vector.extract_strided_slice %275 {offsets = [0, 0], sizes = [8, 64], strides = [1, 1]} : vector<8x256xf32> to vector<8x64xf32>
    %277 = vector.extract_strided_slice %275 {offsets = [0, 64], sizes = [8, 64], strides = [1, 1]} : vector<8x256xf32> to vector<8x64xf32>
    %278 = vector.extract_strided_slice %270 {offsets = [0, 128], sizes = [8, 64], strides = [1, 1]} : vector<8x256xf32> to vector<8x64xf32>
    %279 = math.tanh %278 : vector<8x64xf32>
    %280 = vector.extract_strided_slice %275 {offsets = [0, 192], sizes = [8, 64], strides = [1, 1]} : vector<8x256xf32> to vector<8x64xf32>
    %281 = arith.mulf %277, %229 : vector<8x64xf32>
    %282 = arith.mulf %276, %279 : vector<8x64xf32>
    %283 = arith.addf %281, %282 : vector<8x64xf32>
    %284 = math.tanh %283 : vector<8x64xf32>
    %285 = arith.mulf %280, %284 : vector<8x64xf32>
    %286 = arith.index_cast %c4_i32 : i32 to index
    %c0_106 = arith.constant 0 : index
    %c0_107 = arith.constant 0 : index
    %287 = vector.load %arg12[%286, %c0_106, %c0_107] : memref<8x8x64xf32, #tpu.memory_space<vmem>>, vector<1x8x64xf32>
    %288 = vector.shape_cast %287 : vector<1x8x64xf32> to vector<8x64xf32>
    %289 = vector.shape_cast %285 : vector<8x64xf32> to vector<1x8x64xf32>
    tpu.vector_store %arg12[%286, %c0_106, %c0_107], %289 {strides = array<i32>} : memref<8x8x64xf32, #tpu.memory_space<vmem>>, vector<1x8x64xf32>,
    %c5_i32 = arith.constant 5 : i32
    %c0_108 = arith.constant 0 : index
    %c0_109 = arith.constant 0 : index
    %290 = vector.load %arg3[%c0_108, %c0_109] : memref<64x192xf32, #tpu.memory_space<vmem>>, vector<64x192xf32>
    %cst_110 = arith.constant dense<0.000000e+00> : vector<8x192xf32>
    %291 = tpu.matmul %260, %290, %cst_110 {dimension_numbers = #tpu.dot_dimension_numbers<[1], [0], [0], [1], [0, 0, 1, 1], [], []>} : vector<8x64xf32>, vector<64x192xf32>, vector<8x192xf32> -> vector<8x192xf32>
    %292 = vector.broadcast %18 : vector<1x192xf32> to vector<8x192xf32>
    %293 = arith.addf %291, %292 : vector<8x192xf32>
    %294 = arith.index_cast %c5_i32 : i32 to index
    %c0_111 = arith.constant 0 : index
    %c0_112 = arith.constant 0 : index
    %295 = vector.load %arg14[%294, %c0_111, %c0_112] : memref<8x8x192xf32, #tpu.memory_space<vmem>>, vector<1x8x192xf32>
    %296 = vector.shape_cast %295 : vector<1x8x192xf32> to vector<8x192xf32>
    %297 = arith.addf %296, %293 : vector<8x192xf32>
    %298 = arith.negf %297 : vector<8x192xf32>
    %299 = math.exp %298 : vector<8x192xf32>
    %cst_113 = arith.constant 1.000000e+00 : f32
    %300 = vector.broadcast %cst_113 : f32 to vector<8x192xf32>
    %301 = arith.addf %300, %299 : vector<8x192xf32>
    %302 = arith.divf %300, %301 : vector<8x192xf32>
    %303 = vector.extract_strided_slice %302 {offsets = [0, 0], sizes = [8, 64], strides = [1, 1]} : vector<8x192xf32> to vector<8x64xf32>
    %304 = vector.extract_strided_slice %302 {offsets = [0, 64], sizes = [8, 64], strides = [1, 1]} : vector<8x192xf32> to vector<8x64xf32>
    %305 = vector.extract_strided_slice %296 {offsets = [0, 128], sizes = [8, 64], strides = [1, 1]} : vector<8x192xf32> to vector<8x64xf32>
    %306 = vector.extract_strided_slice %293 {offsets = [0, 128], sizes = [8, 64], strides = [1, 1]} : vector<8x192xf32> to vector<8x64xf32>
    %307 = arith.mulf %303, %306 : vector<8x64xf32>
    %308 = arith.addf %305, %307 : vector<8x64xf32>
    %309 = math.tanh %308 : vector<8x64xf32>
    %cst_114 = arith.constant 1.000000e+00 : f32
    %310 = vector.broadcast %cst_114 : f32 to vector<8x64xf32>
    %311 = arith.subf %310, %304 : vector<8x64xf32>
    %312 = arith.mulf %311, %309 : vector<8x64xf32>
    %313 = arith.mulf %304, %260 : vector<8x64xf32>
    %314 = arith.addf %312, %313 : vector<8x64xf32>
    %315 = arith.index_cast %c5_i32 : i32 to index
    %c0_115 = arith.constant 0 : index
    %c0_116 = arith.constant 0 : index
    %316 = vector.load %arg11[%315, %c0_115, %c0_116] : memref<8x8x64xf32, #tpu.memory_space<vmem>>, vector<1x8x64xf32>
    %317 = vector.shape_cast %316 : vector<1x8x64xf32> to vector<8x64xf32>
    %318 = vector.shape_cast %314 : vector<8x64xf32> to vector<1x8x64xf32>
    tpu.vector_store %arg11[%315, %c0_115, %c0_116], %318 {strides = array<i32>} : memref<8x8x64xf32, #tpu.memory_space<vmem>>, vector<1x8x64xf32>,
    %319 = arith.index_cast %c5_i32 : i32 to index
    %c0_117 = arith.constant 0 : index
    %c0_118 = arith.constant 0 : index
    %320 = vector.load %arg15[%319, %c0_117, %c0_118] : memref<8x8x256xf32, #tpu.memory_space<vmem>>, vector<1x8x256xf32>
    %321 = vector.shape_cast %320 : vector<1x8x256xf32> to vector<8x256xf32>
    %c0_119 = arith.constant 0 : index
    %c0_120 = arith.constant 0 : index
    %322 = vector.load %arg7[%c0_119, %c0_120] : memref<64x256xf32, #tpu.memory_space<vmem>>, vector<64x256xf32>
    %cst_121 = arith.constant dense<0.000000e+00> : vector<8x256xf32>
    %323 = tpu.matmul %285, %322, %cst_121 {dimension_numbers = #tpu.dot_dimension_numbers<[1], [0], [0], [1], [0, 0, 1, 1], [], []>} : vector<8x64xf32>, vector<64x256xf32>, vector<8x256xf32> -> vector<8x256xf32>
    %324 = arith.addf %321, %323 : vector<8x256xf32>
    %325 = arith.negf %324 : vector<8x256xf32>
    %326 = math.exp %325 : vector<8x256xf32>
    %cst_122 = arith.constant 1.000000e+00 : f32
    %327 = vector.broadcast %cst_122 : f32 to vector<8x256xf32>
    %328 = arith.addf %327, %326 : vector<8x256xf32>
    %329 = arith.divf %327, %328 : vector<8x256xf32>
    %330 = vector.extract_strided_slice %329 {offsets = [0, 0], sizes = [8, 64], strides = [1, 1]} : vector<8x256xf32> to vector<8x64xf32>
    %331 = vector.extract_strided_slice %329 {offsets = [0, 64], sizes = [8, 64], strides = [1, 1]} : vector<8x256xf32> to vector<8x64xf32>
    %332 = vector.extract_strided_slice %324 {offsets = [0, 128], sizes = [8, 64], strides = [1, 1]} : vector<8x256xf32> to vector<8x64xf32>
    %333 = math.tanh %332 : vector<8x64xf32>
    %334 = vector.extract_strided_slice %329 {offsets = [0, 192], sizes = [8, 64], strides = [1, 1]} : vector<8x256xf32> to vector<8x64xf32>
    %335 = arith.mulf %331, %283 : vector<8x64xf32>
    %336 = arith.mulf %330, %333 : vector<8x64xf32>
    %337 = arith.addf %335, %336 : vector<8x64xf32>
    %338 = math.tanh %337 : vector<8x64xf32>
    %339 = arith.mulf %334, %338 : vector<8x64xf32>
    %340 = arith.index_cast %c5_i32 : i32 to index
    %c0_123 = arith.constant 0 : index
    %c0_124 = arith.constant 0 : index
    %341 = vector.load %arg12[%340, %c0_123, %c0_124] : memref<8x8x64xf32, #tpu.memory_space<vmem>>, vector<1x8x64xf32>
    %342 = vector.shape_cast %341 : vector<1x8x64xf32> to vector<8x64xf32>
    %343 = vector.shape_cast %339 : vector<8x64xf32> to vector<1x8x64xf32>
    tpu.vector_store %arg12[%340, %c0_123, %c0_124], %343 {strides = array<i32>} : memref<8x8x64xf32, #tpu.memory_space<vmem>>, vector<1x8x64xf32>,
    %c6_i32 = arith.constant 6 : i32
    %c0_125 = arith.constant 0 : index
    %c0_126 = arith.constant 0 : index
    %344 = vector.load %arg3[%c0_125, %c0_126] : memref<64x192xf32, #tpu.memory_space<vmem>>, vector<64x192xf32>
    %cst_127 = arith.constant dense<0.000000e+00> : vector<8x192xf32>
    %345 = tpu.matmul %314, %344, %cst_127 {dimension_numbers = #tpu.dot_dimension_numbers<[1], [0], [0], [1], [0, 0, 1, 1], [], []>} : vector<8x64xf32>, vector<64x192xf32>, vector<8x192xf32> -> vector<8x192xf32>
    %346 = vector.broadcast %18 : vector<1x192xf32> to vector<8x192xf32>
    %347 = arith.addf %345, %346 : vector<8x192xf32>
    %348 = arith.index_cast %c6_i32 : i32 to index
    %c0_128 = arith.constant 0 : index
    %c0_129 = arith.constant 0 : index
    %349 = vector.load %arg14[%348, %c0_128, %c0_129] : memref<8x8x192xf32, #tpu.memory_space<vmem>>, vector<1x8x192xf32>
    %350 = vector.shape_cast %349 : vector<1x8x192xf32> to vector<8x192xf32>
    %351 = arith.addf %350, %347 : vector<8x192xf32>
    %352 = arith.negf %351 : vector<8x192xf32>
    %353 = math.exp %352 : vector<8x192xf32>
    %cst_130 = arith.constant 1.000000e+00 : f32
    %354 = vector.broadcast %cst_130 : f32 to vector<8x192xf32>
    %355 = arith.addf %354, %353 : vector<8x192xf32>
    %356 = arith.divf %354, %355 : vector<8x192xf32>
    %357 = vector.extract_strided_slice %356 {offsets = [0, 0], sizes = [8, 64], strides = [1, 1]} : vector<8x192xf32> to vector<8x64xf32>
    %358 = vector.extract_strided_slice %356 {offsets = [0, 64], sizes = [8, 64], strides = [1, 1]} : vector<8x192xf32> to vector<8x64xf32>
    %359 = vector.extract_strided_slice %350 {offsets = [0, 128], sizes = [8, 64], strides = [1, 1]} : vector<8x192xf32> to vector<8x64xf32>
    %360 = vector.extract_strided_slice %347 {offsets = [0, 128], sizes = [8, 64], strides = [1, 1]} : vector<8x192xf32> to vector<8x64xf32>
    %361 = arith.mulf %357, %360 : vector<8x64xf32>
    %362 = arith.addf %359, %361 : vector<8x64xf32>
    %363 = math.tanh %362 : vector<8x64xf32>
    %cst_131 = arith.constant 1.000000e+00 : f32
    %364 = vector.broadcast %cst_131 : f32 to vector<8x64xf32>
    %365 = arith.subf %364, %358 : vector<8x64xf32>
    %366 = arith.mulf %365, %363 : vector<8x64xf32>
    %367 = arith.mulf %358, %314 : vector<8x64xf32>
    %368 = arith.addf %366, %367 : vector<8x64xf32>
    %369 = arith.index_cast %c6_i32 : i32 to index
    %c0_132 = arith.constant 0 : index
    %c0_133 = arith.constant 0 : index
    %370 = vector.load %arg11[%369, %c0_132, %c0_133] : memref<8x8x64xf32, #tpu.memory_space<vmem>>, vector<1x8x64xf32>
    %371 = vector.shape_cast %370 : vector<1x8x64xf32> to vector<8x64xf32>
    %372 = vector.shape_cast %368 : vector<8x64xf32> to vector<1x8x64xf32>
    tpu.vector_store %arg11[%369, %c0_132, %c0_133], %372 {strides = array<i32>} : memref<8x8x64xf32, #tpu.memory_space<vmem>>, vector<1x8x64xf32>,
    %373 = arith.index_cast %c6_i32 : i32 to index
    %c0_134 = arith.constant 0 : index
    %c0_135 = arith.constant 0 : index
    %374 = vector.load %arg15[%373, %c0_134, %c0_135] : memref<8x8x256xf32, #tpu.memory_space<vmem>>, vector<1x8x256xf32>
    %375 = vector.shape_cast %374 : vector<1x8x256xf32> to vector<8x256xf32>
    %c0_136 = arith.constant 0 : index
    %c0_137 = arith.constant 0 : index
    %376 = vector.load %arg7[%c0_136, %c0_137] : memref<64x256xf32, #tpu.memory_space<vmem>>, vector<64x256xf32>
    %cst_138 = arith.constant dense<0.000000e+00> : vector<8x256xf32>
    %377 = tpu.matmul %339, %376, %cst_138 {dimension_numbers = #tpu.dot_dimension_numbers<[1], [0], [0], [1], [0, 0, 1, 1], [], []>} : vector<8x64xf32>, vector<64x256xf32>, vector<8x256xf32> -> vector<8x256xf32>
    %378 = arith.addf %375, %377 : vector<8x256xf32>
    %379 = arith.negf %378 : vector<8x256xf32>
    %380 = math.exp %379 : vector<8x256xf32>
    %cst_139 = arith.constant 1.000000e+00 : f32
    %381 = vector.broadcast %cst_139 : f32 to vector<8x256xf32>
    %382 = arith.addf %381, %380 : vector<8x256xf32>
    %383 = arith.divf %381, %382 : vector<8x256xf32>
    %384 = vector.extract_strided_slice %383 {offsets = [0, 0], sizes = [8, 64], strides = [1, 1]} : vector<8x256xf32> to vector<8x64xf32>
    %385 = vector.extract_strided_slice %383 {offsets = [0, 64], sizes = [8, 64], strides = [1, 1]} : vector<8x256xf32> to vector<8x64xf32>
    %386 = vector.extract_strided_slice %378 {offsets = [0, 128], sizes = [8, 64], strides = [1, 1]} : vector<8x256xf32> to vector<8x64xf32>
    %387 = math.tanh %386 : vector<8x64xf32>
    %388 = vector.extract_strided_slice %383 {offsets = [0, 192], sizes = [8, 64], strides = [1, 1]} : vector<8x256xf32> to vector<8x64xf32>
    %389 = arith.mulf %385, %337 : vector<8x64xf32>
    %390 = arith.mulf %384, %387 : vector<8x64xf32>
    %391 = arith.addf %389, %390 : vector<8x64xf32>
    %392 = math.tanh %391 : vector<8x64xf32>
    %393 = arith.mulf %388, %392 : vector<8x64xf32>
    %394 = arith.index_cast %c6_i32 : i32 to index
    %c0_140 = arith.constant 0 : index
    %c0_141 = arith.constant 0 : index
    %395 = vector.load %arg12[%394, %c0_140, %c0_141] : memref<8x8x64xf32, #tpu.memory_space<vmem>>, vector<1x8x64xf32>
    %396 = vector.shape_cast %395 : vector<1x8x64xf32> to vector<8x64xf32>
    %397 = vector.shape_cast %393 : vector<8x64xf32> to vector<1x8x64xf32>
    tpu.vector_store %arg12[%394, %c0_140, %c0_141], %397 {strides = array<i32>} : memref<8x8x64xf32, #tpu.memory_space<vmem>>, vector<1x8x64xf32>,
    %c7_i32 = arith.constant 7 : i32
    %c0_142 = arith.constant 0 : index
    %c0_143 = arith.constant 0 : index
    %398 = vector.load %arg3[%c0_142, %c0_143] : memref<64x192xf32, #tpu.memory_space<vmem>>, vector<64x192xf32>
    %cst_144 = arith.constant dense<0.000000e+00> : vector<8x192xf32>
    %399 = tpu.matmul %368, %398, %cst_144 {dimension_numbers = #tpu.dot_dimension_numbers<[1], [0], [0], [1], [0, 0, 1, 1], [], []>} : vector<8x64xf32>, vector<64x192xf32>, vector<8x192xf32> -> vector<8x192xf32>
    %400 = vector.broadcast %18 : vector<1x192xf32> to vector<8x192xf32>
    %401 = arith.addf %399, %400 : vector<8x192xf32>
    %402 = arith.index_cast %c7_i32 : i32 to index
    %c0_145 = arith.constant 0 : index
    %c0_146 = arith.constant 0 : index
    %403 = vector.load %arg14[%402, %c0_145, %c0_146] : memref<8x8x192xf32, #tpu.memory_space<vmem>>, vector<1x8x192xf32>
    %404 = vector.shape_cast %403 : vector<1x8x192xf32> to vector<8x192xf32>
    %405 = arith.addf %404, %401 : vector<8x192xf32>
    %406 = arith.negf %405 : vector<8x192xf32>
    %407 = math.exp %406 : vector<8x192xf32>
    %cst_147 = arith.constant 1.000000e+00 : f32
    %408 = vector.broadcast %cst_147 : f32 to vector<8x192xf32>
    %409 = arith.addf %408, %407 : vector<8x192xf32>
    %410 = arith.divf %408, %409 : vector<8x192xf32>
    %411 = vector.extract_strided_slice %410 {offsets = [0, 0], sizes = [8, 64], strides = [1, 1]} : vector<8x192xf32> to vector<8x64xf32>
    %412 = vector.extract_strided_slice %410 {offsets = [0, 64], sizes = [8, 64], strides = [1, 1]} : vector<8x192xf32> to vector<8x64xf32>
    %413 = vector.extract_strided_slice %404 {offsets = [0, 128], sizes = [8, 64], strides = [1, 1]} : vector<8x192xf32> to vector<8x64xf32>
    %414 = vector.extract_strided_slice %401 {offsets = [0, 128], sizes = [8, 64], strides = [1, 1]} : vector<8x192xf32> to vector<8x64xf32>
    %415 = arith.mulf %411, %414 : vector<8x64xf32>
    %416 = arith.addf %413, %415 : vector<8x64xf32>
    %417 = math.tanh %416 : vector<8x64xf32>
    %cst_148 = arith.constant 1.000000e+00 : f32
    %418 = vector.broadcast %cst_148 : f32 to vector<8x64xf32>
    %419 = arith.subf %418, %412 : vector<8x64xf32>
    %420 = arith.mulf %419, %417 : vector<8x64xf32>
    %421 = arith.mulf %412, %368 : vector<8x64xf32>
    %422 = arith.addf %420, %421 : vector<8x64xf32>
    %423 = arith.index_cast %c7_i32 : i32 to index
    %c0_149 = arith.constant 0 : index
    %c0_150 = arith.constant 0 : index
    %424 = vector.load %arg11[%423, %c0_149, %c0_150] : memref<8x8x64xf32, #tpu.memory_space<vmem>>, vector<1x8x64xf32>
    %425 = vector.shape_cast %424 : vector<1x8x64xf32> to vector<8x64xf32>
    %426 = vector.shape_cast %422 : vector<8x64xf32> to vector<1x8x64xf32>
    tpu.vector_store %arg11[%423, %c0_149, %c0_150], %426 {strides = array<i32>} : memref<8x8x64xf32, #tpu.memory_space<vmem>>, vector<1x8x64xf32>,
    %427 = arith.index_cast %c7_i32 : i32 to index
    %c0_151 = arith.constant 0 : index
    %c0_152 = arith.constant 0 : index
    %428 = vector.load %arg15[%427, %c0_151, %c0_152] : memref<8x8x256xf32, #tpu.memory_space<vmem>>, vector<1x8x256xf32>
    %429 = vector.shape_cast %428 : vector<1x8x256xf32> to vector<8x256xf32>
    %c0_153 = arith.constant 0 : index
    %c0_154 = arith.constant 0 : index
    %430 = vector.load %arg7[%c0_153, %c0_154] : memref<64x256xf32, #tpu.memory_space<vmem>>, vector<64x256xf32>
    %cst_155 = arith.constant dense<0.000000e+00> : vector<8x256xf32>
    %431 = tpu.matmul %393, %430, %cst_155 {dimension_numbers = #tpu.dot_dimension_numbers<[1], [0], [0], [1], [0, 0, 1, 1], [], []>} : vector<8x64xf32>, vector<64x256xf32>, vector<8x256xf32> -> vector<8x256xf32>
    %432 = arith.addf %429, %431 : vector<8x256xf32>
    %433 = arith.negf %432 : vector<8x256xf32>
    %434 = math.exp %433 : vector<8x256xf32>
    %cst_156 = arith.constant 1.000000e+00 : f32
    %435 = vector.broadcast %cst_156 : f32 to vector<8x256xf32>
    %436 = arith.addf %435, %434 : vector<8x256xf32>
    %437 = arith.divf %435, %436 : vector<8x256xf32>
    %438 = vector.extract_strided_slice %437 {offsets = [0, 0], sizes = [8, 64], strides = [1, 1]} : vector<8x256xf32> to vector<8x64xf32>
    %439 = vector.extract_strided_slice %437 {offsets = [0, 64], sizes = [8, 64], strides = [1, 1]} : vector<8x256xf32> to vector<8x64xf32>
    %440 = vector.extract_strided_slice %432 {offsets = [0, 128], sizes = [8, 64], strides = [1, 1]} : vector<8x256xf32> to vector<8x64xf32>
    %441 = math.tanh %440 : vector<8x64xf32>
    %442 = vector.extract_strided_slice %437 {offsets = [0, 192], sizes = [8, 64], strides = [1, 1]} : vector<8x256xf32> to vector<8x64xf32>
    %443 = arith.mulf %439, %391 : vector<8x64xf32>
    %444 = arith.mulf %438, %441 : vector<8x64xf32>
    %445 = arith.addf %443, %444 : vector<8x64xf32>
    %446 = math.tanh %445 : vector<8x64xf32>
    %447 = arith.mulf %442, %446 : vector<8x64xf32>
    %448 = arith.index_cast %c7_i32 : i32 to index
    %c0_157 = arith.constant 0 : index
    %c0_158 = arith.constant 0 : index
    %449 = vector.load %arg12[%448, %c0_157, %c0_158] : memref<8x8x64xf32, #tpu.memory_space<vmem>>, vector<1x8x64xf32>
    %450 = vector.shape_cast %449 : vector<1x8x64xf32> to vector<8x64xf32>
    %451 = vector.shape_cast %447 : vector<8x64xf32> to vector<1x8x64xf32>
    tpu.vector_store %arg12[%448, %c0_157, %c0_158], %451 {strides = array<i32>} : memref<8x8x64xf32, #tpu.memory_space<vmem>>, vector<1x8x64xf32>,
    %c8_i32 = arith.constant 8 : i32
    %c0_159 = arith.constant 0 : index
    %c0_160 = arith.constant 0 : index
    %c0_161 = arith.constant 0 : index
    %452 = vector.load %arg11[%c0_159, %c0_160, %c0_161] : memref<8x8x64xf32, #tpu.memory_space<vmem>>, vector<8x8x64xf32>
    %453 = vector.shape_cast %452 : vector<8x8x64xf32> to vector<64x64xf32>
    %c0_162 = arith.constant 0 : index
    %c0_163 = arith.constant 0 : index
    %454 = vector.load %arg9[%c0_162, %c0_163] : memref<64x64xf32, #tpu.memory_space<vmem>>, vector<64x64xf32>
    %cst_164 = arith.constant dense<0.000000e+00> : vector<64x64xf32>
    %455 = tpu.matmul %453, %454, %cst_164 {dimension_numbers = #tpu.dot_dimension_numbers<[1], [0], [0], [1], [0, 0, 1, 1], [], []>} : vector<64x64xf32>, vector<64x64xf32>, vector<64x64xf32> -> vector<64x64xf32>
    %c0_165 = arith.constant 0 : index
    %c0_166 = arith.constant 0 : index
    %456 = vector.load %arg10[%c0_165, %c0_166] : memref<1x64xf32, #tpu.memory_space<vmem>>, vector<1x64xf32>
    %457 = vector.broadcast %456 : vector<1x64xf32> to vector<64x64xf32>
    %458 = arith.addf %455, %457 : vector<64x64xf32>
    %459 = vector.shape_cast %458 : vector<64x64xf32> to vector<8x8x64xf32>
    %c0_167 = arith.constant 0 : index
    %c0_168 = arith.constant 0 : index
    %c0_169 = arith.constant 0 : index
    %460 = vector.load %arg13[%c0_167, %c0_168, %c0_169] : memref<8x8x64xf32, #tpu.memory_space<vmem>>, vector<8x8x64xf32>
    tpu.vector_store %arg13[%c0_167, %c0_168, %c0_169], %459 {strides = array<i32>} : memref<8x8x64xf32, #tpu.memory_space<vmem>>, vector<8x8x64xf32>,
    return
  }
}

</mosaic_0001>

<llo_original>
// kernel: pipeline.1
$region0: #{pipeline.1}
  #allocation0 [shape = 'u32[]', space=smem, size = 0x4, offset = 0x4, fixed_abs, tag = 'smem constant byte address 0x4 - core index']
  #allocation1 [shape = 'u32[72,128]{1,0:T(1,128)}', space=vmem, size = 0x9000, scoped, tag = 'internal scratch']
  #allocation2 [shape = 'f32[8,8,192]{2,1,0:T(8,128)}', space=vmem, size = 0x10000, scoped, tag = 'scratch operand']
  #allocation3 [shape = 'f32[8,8,256]{2,1,0:T(8,128)}', space=vmem, size = 0x10000, scoped, tag = 'scratch operand']
  %s0 = inlined_call_operand.vmem [shape: f32[8,8,32], index: 0, kind: input, shape index: {}]
  %s1 = inlined_call_operand.vmem [shape: f32[8,8,32], index: 1, kind: input, shape index: {}]
  %s2 = inlined_call_operand.hbm [shape: f32[32,192], index: 2, kind: input, shape index: {}]
  %s3 = inlined_call_operand.vmem [shape: f32[64,192], index: 3, kind: input, shape index: {}]
  %s4 = inlined_call_operand.vmem [shape: f32[1,192], index: 4, kind: input, shape index: {}]
  %s5 = inlined_call_operand.vmem [shape: f32[1,192], index: 5, kind: input, shape index: {}]
  %s6 = inlined_call_operand.vmem [shape: f32[32,256], index: 6, kind: input, shape index: {}]
  %s7 = inlined_call_operand.vmem [shape: f32[64,256], index: 7, kind: input, shape index: {}]
  %s8 = inlined_call_operand.hbm [shape: f32[1,256], index: 8, kind: input, shape index: {}]
  %s9 = inlined_call_operand.hbm [shape: f32[64,64], index: 9, kind: input, shape index: {}]
  %s10 = inlined_call_operand.vmem [shape: f32[1,64], index: 10, kind: input, shape index: {}]
  %s11 = inlined_call_operand.vmem [shape: f32[8,8,64], index: 11, kind: output, shape index: {0}]
  %s12 = inlined_call_operand.vmem [shape: f32[8,8,64], index: 12, kind: output, shape index: {1}]
  %s13 = inlined_call_operand.hbm [shape: f32[8,8,64], index: 13, kind: output, shape index: {2}]
  %14 = xla_tuple %s11, %s12, %s13
  %s15 = sld [smem:[#allocation0]]
  $region82: #{pipeline.1} parent=0
    _
  %s17 = ssub.s32 1, %s15
  %s18 = scalar_select 0, %s17, %s15
  $region1: #{pipeline.1} parent=0
    #allocation4 [shape = 'u8[32768]{0}', space=vmem, size = 0x8000, scoped, tag = 'input window, operand 2, single buffered']
    #allocation5 [shape = 's32[1]{0}', space=sflag, size = 0x4, scoped, tag = 'scoped memory for pipeline.1']
    #allocation6 [shape = 's32[1]{0}', space=sflag, size = 0x4, scoped, tag = 'scoped memory for pipeline.1']
    #allocation7 [shape = 'u8[1024]{0}', space=vmem, size = 0x400, scoped, tag = 'input window, operand 8, single buffered']
    #allocation8 [shape = 's32[1]{0}', space=sflag, size = 0x4, scoped, tag = 'scoped memory for pipeline.1']
    #allocation9 [shape = 'u8[32768]{0}', space=vmem, size = 0x8000, scoped, tag = 'input window, operand 9, single buffered']
    #allocation10 [shape = 'u8[32768]{0}', space=vmem, size = 0x8000, scoped, tag = 'output window, operand 2, single buffered']
    %19 = vsyncpa [#allocation5], 0
    %20 = vsyncpa [#allocation8], 0
    %21 = vsyncpa [#allocation6], 0
    // Predicated region
    $region2: #{pipeline.1} parent=1 // pred_check
      _
    $region3: #{pipeline.1} parent=1 // pred_check_branch
      %23 = sbr.rel (0) target = $region5
    $region4: #{pipeline.1} parent=1 // pred_region
      _
    $region5: #{pipeline.1} parent=1 // pred_fallthru
      _
    // Predicated region
    $region6: #{pipeline.1} parent=1 // pred_check
      _
    $region7: #{pipeline.1} parent=1 // pred_check_branch
      %25 = sbr.rel (0) target = $region9
    $region8: #{pipeline.1} parent=1 // pred_region
      _
    $region9: #{pipeline.1} parent=1 // pred_fallthru
      _
    // Predicated region
    $region10: #{pipeline.1} parent=1 // pred_check
      _
    $region11: #{pipeline.1} parent=1 // pred_check_branch
      %27 = sbr.rel (0) target = $region13
    $region12: #{pipeline.1} parent=1 // pred_region
      %29 = vsyncadd [#allocation5], 0
      %s30 = sshll.u32 %s2, 4
      %s31 = int_to_ptr.hbm [resolvable:$true] %s30
      %s32 = sshll.u32 [#allocation4], 4
      %s33 = int_to_ptr.vmem [resolvable:$true] %s32
      %38 = dma.hbm_to_vmem [thread:$0]  %s31, 1024, %s33, [#allocation5], 256, 256, 16
    $region13: #{pipeline.1} parent=1 // pred_fallthru
      _
    // Predicated region
    $region14: #{pipeline.1} parent=1 // pred_check
      _
    $region15: #{pipeline.1} parent=1 // pred_check_branch
      %40 = sbr.rel (0) target = $region17
    $region16: #{pipeline.1} parent=1 // pred_region
      _
    $region17: #{pipeline.1} parent=1 // pred_fallthru
      _
    // Predicated region
    $region18: #{pipeline.1} parent=1 // pred_check
      _
    $region19: #{pipeline.1} parent=1 // pred_check_branch
      %42 = sbr.rel (0) target = $region21
    $region20: #{pipeline.1} parent=1 // pred_region
      _
    $region21: #{pipeline.1} parent=1 // pred_fallthru
      _
    // Predicated region
    $region22: #{pipeline.1} parent=1 // pred_check
      _
    $region23: #{pipeline.1} parent=1 // pred_check_branch
      %44 = sbr.rel (0) target = $region25
    $region24: #{pipeline.1} parent=1 // pred_region
      _
    $region25: #{pipeline.1} parent=1 // pred_fallthru
      _
    // Predicated region
    $region26: #{pipeline.1} parent=1 // pred_check
      _
    $region27: #{pipeline.1} parent=1 // pred_check_branch
      %46 = sbr.rel (0) target = $region29
    $region28: #{pipeline.1} parent=1 // pred_region
      _
    $region29: #{pipeline.1} parent=1 // pred_fallthru
      _
    // Predicated region
    $region30: #{pipeline.1} parent=1 // pred_check
      _
    $region31: #{pipeline.1} parent=1 // pred_check_branch
      %48 = sbr.rel (0) target = $region33
    $region32: #{pipeline.1} parent=1 // pred_region
      _
    $region33: #{pipeline.1} parent=1 // pred_fallthru
      _
    // Predicated region
    $region34: #{pipeline.1} parent=1 // pred_check
      _
    $region35: #{pipeline.1} parent=1 // pred_check_branch
      %50 = sbr.rel (0) target = $region37
    $region36: #{pipeline.1} parent=1 // pred_region
      %52 = vsyncadd [#allocation8], 0
      %s54 = sshll.u32 %s8, 4
      %s55 = int_to_ptr.hbm [resolvable:$true] %s54
      %s56 = sshll.u32 [#allocation7], 4
      %s57 = int_to_ptr.vmem [resolvable:$true] %s56
      %59 = dma.hbm_to_vmem [thread:$0]  %s55, 32, %s57, [#allocation8]
    $region37: #{pipeline.1} parent=1 // pred_fallthru
      _
    // Predicated region
    $region38: #{pipeline.1} parent=1 // pred_check
      _
    $region39: #{pipeline.1} parent=1 // pred_check_branch
      %61 = sbr.rel (0) target = $region41
    $region40: #{pipeline.1} parent=1 // pred_region
      %63 = vsyncadd [#allocation8], 0
      %s64 = sshll.u32 %s9, 4
      %s65 = int_to_ptr.hbm [resolvable:$true] %s64
      %s66 = sshll.u32 [#allocation9], 4
      %s67 = int_to_ptr.vmem [resolvable:$true] %s66
      %72 = dma.hbm_to_vmem [thread:$0]  %s65, 1024, %s67, [#allocation8], 128, 128, 8
    $region41: #{pipeline.1} parent=1 // pred_fallthru
      _
    // Predicated region
    $region42: #{pipeline.1} parent=1 // pred_check
      _
    $region43: #{pipeline.1} parent=1 // pred_check_branch
      %74 = sbr.rel (0) target = $region45
    $region44: #{pipeline.1} parent=1 // pred_region
      _
    $region45: #{pipeline.1} parent=1 // pred_fallthru
      _
    // Predicated region
    $region46: #{pipeline.1} parent=1 // pred_check
      _
    $region47: #{pipeline.1} parent=1 // pred_check_branch
      %76 = sbr.rel (0) target = $region49
    $region48: #{pipeline.1} parent=1 // pred_region
      %78 = dma.done [#allocation5], 1024
    $region49: #{pipeline.1} parent=1 // pred_fallthru
      _
    // Predicated region
    $region50: #{pipeline.1} parent=1 // pred_check
      _
    $region51: #{pipeline.1} parent=1 // pred_check_branch
      %80 = sbr.rel (0) target = $region53
    $region52: #{pipeline.1} parent=1 // pred_region
      %82 = dma.done [#allocation8], 32
    $region53: #{pipeline.1} parent=1 // pred_fallthru
      _
    // Predicated region
    $region54: #{pipeline.1} parent=1 // pred_check
      _
    $region55: #{pipeline.1} parent=1 // pred_check_branch
      %84 = sbr.rel (0) target = $region57
    $region56: #{pipeline.1} parent=1 // pred_region
      %86 = dma.done [#allocation8], 1024
    $region57: #{pipeline.1} parent=1 // pred_fallthru
      _
    %v87 = vld [vmem:[%s0] sm:$0xff]
    %v88 = vld [vmem:[%s0 + $0x8] sm:$0xff]
    %v89 = vld [vmem:[%s0 + $0x10] sm:$0xff]
    %v90 = vld [vmem:[%s0 + $0x18] sm:$0xff]
    %v91 = vld [vmem:[%s0 + $0x20] sm:$0xff]
    %v92 = vld [vmem:[%s0 + $0x28] sm:$0xff]
    %v93 = vld [vmem:[%s0 + $0x30] sm:$0xff]
    %v94 = vld [vmem:[%s0 + $0x38] sm:$0xff]
    %v95 = vld [vmem:[#allocation4] sm:$0xff]
    %v96 = vld [vmem:[#allocation4 + $0x8] sm:$0xff]
    %v97 = vld [vmem:[#allocation4 + $0x10] sm:$0xff]
    %v98 = vld [vmem:[#allocation4 + $0x18] sm:$0xff]
    %v99 = vld [vmem:[#allocation4 + $0x20] sm:$0xff]
    %v100 = vld [vmem:[#allocation4 + $0x28] sm:$0xff]
    %v101 = vld [vmem:[#allocation4 + $0x30] sm:$0xff]
    %v102 = vld [vmem:[#allocation4 + $0x38] sm:$0xff]
    %v103 = vld [vmem:[%s4] sm:$0x3]
    %v105 = vperm.slane %v103, 0
    %v106 = vperm.slane %v103, 1
    %vm109 = vcmask 261120
    %v111 = vsel %vm109, %v87, 0
    %v114 = vsel %vm109, %v88, 0
    %v117 = vsel %vm109, %v89, 0
    %v120 = vsel %vm109, %v90, 0
    %v123 = vsel %vm109, %v91, 0
    %v126 = vsel %vm109, %v92, 0
    %v129 = vsel %vm109, %v93, 0
    %v132 = vsel %vm109, %v94, 0
    %134 = vmatpush.msra.mxu0 0.0
    %135 = vmatpush.msra.mxu0 0.0
    %136 = vmatpush.msra.mxu0 0.0
    %137 = vmatpush.msra.mxu0 0.0
    %138 = vmatpush.msra.mxu0 0.0
    %139 = vmatpush.msra.mxu0 0.0
    %140 = vmatpush.msra.mxu0 0.0
    %141 = vmatpush.msra.mxu0 0.0
    %142 = vmatpush.msra.mxu0 0.0
    %143 = vmatpush.msra.mxu0 0.0
    %144 = vmatpush.msra.mxu0 0.0
    %145 = vmatpush.msra.mxu0 0.0
    %146 = vmatpush.msra.mxu0 %v101
    %147 = vmatpush.msra.mxu0 %v99
    %148 = vmatpush.msra.mxu0 %v97
    %149 = vmatpush.msra.mxu0 %v95
    %150 = vmatmul.f32.gmra.mxu0 %v111
    %v151 = vpop.f32.mrf.mxu0
    %v152 = vadd.f32 %v105, %v151
    %153 = vmatmul.f32.gmra.mxu0 %v114
    %v154 = vpop.f32.mrf.mxu0
    %v155 = vadd.f32 %v105, %v154
    %156 = vmatmul.f32.gmra.mxu0 %v117
    %v157 = vpop.f32.mrf.mxu0
    %v158 = vadd.f32 %v105, %v157
    %159 = vmatmul.f32.gmra.mxu0 %v120
    %v160 = vpop.f32.mrf.mxu0
    %v161 = vadd.f32 %v105, %v160
    %162 = vmatmul.f32.gmra.mxu0 %v123
    %v163 = vpop.f32.mrf.mxu0
    %v164 = vadd.f32 %v105, %v163
    %165 = vmatmul.f32.gmra.mxu0 %v126
    %v166 = vpop.f32.mrf.mxu0
    %v167 = vadd.f32 %v105, %v166
    %168 = vmatmul.f32.gmra.mxu0 %v129
    %v169 = vpop.f32.mrf.mxu0
    %v170 = vadd.f32 %v105, %v169
    %171 = vmatmul.f32.gmra.mxu0 %v132
    %v172 = vpop.f32.mrf.mxu0
    %v173 = vadd.f32 %v105, %v172
    %174 = vdwg.mxu0
    %175 = vmatpush.msra.mxu0 0.0
    %176 = vmatpush.msra.mxu0 0.0
    %177 = vmatpush.msra.mxu0 0.0
    %178 = vmatpush.msra.mxu0 0.0
    %179 = vmatpush.msra.mxu0 0.0
    %180 = vmatpush.msra.mxu0 0.0
    %181 = vmatpush.msra.mxu0 0.0
    %182 = vmatpush.msra.mxu0 0.0
    %183 = vmatpush.msra.mxu0 0.0
    %184 = vmatpush.msra.mxu0 0.0
    %185 = vmatpush.msra.mxu0 0.0
    %186 = vmatpush.msra.mxu0 0.0
    %187 = vmatpush.msra.mxu0 %v102
    %188 = vmatpush.msra.mxu0 %v100
    %189 = vmatpush.msra.mxu0 %v98
    %190 = vmatpush.msra.mxu0 %v96
    %191 = vmatmul.f32.gmra.mxu0 %v111
    %v192 = vpop.f32.mrf.mxu0
    %v193 = vadd.f32 %v106, %v192
    %194 = vmatmul.f32.gmra.mxu0 %v114
    %v195 = vpop.f32.mrf.mxu0
    %v196 = vadd.f32 %v106, %v195
    %197 = vmatmul.f32.gmra.mxu0 %v117
    %v198 = vpop.f32.mrf.mxu0
    %v199 = vadd.f32 %v106, %v198
    %200 = vmatmul.f32.gmra.mxu0 %v120
    %v201 = vpop.f32.mrf.mxu0
    %v202 = vadd.f32 %v106, %v201
    %203 = vmatmul.f32.gmra.mxu0 %v123
    %v204 = vpop.f32.mrf.mxu0
    %v205 = vadd.f32 %v106, %v204
    %206 = vmatmul.f32.gmra.mxu0 %v126
    %v207 = vpop.f32.mrf.mxu0
    %v208 = vadd.f32 %v106, %v207
    %209 = vmatmul.f32.gmra.mxu0 %v129
    %v210 = vpop.f32.mrf.mxu0
    %v211 = vadd.f32 %v106, %v210
    %212 = vmatmul.f32.gmra.mxu0 %v132
    %v213 = vpop.f32.mrf.mxu0
    %v214 = vadd.f32 %v106, %v213
    %215 = vdwg.mxu0
    %216 = vst [vmem:[#allocation2] sm:$0xff] %v152
    %vm217 = vcmask 523264
    %218 = vst.msk [vmem:[#allocation2 + $0x8] sm:$0xff] %vm217, %v193
    %219 = vst [vmem:[#allocation2 + $0x10] sm:$0xff] %v155
    %220 = vst.msk [vmem:[#allocation2 + $0x18] sm:$0xff] %vm217, %v196
    %221 = vst [vmem:[#allocation2 + $0x20] sm:$0xff] %v158
    %222 = vst.msk [vmem:[#allocation2 + $0x28] sm:$0xff] %vm217, %v199
    %223 = vst [vmem:[#allocation2 + $0x30] sm:$0xff] %v161
    %224 = vst.msk [vmem:[#allocation2 + $0x38] sm:$0xff] %vm217, %v202
    %225 = vst [vmem:[#allocation2 + $0x40] sm:$0xff] %v164
    %226 = vst.msk [vmem:[#allocation2 + $0x48] sm:$0xff] %vm217, %v205
    %227 = vst [vmem:[#allocation2 + $0x50] sm:$0xff] %v167
    %228 = vst.msk [vmem:[#allocation2 + $0x58] sm:$0xff] %vm217, %v208
    %229 = vst [vmem:[#allocation2 + $0x60] sm:$0xff] %v170
    %230 = vst.msk [vmem:[#allocation2 + $0x68] sm:$0xff] %vm217, %v211
    %231 = vst [vmem:[#allocation2 + $0x70] sm:$0xff] %v173
    %232 = vst.msk [vmem:[#allocation2 + $0x78] sm:$0xff] %vm217, %v214
    %v233 = vld [vmem:[%s1] sm:$0xff]
    %v234 = vld [vmem:[%s1 + $0x8] sm:$0xff]
    %v235 = vld [vmem:[%s1 + $0x10] sm:$0xff]
    %v236 = vld [vmem:[%s1 + $0x18] sm:$0xff]
    %v237 = vld [vmem:[%s1 + $0x20] sm:$0xff]
    %v238 = vld [vmem:[%s1 + $0x28] sm:$0xff]
    %v239 = vld [vmem:[%s1 + $0x30] sm:$0xff]
    %v240 = vld [vmem:[%s1 + $0x38] sm:$0xff]
    %v241 = vld [vmem:[%s6] sm:$0xff]
    %v242 = vld [vmem:[%s6 + $0x8] sm:$0xff]
    %v243 = vld [vmem:[%s6 + $0x10] sm:$0xff]
    %v244 = vld [vmem:[%s6 + $0x18] sm:$0xff]
    %v245 = vld [vmem:[%s6 + $0x20] sm:$0xff]
    %v246 = vld [vmem:[%s6 + $0x28] sm:$0xff]
    %v247 = vld [vmem:[%s6 + $0x30] sm:$0xff]
    %v248 = vld [vmem:[%s6 + $0x38] sm:$0xff]
    %v249 = vld [vmem:[#allocation7] sm:$0x3]
    %v251 = vperm.slane %v249, 0
    %v252 = vperm.slane %v249, 1
    %v256 = vsel %vm109, %v233, 0
    %v259 = vsel %vm109, %v234, 0
    %v262 = vsel %vm109, %v235, 0
    %v265 = vsel %vm109, %v236, 0
    %v268 = vsel %vm109, %v237, 0
    %v271 = vsel %vm109, %v238, 0
    %v274 = vsel %vm109, %v239, 0
    %v277 = vsel %vm109, %v240, 0
    %279 = vmatpush.msra.mxu0 0.0
    %280 = vmatpush.msra.mxu0 0.0
    %281 = vmatpush.msra.mxu0 0.0
    %282 = vmatpush.msra.mxu0 0.0
    %283 = vmatpush.msra.mxu0 0.0
    %284 = vmatpush.msra.mxu0 0.0
    %285 = vmatpush.msra.mxu0 0.0
    %286 = vmatpush.msra.mxu0 0.0
    %287 = vmatpush.msra.mxu0 0.0
    %288 = vmatpush.msra.mxu0 0.0
    %289 = vmatpush.msra.mxu0 0.0
    %290 = vmatpush.msra.mxu0 0.0
    %291 = vmatpush.msra.mxu0 %v247
    %292 = vmatpush.msra.mxu0 %v245
    %293 = vmatpush.msra.mxu0 %v243
    %294 = vmatpush.msra.mxu0 %v241
    %295 = vmatmul.f32.gmra.mxu0 %v256
    %v296 = vpop.f32.mrf.mxu0
    %v297 = vadd.f32 %v251, %v296
    %298 = vmatmul.f32.gmra.mxu0 %v259
    %v299 = vpop.f32.mrf.mxu0
    %v300 = vadd.f32 %v251, %v299
    %301 = vmatmul.f32.gmra.mxu0 %v262
    %v302 = vpop.f32.mrf.mxu0
    %v303 = vadd.f32 %v251, %v302
    %304 = vmatmul.f32.gmra.mxu0 %v265
    %v305 = vpop.f32.mrf.mxu0
    %v306 = vadd.f32 %v251, %v305
    %307 = vmatmul.f32.gmra.mxu0 %v268
    %v308 = vpop.f32.mrf.mxu0
    %v309 = vadd.f32 %v251, %v308
    %310 = vmatmul.f32.gmra.mxu0 %v271
    %v311 = vpop.f32.mrf.mxu0
    %v312 = vadd.f32 %v251, %v311
    %313 = vmatmul.f32.gmra.mxu0 %v274
    %v314 = vpop.f32.mrf.mxu0
    %v315 = vadd.f32 %v251, %v314
    %316 = vmatmul.f32.gmra.mxu0 %v277
    %v317 = vpop.f32.mrf.mxu0
    %v318 = vadd.f32 %v251, %v317
    %319 = vdwg.mxu0
    %320 = vmatpush.msra.mxu0 0.0
    %321 = vmatpush.msra.mxu0 0.0
    %322 = vmatpush.msra.mxu0 0.0
    %323 = vmatpush.msra.mxu0 0.0
    %324 = vmatpush.msra.mxu0 0.0
    %325 = vmatpush.msra.mxu0 0.0
    %326 = vmatpush.msra.mxu0 0.0
    %327 = vmatpush.msra.mxu0 0.0
    %328 = vmatpush.msra.mxu0 0.0
    %329 = vmatpush.msra.mxu0 0.0
    %330 = vmatpush.msra.mxu0 0.0
    %331 = vmatpush.msra.mxu0 0.0
    %332 = vmatpush.msra.mxu0 %v248
    %333 = vmatpush.msra.mxu0 %v246
    %334 = vmatpush.msra.mxu0 %v244
    %335 = vmatpush.msra.mxu0 %v242
    %336 = vmatmul.f32.gmra.mxu0 %v256
    %v337 = vpop.f32.mrf.mxu0
    %v338 = vadd.f32 %v252, %v337
    %339 = vmatmul.f32.gmra.mxu0 %v259
    %v340 = vpop.f32.mrf.mxu0
    %v341 = vadd.f32 %v252, %v340
    %342 = vmatmul.f32.gmra.mxu0 %v262
    %v343 = vpop.f32.mrf.mxu0
    %v344 = vadd.f32 %v252, %v343
    %345 = vmatmul.f32.gmra.mxu0 %v265
    %v346 = vpop.f32.mrf.mxu0
    %v347 = vadd.f32 %v252, %v346
    %348 = vmatmul.f32.gmra.mxu0 %v268
    %v349 = vpop.f32.mrf.mxu0
    %v350 = vadd.f32 %v252, %v349
    %351 = vmatmul.f32.gmra.mxu0 %v271
    %v352 = vpop.f32.mrf.mxu0
    %v353 = vadd.f32 %v252, %v352
    %354 = vmatmul.f32.gmra.mxu0 %v274
    %v355 = vpop.f32.mrf.mxu0
    %v356 = vadd.f32 %v252, %v355
    %357 = vmatmul.f32.gmra.mxu0 %v277
    %v358 = vpop.f32.mrf.mxu0
    %v359 = vadd.f32 %v252, %v358
    %360 = vdwg.mxu0
    %361 = vst [vmem:[#allocation3] sm:$0xff] %v297
    %362 = vst [vmem:[#allocation3 + $0x8] sm:$0xff] %v338
    %363 = vst [vmem:[#allocation3 + $0x10] sm:$0xff] %v300
    %364 = vst [vmem:[#allocation3 + $0x18] sm:$0xff] %v341
    %365 = vst [vmem:[#allocation3 + $0x20] sm:$0xff] %v303
    %366 = vst [vmem:[#allocation3 + $0x28] sm:$0xff] %v344
    %367 = vst [vmem:[#allocation3 + $0x30] sm:$0xff] %v306
    %368 = vst [vmem:[#allocation3 + $0x38] sm:$0xff] %v347
    %369 = vst [vmem:[#allocation3 + $0x40] sm:$0xff] %v309
    %370 = vst [vmem:[#allocation3 + $0x48] sm:$0xff] %v350
    %371 = vst [vmem:[#allocation3 + $0x50] sm:$0xff] %v312
    %372 = vst [vmem:[#allocation3 + $0x58] sm:$0xff] %v353
    %373 = vst [vmem:[#allocation3 + $0x60] sm:$0xff] %v315
    %374 = vst [vmem:[#allocation3 + $0x68] sm:$0xff] %v356
    %375 = vst [vmem:[#allocation3 + $0x70] sm:$0xff] %v318
    %376 = vst [vmem:[#allocation3 + $0x78] sm:$0xff] %v359
    %v377 = vld [vmem:[%s5] sm:$0x3]
    %v378 = vld [vmem:[%s3] sm:$0xff]
    %v379 = vld [vmem:[%s3 + $0x8] sm:$0xff]
    %v380 = vld [vmem:[%s3 + $0x10] sm:$0xff]
    %v381 = vld [vmem:[%s3 + $0x18] sm:$0xff]
    %v382 = vld [vmem:[%s3 + $0x20] sm:$0xff]
    %v383 = vld [vmem:[%s3 + $0x28] sm:$0xff]
    %v384 = vld [vmem:[%s3 + $0x30] sm:$0xff]
    %v385 = vld [vmem:[%s3 + $0x38] sm:$0xff]
    %v386 = vld [vmem:[%s3 + $0x40] sm:$0xff]
    %v387 = vld [vmem:[%s3 + $0x48] sm:$0xff]
    %v388 = vld [vmem:[%s3 + $0x50] sm:$0xff]
    %v389 = vld [vmem:[%s3 + $0x58] sm:$0xff]
    %v390 = vld [vmem:[%s3 + $0x60] sm:$0xff]
    %v391 = vld [vmem:[%s3 + $0x68] sm:$0xff]
    %v392 = vld [vmem:[%s3 + $0x70] sm:$0xff]
    %v393 = vld [vmem:[%s3 + $0x78] sm:$0xff]
    %v395 = vperm.slane %v377, 0
    %v396 = vperm.slane %v377, 1
    %v400 = vsel %vm217, 0.0, 0
    %402 = vmatpush.msra.mxu0 0.0
    %403 = vmatpush.msra.mxu0 0.0
    %404 = vmatpush.msra.mxu0 0.0
    %405 = vmatpush.msra.mxu0 0.0
    %406 = vmatpush.msra.mxu0 0.0
    %407 = vmatpush.msra.mxu0 0.0
    %408 = vmatpush.msra.mxu0 0.0
    %409 = vmatpush.msra.mxu0 0.0
    %410 = vmatpush.msra.mxu0 %v392
    %411 = vmatpush.msra.mxu0 %v390
    %412 = vmatpush.msra.mxu0 %v388
    %413 = vmatpush.msra.mxu0 %v386
    %414 = vmatpush.msra.mxu0 %v384
    %415 = vmatpush.msra.mxu0 %v382
    %416 = vmatpush.msra.mxu0 %v380
    %417 = vmatpush.msra.mxu0 %v378
    %418 = vmatmul.f32.gmra.mxu0 %v400
    %v419 = vpop.f32.mrf.mxu0
    %v420 = vadd.f32 %v395, %v419
    %421 = vdwg.mxu0
    %422 = vmatpush.msra.mxu0 0.0
    %423 = vmatpush.msra.mxu0 0.0
    %424 = vmatpush.msra.mxu0 0.0
    %425 = vmatpush.msra.mxu0 0.0
    %426 = vmatpush.msra.mxu0 0.0
    %427 = vmatpush.msra.mxu0 0.0
    %428 = vmatpush.msra.mxu0 0.0
    %429 = vmatpush.msra.mxu0 0.0
    %430 = vmatpush.msra.mxu0 %v393
    %431 = vmatpush.msra.mxu0 %v391
    %432 = vmatpush.msra.mxu0 %v389
    %433 = vmatpush.msra.mxu0 %v387
    %434 = vmatpush.msra.mxu0 %v385
    %435 = vmatpush.msra.mxu0 %v383
    %436 = vmatpush.msra.mxu0 %v381
    %437 = vmatpush.msra.mxu0 %v379
    %438 = vmatmul.f32.gmra.mxu0 %v400
    %v439 = vpop.f32.mrf.mxu0
    %v440 = vadd.f32 %v396, %v439
    %441 = vdwg.mxu0
    %v442 = vld [vmem:[#allocation2] sm:$0xff]
    %v443 = vld [vmem:[#allocation2 + $0x8] sm:$0xff]
    %v444 = vadd.f32 %v442, %v420
    %v445 = vxor.u32 %v444, 2147483648
    %v446 = vmul.f32 %v445, 1.442695
    %v447 = vpow.pop %v446
    %v448 = vadd.f32 %v447, 1.0
    %v449 = vrcp.pop %v448
    %v450 = vmul.f32 %v448, %v449
    %v451 = vsub.f32 1.0, %v450
    %v452 = vmul.f32 %v449, %v451
    %v453 = vadd.f32 %v449, %v452
    %vm454 = vweird.f32 %v448
    %vm455 = vweird.f32 %v449
    %vm456 = vmor %vm454, %vm455
    %v457 = vsel %vm456, %v449, %v453
    %v458 = vand.u32 2147483647, %v448
    %vm459 = vcmp.eq.f32.partialorder %v458, 8.507059e+37
    %v460 = vand.u32 %v448, 2147483648
    %v461 = vor.u32 1.1754944e-38, %v460
    %v462 = vsel %vm459, %v461, %v457
    %v463 = vmul.f32 1.0, %v462
    %v464 = vmul.f32 %v463, %v440
    %v465 = vadd.f32 %v443, %v464
    %v466 = vtanh.pop %v465
    %v467 = vsub.f32 1.0, %v463
    %469 = vrot.lane.b32.xlu0 %v466, 64
    %v470 = vpop.permute.xlu0 %469
    %v472 = vmul.f32 %v467, %v470
    %v473 = vmul.f32 %v463, 0.0
    %v474 = vadd.f32 %v472, %v473
    %476 = vrot.lane.b32.xlu0 %v474, 64
    %v477 = vpop.permute.xlu0 %476
    %479 = vst.msk [vmem:[%s11] sm:$0xff] %vm217, %v477
    %v480 = vld [vmem:[#allocation3] sm:$0xff]
    %v481 = vld [vmem:[#allocation3 + $0x8] sm:$0xff]
    %v482 = vld [vmem:[%s7] sm:$0xff]
    %v483 = vld [vmem:[%s7 + $0x8] sm:$0xff]
    %v484 = vld [vmem:[%s7 + $0x10] sm:$0xff]
    %v485 = vld [vmem:[%s7 + $0x18] sm:$0xff]
    %v486 = vld [vmem:[%s7 + $0x20] sm:$0xff]
    %v487 = vld [vmem:[%s7 + $0x28] sm:$0xff]
    %v488 = vld [vmem:[%s7 + $0x30] sm:$0xff]
    %v489 = vld [vmem:[%s7 + $0x38] sm:$0xff]
    %v490 = vld [vmem:[%s7 + $0x40] sm:$0xff]
    %v491 = vld [vmem:[%s7 + $0x48] sm:$0xff]
    %v492 = vld [vmem:[%s7 + $0x50] sm:$0xff]
    %v493 = vld [vmem:[%s7 + $0x58] sm:$0xff]
    %v494 = vld [vmem:[%s7 + $0x60] sm:$0xff]
    %v495 = vld [vmem:[%s7 + $0x68] sm:$0xff]
    %v496 = vld [vmem:[%s7 + $0x70] sm:$0xff]
    %v497 = vld [vmem:[%s7 + $0x78] sm:$0xff]
    %498 = vmatpush.msra.mxu0 0.0
    %499 = vmatpush.msra.mxu0 0.0
    %500 = vmatpush.msra.mxu0 0.0
    %501 = vmatpush.msra.mxu0 0.0
    %502 = vmatpush.msra.mxu0 0.0
    %503 = vmatpush.msra.mxu0 0.0
    %504 = vmatpush.msra.mxu0 0.0
    %505 = vmatpush.msra.mxu0 0.0
    %506 = vmatpush.msra.mxu0 %v496
    %507 = vmatpush.msra.mxu0 %v494
    %508 = vmatpush.msra.mxu0 %v492
    %509 = vmatpush.msra.mxu0 %v490
    %510 = vmatpush.msra.mxu0 %v488
    %511 = vmatpush.msra.mxu0 %v486
    %512 = vmatpush.msra.mxu0 %v484
    %513 = vmatpush.msra.mxu0 %v482
    %514 = vmatmul.f32.gmra.mxu0 %v400
    %v515 = vpop.f32.mrf.mxu0
    %v516 = vadd.f32 0.0, %v515
    %517 = vdwg.mxu0
    %518 = vmatpush.msra.mxu0 0.0
    %519 = vmatpush.msra.mxu0 0.0
    %520 = vmatpush.msra.mxu0 0.0
    %521 = vmatpush.msra.mxu0 0.0
    %522 = vmatpush.msra.mxu0 0.0
    %523 = vmatpush.msra.mxu0 0.0
    %524 = vmatpush.msra.mxu0 0.0
    %525 = vmatpush.msra.mxu0 0.0
    %526 = vmatpush.msra.mxu0 %v497
    %527 = vmatpush.msra.mxu0 %v495
    %528 = vmatpush.msra.mxu0 %v493
    %529 = vmatpush.msra.mxu0 %v491
    %530 = vmatpush.msra.mxu0 %v489
    %531 = vmatpush.msra.mxu0 %v487
    %532 = vmatpush.msra.mxu0 %v485
    %533 = vmatpush.msra.mxu0 %v483
    %534 = vmatmul.f32.gmra.mxu0 %v400
    %v535 = vpop.f32.mrf.mxu0
    %v536 = vadd.f32 0.0, %v535
    %537 = vdwg.mxu0
    %v538 = vadd.f32 %v480, %v516
    %v539 = vadd.f32 %v481, %v536
    %v540 = vxor.u32 %v538, 2147483648
    %v541 = vxor.u32 %v539, 2147483648
    %v542 = vmul.f32 %v540, 1.442695
    %v543 = vpow.pop %v542
    %v544 = vmul.f32 %v541, 1.442695
    %v545 = vpow.pop %v544
    %v546 = vadd.f32 %v543, 1.0
    %v547 = vadd.f32 %v545, 1.0
    %v548 = vrcp.pop %v546
    %v549 = vmul.f32 %v546, %v548
    %v550 = vsub.f32 1.0, %v549
    %v551 = vmul.f32 %v548, %v550
    %v552 = vadd.f32 %v548, %v551
    %vm553 = vweird.f32 %v546
    %vm554 = vweird.f32 %v548
    %vm555 = vmor %vm553, %vm554
    %v556 = vsel %vm555, %v548, %v552
    %v557 = vand.u32 2147483647, %v546
    %vm558 = vcmp.eq.f32.partialorder %v557, 8.507059e+37
    %v559 = vand.u32 %v546, 2147483648
    %v560 = vor.u32 1.1754944e-38, %v559
    %v561 = vsel %vm558, %v560, %v556
    %v562 = vmul.f32 1.0, %v561
    %v563 = vrcp.pop %v547
    %v564 = vmul.f32 %v547, %v563
    %v565 = vsub.f32 1.0, %v564
    %v566 = vmul.f32 %v563, %v565
    %v567 = vadd.f32 %v563, %v566
    %vm568 = vweird.f32 %v547
    %vm569 = vweird.f32 %v563
    %vm570 = vmor %vm568, %vm569
    %v571 = vsel %vm570, %v563, %v567
    %v572 = vand.u32 2147483647, %v547
    %vm573 = vcmp.eq.f32.partialorder %v572, 8.507059e+37
    %v574 = vand.u32 %v547, 2147483648
    %v575 = vor.u32 1.1754944e-38, %v574
    %v576 = vsel %vm573, %v575, %v571
    %v577 = vmul.f32 1.0, %v576
    %v578 = vtanh.pop %v539
    %v579 = vmul.f32 %v562, 0.0
    %v580 = vmul.f32 %v562, %v578
    %582 = vrot.lane.b32.xlu0 %v580, 64
    %v583 = vpop.permute.xlu0 %582
    %v585 = vadd.f32 %v579, %v583
    %v586 = vtanh.pop %v585
    %v587 = vmul.f32 %v577, %v586
    %589 = vrot.lane.b32.xlu0 %v587, 64
    %v590 = vpop.permute.xlu0 %589
    %592 = vst.msk [vmem:[%s12] sm:$0xff] %vm217, %v590
    %v593 = vld [vmem:[%s3] sm:$0xff]
    %v594 = vld [vmem:[%s3 + $0x8] sm:$0xff]
    %v595 = vld [vmem:[%s3 + $0x10] sm:$0xff]
    %v596 = vld [vmem:[%s3 + $0x18] sm:$0xff]
    %v597 = vld [vmem:[%s3 + $0x20] sm:$0xff]
    %v598 = vld [vmem:[%s3 + $0x28] sm:$0xff]
    %v599 = vld [vmem:[%s3 + $0x30] sm:$0xff]
    %v600 = vld [vmem:[%s3 + $0x38] sm:$0xff]
    %v601 = vld [vmem:[%s3 + $0x40] sm:$0xff]
    %v602 = vld [vmem:[%s3 + $0x48] sm:$0xff]
    %v603 = vld [vmem:[%s3 + $0x50] sm:$0xff]
    %v604 = vld [vmem:[%s3 + $0x58] sm:$0xff]
    %v605 = vld [vmem:[%s3 + $0x60] sm:$0xff]
    %v606 = vld [vmem:[%s3 + $0x68] sm:$0xff]
    %v607 = vld [vmem:[%s3 + $0x70] sm:$0xff]
    %v608 = vld [vmem:[%s3 + $0x78] sm:$0xff]
    %v609 = vsel %vm217, %v477, 0
    %611 = vmatpush.msra.mxu0 0.0
    %612 = vmatpush.msra.mxu0 0.0
    %613 = vmatpush.msra.mxu0 0.0
    %614 = vmatpush.msra.mxu0 0.0
    %615 = vmatpush.msra.mxu0 0.0
    %616 = vmatpush.msra.mxu0 0.0
    %617 = vmatpush.msra.mxu0 0.0
    %618 = vmatpush.msra.mxu0 0.0
    %619 = vmatpush.msra.mxu0 %v607
    %620 = vmatpush.msra.mxu0 %v605
    %621 = vmatpush.msra.mxu0 %v603
    %622 = vmatpush.msra.mxu0 %v601
    %623 = vmatpush.msra.mxu0 %v599
    %624 = vmatpush.msra.mxu0 %v597
    %625 = vmatpush.msra.mxu0 %v595
    %626 = vmatpush.msra.mxu0 %v593
    %627 = vmatmul.f32.gmra.mxu0 %v609
    %v628 = vpop.f32.mrf.mxu0
    %v629 = vadd.f32 %v395, %v628
    %630 = vdwg.mxu0
    %631 = vmatpush.msra.mxu0 0.0
    %632 = vmatpush.msra.mxu0 0.0
    %633 = vmatpush.msra.mxu0 0.0
    %634 = vmatpush.msra.mxu0 0.0
    %635 = vmatpush.msra.mxu0 0.0
    %636 = vmatpush.msra.mxu0 0.0
    %637 = vmatpush.msra.mxu0 0.0
    %638 = vmatpush.msra.mxu0 0.0
    %639 = vmatpush.msra.mxu0 %v608
    %640 = vmatpush.msra.mxu0 %v606
    %641 = vmatpush.msra.mxu0 %v604
    %642 = vmatpush.msra.mxu0 %v602
    %643 = vmatpush.msra.mxu0 %v600
    %644 = vmatpush.msra.mxu0 %v598
    %645 = vmatpush.msra.mxu0 %v596
    %646 = vmatpush.msra.mxu0 %v594
    %647 = vmatmul.f32.gmra.mxu0 %v609
    %v648 = vpop.f32.mrf.mxu0
    %v649 = vadd.f32 %v396, %v648
    %650 = vdwg.mxu0
    %s651 = scalar_lea.vmem [#allocation2], 16
    %v652 = vld [vmem:[%s651] sm:$0xff]
    %v653 = vld [vmem:[%s651 + $0x8] sm:$0xff]
    %v654 = vadd.f32 %v652, %v629
    %v655 = vxor.u32 %v654, 2147483648
    %v656 = vmul.f32 %v655, 1.442695
    %v657 = vpow.pop %v656
    %v658 = vadd.f32 %v657, 1.0
    %v659 = vrcp.pop %v658
    %v660 = vmul.f32 %v658, %v659
    %v661 = vsub.f32 1.0, %v660
    %v662 = vmul.f32 %v659, %v661
    %v663 = vadd.f32 %v659, %v662
    %vm664 = vweird.f32 %v658
    %vm665 = vweird.f32 %v659
    %vm666 = vmor %vm664, %vm665
    %v667 = vsel %vm666, %v659, %v663
    %v668 = vand.u32 2147483647, %v658
    %vm669 = vcmp.eq.f32.partialorder %v668, 8.507059e+37
    %v670 = vand.u32 %v658, 2147483648
    %v671 = vor.u32 1.1754944e-38, %v670
    %v672 = vsel %vm669, %v671, %v667
    %v673 = vmul.f32 1.0, %v672
    %v674 = vmul.f32 %v673, %v649
    %v675 = vadd.f32 %v653, %v674
    %v676 = vtanh.pop %v675
    %v677 = vsub.f32 1.0, %v673
    %679 = vrot.lane.b32.xlu0 %v676, 64
    %v680 = vpop.permute.xlu0 %679
    %v682 = vmul.f32 %v677, %v680
    %v683 = vmul.f32 %v673, %v474
    %v684 = vadd.f32 %v682, %v683
    %686 = vrot.lane.b32.xlu0 %v684, 64
    %v687 = vpop.permute.xlu0 %686
    %s689 = scalar_lea.vmem %s11, 8
    %690 = vst.msk [vmem:[%s689] sm:$0xff] %vm217, %v687
    %s691 = scalar_lea.vmem [#allocation3], 16
    %v692 = vld [vmem:[%s691] sm:$0xff]
    %v693 = vld [vmem:[%s691 + $0x8] sm:$0xff]
    %v694 = vld [vmem:[%s7] sm:$0xff]
    %v695 = vld [vmem:[%s7 + $0x8] sm:$0xff]
    %v696 = vld [vmem:[%s7 + $0x10] sm:$0xff]
    %v697 = vld [vmem:[%s7 + $0x18] sm:$0xff]
    %v698 = vld [vmem:[%s7 + $0x20] sm:$0xff]
    %v699 = vld [vmem:[%s7 + $0x28] sm:$0xff]
    %v700 = vld [vmem:[%s7 + $0x30] sm:$0xff]
    %v701 = vld [vmem:[%s7 + $0x38] sm:$0xff]
    %v702 = vld [vmem:[%s7 + $0x40] sm:$0xff]
    %v703 = vld [vmem:[%s7 + $0x48] sm:$0xff]
    %v704 = vld [vmem:[%s7 + $0x50] sm:$0xff]
    %v705 = vld [vmem:[%s7 + $0x58] sm:$0xff]
    %v706 = vld [vmem:[%s7 + $0x60] sm:$0xff]
    %v707 = vld [vmem:[%s7 + $0x68] sm:$0xff]
    %v708 = vld [vmem:[%s7 + $0x70] sm:$0xff]
    %v709 = vld [vmem:[%s7 + $0x78] sm:$0xff]
    %v710 = vsel %vm217, %v590, 0
    %712 = vmatpush.msra.mxu0 0.0
    %713 = vmatpush.msra.mxu0 0.0
    %714 = vmatpush.msra.mxu0 0.0
    %715 = vmatpush.msra.mxu0 0.0
    %716 = vmatpush.msra.mxu0 0.0
    %717 = vmatpush.msra.mxu0 0.0
    %718 = vmatpush.msra.mxu0 0.0
    %719 = vmatpush.msra.mxu0 0.0
    %720 = vmatpush.msra.mxu0 %v708
    %721 = vmatpush.msra.mxu0 %v706
    %722 = vmatpush.msra.mxu0 %v704
    %723 = vmatpush.msra.mxu0 %v702
    %724 = vmatpush.msra.mxu0 %v700
    %725 = vmatpush.msra.mxu0 %v698
    %726 = vmatpush.msra.mxu0 %v696
    %727 = vmatpush.msra.mxu0 %v694
    %728 = vmatmul.f32.gmra.mxu0 %v710
    %v729 = vpop.f32.mrf.mxu0
    %v730 = vadd.f32 0.0, %v729
    %731 = vdwg.mxu0
    %732 = vmatpush.msra.mxu0 0.0
    %733 = vmatpush.msra.mxu0 0.0
    %734 = vmatpush.msra.mxu0 0.0
    %735 = vmatpush.msra.mxu0 0.0
    %736 = vmatpush.msra.mxu0 0.0
    %737 = vmatpush.msra.mxu0 0.0
    %738 = vmatpush.msra.mxu0 0.0
    %739 = vmatpush.msra.mxu0 0.0
    %740 = vmatpush.msra.mxu0 %v709
    %741 = vmatpush.msra.mxu0 %v707
    %742 = vmatpush.msra.mxu0 %v705
    %743 = vmatpush.msra.mxu0 %v703
    %744 = vmatpush.msra.mxu0 %v701
    %745 = vmatpush.msra.mxu0 %v699
    %746 = vmatpush.msra.mxu0 %v697
    %747 = vmatpush.msra.mxu0 %v695
    %748 = vmatmul.f32.gmra.mxu0 %v710
    %v749 = vpop.f32.mrf.mxu0
    %v750 = vadd.f32 0.0, %v749
    %751 = vdwg.mxu0
    %v752 = vadd.f32 %v692, %v730
    %v753 = vadd.f32 %v693, %v750
    %v754 = vxor.u32 %v752, 2147483648
    %v755 = vxor.u32 %v753, 2147483648
    %v756 = vmul.f32 %v754, 1.442695
    %v757 = vpow.pop %v756
    %v758 = vmul.f32 %v755, 1.442695
    %v759 = vpow.pop %v758
    %v760 = vadd.f32 %v757, 1.0
    %v761 = vadd.f32 %v759, 1.0
    %v762 = vrcp.pop %v760
    %v763 = vmul.f32 %v760, %v762
    %v764 = vsub.f32 1.0, %v763
    %v765 = vmul.f32 %v762, %v764
    %v766 = vadd.f32 %v762, %v765
    %vm767 = vweird.f32 %v760
    %vm768 = vweird.f32 %v762
    %vm769 = vmor %vm767, %vm768
    %v770 = vsel %vm769, %v762, %v766
    %v771 = vand.u32 2147483647, %v760
    %vm772 = vcmp.eq.f32.partialorder %v771, 8.507059e+37
    %v773 = vand.u32 %v760, 2147483648
    %v774 = vor.u32 1.1754944e-38, %v773
    %v775 = vsel %vm772, %v774, %v770
    %v776 = vmul.f32 1.0, %v775
    %v777 = vrcp.pop %v761
    %v778 = vmul.f32 %v761, %v777
    %v779 = vsub.f32 1.0, %v778
    %v780 = vmul.f32 %v777, %v779
    %v781 = vadd.f32 %v777, %v780
    %vm782 = vweird.f32 %v761
    %vm783 = vweird.f32 %v777
    %vm784 = vmor %vm782, %vm783
    %v785 = vsel %vm784, %v777, %v781
    %v786 = vand.u32 2147483647, %v761
    %vm787 = vcmp.eq.f32.partialorder %v786, 8.507059e+37
    %v788 = vand.u32 %v761, 2147483648
    %v789 = vor.u32 1.1754944e-38, %v788
    %v790 = vsel %vm787, %v789, %v785
    %v791 = vmul.f32 1.0, %v790
    %v792 = vtanh.pop %v753
    %v793 = vmul.f32 %v776, %v585
    %v794 = vmul.f32 %v776, %v792
    %796 = vrot.lane.b32.xlu0 %v794, 64
    %v797 = vpop.permute.xlu0 %796
    %v799 = vadd.f32 %v793, %v797
    %v800 = vtanh.pop %v799
    %v801 = vmul.f32 %v791, %v800
    %803 = vrot.lane.b32.xlu0 %v801, 64
    %v804 = vpop.permute.xlu0 %803
    %s806 = scalar_lea.vmem %s12, 8
    %807 = vst.msk [vmem:[%s806] sm:$0xff] %vm217, %v804
    %v808 = vld [vmem:[%s3] sm:$0xff]
    %v809 = vld [vmem:[%s3 + $0x8] sm:$0xff]
    %v810 = vld [vmem:[%s3 + $0x10] sm:$0xff]
    %v811 = vld [vmem:[%s3 + $0x18] sm:$0xff]
    %v812 = vld [vmem:[%s3 + $0x20] sm:$0xff]
    %v813 = vld [vmem:[%s3 + $0x28] sm:$0xff]
    %v814 = vld [vmem:[%s3 + $0x30] sm:$0xff]
    %v815 = vld [vmem:[%s3 + $0x38] sm:$0xff]
    %v816 = vld [vmem:[%s3 + $0x40] sm:$0xff]
    %v817 = vld [vmem:[%s3 + $0x48] sm:$0xff]
    %v818 = vld [vmem:[%s3 + $0x50] sm:$0xff]
    %v819 = vld [vmem:[%s3 + $0x58] sm:$0xff]
    %v820 = vld [vmem:[%s3 + $0x60] sm:$0xff]
    %v821 = vld [vmem:[%s3 + $0x68] sm:$0xff]
    %v822 = vld [vmem:[%s3 + $0x70] sm:$0xff]
    %v823 = vld [vmem:[%s3 + $0x78] sm:$0xff]
    %v824 = vsel %vm217, %v687, 0
    %826 = vmatpush.msra.mxu0 0.0
    %827 = vmatpush.msra.mxu0 0.0
    %828 = vmatpush.msra.mxu0 0.0
    %829 = vmatpush.msra.mxu0 0.0
    %830 = vmatpush.msra.mxu0 0.0
    %831 = vmatpush.msra.mxu0 0.0
    %832 = vmatpush.msra.mxu0 0.0
    %833 = vmatpush.msra.mxu0 0.0
    %834 = vmatpush.msra.mxu0 %v822
    %835 = vmatpush.msra.mxu0 %v820
    %836 = vmatpush.msra.mxu0 %v818
    %837 = vmatpush.msra.mxu0 %v816
    %838 = vmatpush.msra.mxu0 %v814
    %839 = vmatpush.msra.mxu0 %v812
    %840 = vmatpush.msra.mxu0 %v810
    %841 = vmatpush.msra.mxu0 %v808
    %842 = vmatmul.f32.gmra.mxu0 %v824
    %v843 = vpop.f32.mrf.mxu0
    %v844 = vadd.f32 %v395, %v843
    %845 = vdwg.mxu0
    %846 = vmatpush.msra.mxu0 0.0
    %847 = vmatpush.msra.mxu0 0.0
    %848 = vmatpush.msra.mxu0 0.0
    %849 = vmatpush.msra.mxu0 0.0
    %850 = vmatpush.msra.mxu0 0.0
    %851 = vmatpush.msra.mxu0 0.0
    %852 = vmatpush.msra.mxu0 0.0
    %853 = vmatpush.msra.mxu0 0.0
    %854 = vmatpush.msra.mxu0 %v823
    %855 = vmatpush.msra.mxu0 %v821
    %856 = vmatpush.msra.mxu0 %v819
    %857 = vmatpush.msra.mxu0 %v817
    %858 = vmatpush.msra.mxu0 %v815
    %859 = vmatpush.msra.mxu0 %v813
    %860 = vmatpush.msra.mxu0 %v811
    %861 = vmatpush.msra.mxu0 %v809
    %862 = vmatmul.f32.gmra.mxu0 %v824
    %v863 = vpop.f32.mrf.mxu0
    %v864 = vadd.f32 %v396, %v863
    %865 = vdwg.mxu0
    %s866 = scalar_lea.vmem [#allocation2], 32
    %v867 = vld [vmem:[%s866] sm:$0xff]
    %v868 = vld [vmem:[%s866 + $0x8] sm:$0xff]
    %v869 = vadd.f32 %v867, %v844
    %v870 = vxor.u32 %v869, 2147483648
    %v871 = vmul.f32 %v870, 1.442695
    %v872 = vpow.pop %v871
    %v873 = vadd.f32 %v872, 1.0
    %v874 = vrcp.pop %v873
    %v875 = vmul.f32 %v873, %v874
    %v876 = vsub.f32 1.0, %v875
    %v877 = vmul.f32 %v874, %v876
    %v878 = vadd.f32 %v874, %v877
    %vm879 = vweird.f32 %v873
    %vm880 = vweird.f32 %v874
    %vm881 = vmor %vm879, %vm880
    %v882 = vsel %vm881, %v874, %v878
    %v883 = vand.u32 2147483647, %v873
    %vm884 = vcmp.eq.f32.partialorder %v883, 8.507059e+37
    %v885 = vand.u32 %v873, 2147483648
    %v886 = vor.u32 1.1754944e-38, %v885
    %v887 = vsel %vm884, %v886, %v882
    %v888 = vmul.f32 1.0, %v887
    %v889 = vmul.f32 %v888, %v864
    %v890 = vadd.f32 %v868, %v889
    %v891 = vtanh.pop %v890
    %v892 = vsub.f32 1.0, %v888
    %894 = vrot.lane.b32.xlu0 %v891, 64
    %v895 = vpop.permute.xlu0 %894
    %v897 = vmul.f32 %v892, %v895
    %v898 = vmul.f32 %v888, %v684
    %v899 = vadd.f32 %v897, %v898
    %901 = vrot.lane.b32.xlu0 %v899, 64
    %v902 = vpop.permute.xlu0 %901
    %s904 = scalar_lea.vmem %s11, 16
    %905 = vst.msk [vmem:[%s904] sm:$0xff] %vm217, %v902
    %s906 = scalar_lea.vmem [#allocation3], 32
    %v907 = vld [vmem:[%s906] sm:$0xff]
    %v908 = vld [vmem:[%s906 + $0x8] sm:$0xff]
    %v909 = vld [vmem:[%s7] sm:$0xff]
    %v910 = vld [vmem:[%s7 + $0x8] sm:$0xff]
    %v911 = vld [vmem:[%s7 + $0x10] sm:$0xff]
    %v912 = vld [vmem:[%s7 + $0x18] sm:$0xff]
    %v913 = vld [vmem:[%s7 + $0x20] sm:$0xff]
    %v914 = vld [vmem:[%s7 + $0x28] sm:$0xff]
    %v915 = vld [vmem:[%s7 + $0x30] sm:$0xff]
    %v916 = vld [vmem:[%s7 + $0x38] sm:$0xff]
    %v917 = vld [vmem:[%s7 + $0x40] sm:$0xff]
    %v918 = vld [vmem:[%s7 + $0x48] sm:$0xff]
    %v919 = vld [vmem:[%s7 + $0x50] sm:$0xff]
    %v920 = vld [vmem:[%s7 + $0x58] sm:$0xff]
    %v921 = vld [vmem:[%s7 + $0x60] sm:$0xff]
    %v922 = vld [vmem:[%s7 + $0x68] sm:$0xff]
    %v923 = vld [vmem:[%s7 + $0x70] sm:$0xff]
    %v924 = vld [vmem:[%s7 + $0x78] sm:$0xff]
    %v925 = vsel %vm217, %v804, 0
    %927 = vmatpush.msra.mxu0 0.0
    %928 = vmatpush.msra.mxu0 0.0
    %929 = vmatpush.msra.mxu0 0.0
    %930 = vmatpush.msra.mxu0 0.0
    %931 = vmatpush.msra.mxu0 0.0
    %932 = vmatpush.msra.mxu0 0.0
    %933 = vmatpush.msra.mxu0 0.0
    %934 = vmatpush.msra.mxu0 0.0
    %935 = vmatpush.msra.mxu0 %v923
    %936 = vmatpush.msra.mxu0 %v921
    %937 = vmatpush.msra.mxu0 %v919
    %938 = vmatpush.msra.mxu0 %v917
    %939 = vmatpush.msra.mxu0 %v915
    %940 = vmatpush.msra.mxu0 %v913
    %941 = vmatpush.msra.mxu0 %v911
    %942 = vmatpush.msra.mxu0 %v909
    %943 = vmatmul.f32.gmra.mxu0 %v925
    %v944 = vpop.f32.mrf.mxu0
    %v945 = vadd.f32 0.0, %v944
    %946 = vdwg.mxu0
    %947 = vmatpush.msra.mxu0 0.0
    %948 = vmatpush.msra.mxu0 0.0
    %949 = vmatpush.msra.mxu0 0.0
    %950 = vmatpush.msra.mxu0 0.0
    %951 = vmatpush.msra.mxu0 0.0
    %952 = vmatpush.msra.mxu0 0.0
    %953 = vmatpush.msra.mxu0 0.0
    %954 = vmatpush.msra.mxu0 0.0
    %955 = vmatpush.msra.mxu0 %v924
    %956 = vmatpush.msra.mxu0 %v922
    %957 = vmatpush.msra.mxu0 %v920
    %958 = vmatpush.msra.mxu0 %v918
    %959 = vmatpush.msra.mxu0 %v916
    %960 = vmatpush.msra.mxu0 %v914
    %961 = vmatpush.msra.mxu0 %v912
    %962 = vmatpush.msra.mxu0 %v910
    %963 = vmatmul.f32.gmra.mxu0 %v925
    %v964 = vpop.f32.mrf.mxu0
    %v965 = vadd.f32 0.0, %v964
    %966 = vdwg.mxu0
    %v967 = vadd.f32 %v907, %v945
    %v968 = vadd.f32 %v908, %v965
    %v969 = vxor.u32 %v967, 2147483648
    %v970 = vxor.u32 %v968, 2147483648
    %v971 = vmul.f32 %v969, 1.442695
    %v972 = vpow.pop %v971
    %v973 = vmul.f32 %v970, 1.442695
    %v974 = vpow.pop %v973
    %v975 = vadd.f32 %v972, 1.0
    %v976 = vadd.f32 %v974, 1.0
    %v977 = vrcp.pop %v975
    %v978 = vmul.f32 %v975, %v977
    %v979 = vsub.f32 1.0, %v978
    %v980 = vmul.f32 %v977, %v979
    %v981 = vadd.f32 %v977, %v980
    %vm982 = vweird.f32 %v975
    %vm983 = vweird.f32 %v977
    %vm984 = vmor %vm982, %vm983
    %v985 = vsel %vm984, %v977, %v981
    %v986 = vand.u32 2147483647, %v975
    %vm987 = vcmp.eq.f32.partialorder %v986, 8.507059e+37
    %v988 = vand.u32 %v975, 2147483648
    %v989 = vor.u32 1.1754944e-38, %v988
    %v990 = vsel %vm987, %v989, %v985
    %v991 = vmul.f32 1.0, %v990
    %v992 = vrcp.pop %v976
    %v993 = vmul.f32 %v976, %v992
    %v994 = vsub.f32 1.0, %v993
    %v995 = vmul.f32 %v992, %v994
    %v996 = vadd.f32 %v992, %v995
    %vm997 = vweird.f32 %v976
    %vm998 = vweird.f32 %v992
    %vm999 = vmor %vm997, %vm998
    %v1000 = vsel %vm999, %v992, %v996
    %v1001 = vand.u32 2147483647, %v976
    %vm1002 = vcmp.eq.f32.partialorder %v1001, 8.507059e+37
    %v1003 = vand.u32 %v976, 2147483648
    %v1004 = vor.u32 1.1754944e-38, %v1003
    %v1005 = vsel %vm1002, %v1004, %v1000
    %v1006 = vmul.f32 1.0, %v1005
    %v1007 = vtanh.pop %v968
    %v1008 = vmul.f32 %v991, %v799
    %v1009 = vmul.f32 %v991, %v1007
    %1011 = vrot.lane.b32.xlu0 %v1009, 64
    %v1012 = vpop.permute.xlu0 %1011
    %v1014 = vadd.f32 %v1008, %v1012
    %v1015 = vtanh.pop %v1014
    %v1016 = vmul.f32 %v1006, %v1015
    %1018 = vrot.lane.b32.xlu0 %v1016, 64
    %v1019 = vpop.permute.xlu0 %1018
    %s1021 = scalar_lea.vmem %s12, 16
    %1022 = vst.msk [vmem:[%s1021] sm:$0xff] %vm217, %v1019
    %v1023 = vld [vmem:[%s3] sm:$0xff]
    %v1024 = vld [vmem:[%s3 + $0x8] sm:$0xff]
    %v1025 = vld [vmem:[%s3 + $0x10] sm:$0xff]
    %v1026 = vld [vmem:[%s3 + $0x18] sm:$0xff]
    %v1027 = vld [vmem:[%s3 + $0x20] sm:$0xff]
    %v1028 = vld [vmem:[%s3 + $0x28] sm:$0xff]
    %v1029 = vld [vmem:[%s3 + $0x30] sm:$0xff]
    %v1030 = vld [vmem:[%s3 + $0x38] sm:$0xff]
    %v1031 = vld [vmem:[%s3 + $0x40] sm:$0xff]
    %v1032 = vld [vmem:[%s3 + $0x48] sm:$0xff]
    %v1033 = vld [vmem:[%s3 + $0x50] sm:$0xff]
    %v1034 = vld [vmem:[%s3 + $0x58] sm:$0xff]
    %v1035 = vld [vmem:[%s3 + $0x60] sm:$0xff]
    %v1036 = vld [vmem:[%s3 + $0x68] sm:$0xff]
    %v1037 = vld [vmem:[%s3 + $0x70] sm:$0xff]
    %v1038 = vld [vmem:[%s3 + $0x78] sm:$0xff]
    %v1039 = vsel %vm217, %v902, 0
    %1041 = vmatpush.msra.mxu0 0.0
    %1042 = vmatpush.msra.mxu0 0.0
    %1043 = vmatpush.msra.mxu0 0.0
    %1044 = vmatpush.msra.mxu0 0.0
    %1045 = vmatpush.msra.mxu0 0.0
    %1046 = vmatpush.msra.mxu0 0.0
    %1047 = vmatpush.msra.mxu0 0.0
    %1048 = vmatpush.msra.mxu0 0.0
    %1049 = vmatpush.msra.mxu0 %v1037
    %1050 = vmatpush.msra.mxu0 %v1035
    %1051 = vmatpush.msra.mxu0 %v1033
    %1052 = vmatpush.msra.mxu0 %v1031
    %1053 = vmatpush.msra.mxu0 %v1029
    %1054 = vmatpush.msra.mxu0 %v1027
    %1055 = vmatpush.msra.mxu0 %v1025
    %1056 = vmatpush.msra.mxu0 %v1023
    %1057 = vmatmul.f32.gmra.mxu0 %v1039
    %v1058 = vpop.f32.mrf.mxu0
    %v1059 = vadd.f32 %v395, %v1058
    %1060 = vdwg.mxu0
    %1061 = vmatpush.msra.mxu0 0.0
    %1062 = vmatpush.msra.mxu0 0.0
    %1063 = vmatpush.msra.mxu0 0.0
    %1064 = vmatpush.msra.mxu0 0.0
    %1065 = vmatpush.msra.mxu0 0.0
    %1066 = vmatpush.msra.mxu0 0.0
    %1067 = vmatpush.msra.mxu0 0.0
    %1068 = vmatpush.msra.mxu0 0.0
    %1069 = vmatpush.msra.mxu0 %v1038
    %1070 = vmatpush.msra.mxu0 %v1036
    %1071 = vmatpush.msra.mxu0 %v1034
    %1072 = vmatpush.msra.mxu0 %v1032
    %1073 = vmatpush.msra.mxu0 %v1030
    %1074 = vmatpush.msra.mxu0 %v1028
    %1075 = vmatpush.msra.mxu0 %v1026
    %1076 = vmatpush.msra.mxu0 %v1024
    %1077 = vmatmul.f32.gmra.mxu0 %v1039
    %v1078 = vpop.f32.mrf.mxu0
    %v1079 = vadd.f32 %v396, %v1078
    %1080 = vdwg.mxu0
    %s1081 = scalar_lea.vmem [#allocation2], 48
    %v1082 = vld [vmem:[%s1081] sm:$0xff]
    %v1083 = vld [vmem:[%s1081 + $0x8] sm:$0xff]
    %v1084 = vadd.f32 %v1082, %v1059
    %v1085 = vxor.u32 %v1084, 2147483648
    %v1086 = vmul.f32 %v1085, 1.442695
    %v1087 = vpow.pop %v1086
    %v1088 = vadd.f32 %v1087, 1.0
    %v1089 = vrcp.pop %v1088
    %v1090 = vmul.f32 %v1088, %v1089
    %v1091 = vsub.f32 1.0, %v1090
    %v1092 = vmul.f32 %v1089, %v1091
    %v1093 = vadd.f32 %v1089, %v1092
    %vm1094 = vweird.f32 %v1088
    %vm1095 = vweird.f32 %v1089
    %vm1096 = vmor %vm1094, %vm1095
    %v1097 = vsel %vm1096, %v1089, %v1093
    %v1098 = vand.u32 2147483647, %v1088
    %vm1099 = vcmp.eq.f32.partialorder %v1098, 8.507059e+37
    %v1100 = vand.u32 %v1088, 2147483648
    %v1101 = vor.u32 1.1754944e-38, %v1100
    %v1102 = vsel %vm1099, %v1101, %v1097
    %v1103 = vmul.f32 1.0, %v1102
    %v1104 = vmul.f32 %v1103, %v1079
    %v1105 = vadd.f32 %v1083, %v1104
    %v1106 = vtanh.pop %v1105
    %v1107 = vsub.f32 1.0, %v1103
    %1109 = vrot.lane.b32.xlu0 %v1106, 64
    %v1110 = vpop.permute.xlu0 %1109
    %v1112 = vmul.f32 %v1107, %v1110
    %v1113 = vmul.f32 %v1103, %v899
    %v1114 = vadd.f32 %v1112, %v1113
    %1116 = vrot.lane.b32.xlu0 %v1114, 64
    %v1117 = vpop.permute.xlu0 %1116
    %s1119 = scalar_lea.vmem %s11, 24
    %1120 = vst.msk [vmem:[%s1119] sm:$0xff] %vm217, %v1117
    %s1121 = scalar_lea.vmem [#allocation3], 48
    %v1122 = vld [vmem:[%s1121] sm:$0xff]
    %v1123 = vld [vmem:[%s1121 + $0x8] sm:$0xff]
    %v1124 = vld [vmem:[%s7] sm:$0xff]
    %v1125 = vld [vmem:[%s7 + $0x8] sm:$0xff]
    %v1126 = vld [vmem:[%s7 + $0x10] sm:$0xff]
    %v1127 = vld [vmem:[%s7 + $0x18] sm:$0xff]
    %v1128 = vld [vmem:[%s7 + $0x20] sm:$0xff]
    %v1129 = vld [vmem:[%s7 + $0x28] sm:$0xff]
    %v1130 = vld [vmem:[%s7 + $0x30] sm:$0xff]
    %v1131 = vld [vmem:[%s7 + $0x38] sm:$0xff]
    %v1132 = vld [vmem:[%s7 + $0x40] sm:$0xff]
    %v1133 = vld [vmem:[%s7 + $0x48] sm:$0xff]
    %v1134 = vld [vmem:[%s7 + $0x50] sm:$0xff]
    %v1135 = vld [vmem:[%s7 + $0x58] sm:$0xff]
    %v1136 = vld [vmem:[%s7 + $0x60] sm:$0xff]
    %v1137 = vld [vmem:[%s7 + $0x68] sm:$0xff]
    %v1138 = vld [vmem:[%s7 + $0x70] sm:$0xff]
    %v1139 = vld [vmem:[%s7 + $0x78] sm:$0xff]
    %v1140 = vsel %vm217, %v1019, 0
    %1142 = vmatpush.msra.mxu0 0.0
    %1143 = vmatpush.msra.mxu0 0.0
    %1144 = vmatpush.msra.mxu0 0.0
    %1145 = vmatpush.msra.mxu0 0.0
    %1146 = vmatpush.msra.mxu0 0.0
    %1147 = vmatpush.msra.mxu0 0.0
    %1148 = vmatpush.msra.mxu0 0.0
    %1149 = vmatpush.msra.mxu0 0.0
    %1150 = vmatpush.msra.mxu0 %v1138
    %1151 = vmatpush.msra.mxu0 %v1136
    %1152 = vmatpush.msra.mxu0 %v1134
    %1153 = vmatpush.msra.mxu0 %v1132
    %1154 = vmatpush.msra.mxu0 %v1130
    %1155 = vmatpush.msra.mxu0 %v1128
    %1156 = vmatpush.msra.mxu0 %v1126
    %1157 = vmatpush.msra.mxu0 %v1124
    %1158 = vmatmul.f32.gmra.mxu0 %v1140
    %v1159 = vpop.f32.mrf.mxu0
    %v1160 = vadd.f32 0.0, %v1159
    %1161 = vdwg.mxu0
    %1162 = vmatpush.msra.mxu0 0.0
    %1163 = vmatpush.msra.mxu0 0.0
    %1164 = vmatpush.msra.mxu0 0.0
    %1165 = vmatpush.msra.mxu0 0.0
    %1166 = vmatpush.msra.mxu0 0.0
    %1167 = vmatpush.msra.mxu0 0.0
    %1168 = vmatpush.msra.mxu0 0.0
    %1169 = vmatpush.msra.mxu0 0.0
    %1170 = vmatpush.msra.mxu0 %v1139
    %1171 = vmatpush.msra.mxu0 %v1137
    %1172 = vmatpush.msra.mxu0 %v1135
    %1173 = vmatpush.msra.mxu0 %v1133
    %1174 = vmatpush.msra.mxu0 %v1131
    %1175 = vmatpush.msra.mxu0 %v1129
    %1176 = vmatpush.msra.mxu0 %v1127
    %1177 = vmatpush.msra.mxu0 %v1125
    %1178 = vmatmul.f32.gmra.mxu0 %v1140
    %v1179 = vpop.f32.mrf.mxu0
    %v1180 = vadd.f32 0.0, %v1179
    %1181 = vdwg.mxu0
    %v1182 = vadd.f32 %v1122, %v1160
    %v1183 = vadd.f32 %v1123, %v1180
    %v1184 = vxor.u32 %v1182, 2147483648
    %v1185 = vxor.u32 %v1183, 2147483648
    %v1186 = vmul.f32 %v1184, 1.442695
    %v1187 = vpow.pop %v1186
    %v1188 = vmul.f32 %v1185, 1.442695
    %v1189 = vpow.pop %v1188
    %v1190 = vadd.f32 %v1187, 1.0
    %v1191 = vadd.f32 %v1189, 1.0
    %v1192 = vrcp.pop %v1190
    %v1193 = vmul.f32 %v1190, %v1192
    %v1194 = vsub.f32 1.0, %v1193
    %v1195 = vmul.f32 %v1192, %v1194
    %v1196 = vadd.f32 %v1192, %v1195
    %vm1197 = vweird.f32 %v1190
    %vm1198 = vweird.f32 %v1192
    %vm1199 = vmor %vm1197, %vm1198
    %v1200 = vsel %vm1199, %v1192, %v1196
    %v1201 = vand.u32 2147483647, %v1190
    %vm1202 = vcmp.eq.f32.partialorder %v1201, 8.507059e+37
    %v1203 = vand.u32 %v1190, 2147483648
    %v1204 = vor.u32 1.1754944e-38, %v1203
    %v1205 = vsel %vm1202, %v1204, %v1200
    %v1206 = vmul.f32 1.0, %v1205
    %v1207 = vrcp.pop %v1191
    %v1208 = vmul.f32 %v1191, %v1207
    %v1209 = vsub.f32 1.0, %v1208
    %v1210 = vmul.f32 %v1207, %v1209
    %v1211 = vadd.f32 %v1207, %v1210
    %vm1212 = vweird.f32 %v1191
    %vm1213 = vweird.f32 %v1207
    %vm1214 = vmor %vm1212, %vm1213
    %v1215 = vsel %vm1214, %v1207, %v1211
    %v1216 = vand.u32 2147483647, %v1191
    %vm1217 = vcmp.eq.f32.partialorder %v1216, 8.507059e+37
    %v1218 = vand.u32 %v1191, 2147483648
    %v1219 = vor.u32 1.1754944e-38, %v1218
    %v1220 = vsel %vm1217, %v1219, %v1215
    %v1221 = vmul.f32 1.0, %v1220
    %v1222 = vtanh.pop %v1183
    %v1223 = vmul.f32 %v1206, %v1014
    %v1224 = vmul.f32 %v1206, %v1222
    %1226 = vrot.lane.b32.xlu0 %v1224, 64
    %v1227 = vpop.permute.xlu0 %1226
    %v1229 = vadd.f32 %v1223, %v1227
    %v1230 = vtanh.pop %v1229
    %v1231 = vmul.f32 %v1221, %v1230
    %1233 = vrot.lane.b32.xlu0 %v1231, 64
    %v1234 = vpop.permute.xlu0 %1233
    %s1236 = scalar_lea.vmem %s12, 24
    %1237 = vst.msk [vmem:[%s1236] sm:$0xff] %vm217, %v1234
    %v1238 = vld [vmem:[%s3] sm:$0xff]
    %v1239 = vld [vmem:[%s3 + $0x8] sm:$0xff]
    %v1240 = vld [vmem:[%s3 + $0x10] sm:$0xff]
    %v1241 = vld [vmem:[%s3 + $0x18] sm:$0xff]
    %v1242 = vld [vmem:[%s3 + $0x20] sm:$0xff]
    %v1243 = vld [vmem:[%s3 + $0x28] sm:$0xff]
    %v1244 = vld [vmem:[%s3 + $0x30] sm:$0xff]
    %v1245 = vld [vmem:[%s3 + $0x38] sm:$0xff]
    %v1246 = vld [vmem:[%s3 + $0x40] sm:$0xff]
    %v1247 = vld [vmem:[%s3 + $0x48] sm:$0xff]
    %v1248 = vld [vmem:[%s3 + $0x50] sm:$0xff]
    %v1249 = vld [vmem:[%s3 + $0x58] sm:$0xff]
    %v1250 = vld [vmem:[%s3 + $0x60] sm:$0xff]
    %v1251 = vld [vmem:[%s3 + $0x68] sm:$0xff]
    %v1252 = vld [vmem:[%s3 + $0x70] sm:$0xff]
    %v1253 = vld [vmem:[%s3 + $0x78] sm:$0xff]
    %v1254 = vsel %vm217, %v1117, 0
    %1256 = vmatpush.msra.mxu0 0.0
    %1257 = vmatpush.msra.mxu0 0.0
    %1258 = vmatpush.msra.mxu0 0.0
    %1259 = vmatpush.msra.mxu0 0.0
    %1260 = vmatpush.msra.mxu0 0.0
    %1261 = vmatpush.msra.mxu0 0.0
    %1262 = vmatpush.msra.mxu0 0.0
    %1263 = vmatpush.msra.mxu0 0.0
    %1264 = vmatpush.msra.mxu0 %v1252
    %1265 = vmatpush.msra.mxu0 %v1250
    %1266 = vmatpush.msra.mxu0 %v1248
    %1267 = vmatpush.msra.mxu0 %v1246
    %1268 = vmatpush.msra.mxu0 %v1244
    %1269 = vmatpush.msra.mxu0 %v1242
    %1270 = vmatpush.msra.mxu0 %v1240
    %1271 = vmatpush.msra.mxu0 %v1238
    %1272 = vmatmul.f32.gmra.mxu0 %v1254
    %v1273 = vpop.f32.mrf.mxu0
    %v1274 = vadd.f32 %v395, %v1273
    %1275 = vdwg.mxu0
    %1276 = vmatpush.msra.mxu0 0.0
    %1277 = vmatpush.msra.mxu0 0.0
    %1278 = vmatpush.msra.mxu0 0.0
    %1279 = vmatpush.msra.mxu0 0.0
    %1280 = vmatpush.msra.mxu0 0.0
    %1281 = vmatpush.msra.mxu0 0.0
    %1282 = vmatpush.msra.mxu0 0.0
    %1283 = vmatpush.msra.mxu0 0.0
    %1284 = vmatpush.msra.mxu0 %v1253
    %1285 = vmatpush.msra.mxu0 %v1251
    %1286 = vmatpush.msra.mxu0 %v1249
    %1287 = vmatpush.msra.mxu0 %v1247
    %1288 = vmatpush.msra.mxu0 %v1245
    %1289 = vmatpush.msra.mxu0 %v1243
    %1290 = vmatpush.msra.mxu0 %v1241
    %1291 = vmatpush.msra.mxu0 %v1239
    %1292 = vmatmul.f32.gmra.mxu0 %v1254
    %v1293 = vpop.f32.mrf.mxu0
    %v1294 = vadd.f32 %v396, %v1293
    %1295 = vdwg.mxu0
    %s1296 = scalar_lea.vmem [#allocation2], 64
    %v1297 = vld [vmem:[%s1296] sm:$0xff]
    %v1298 = vld [vmem:[%s1296 + $0x8] sm:$0xff]
    %v1299 = vadd.f32 %v1297, %v1274
    %v1300 = vxor.u32 %v1299, 2147483648
    %v1301 = vmul.f32 %v1300, 1.442695
    %v1302 = vpow.pop %v1301
    %v1303 = vadd.f32 %v1302, 1.0
    %v1304 = vrcp.pop %v1303
    %v1305 = vmul.f32 %v1303, %v1304
    %v1306 = vsub.f32 1.0, %v1305
    %v1307 = vmul.f32 %v1304, %v1306
    %v1308 = vadd.f32 %v1304, %v1307
    %vm1309 = vweird.f32 %v1303
    %vm1310 = vweird.f32 %v1304
    %vm1311 = vmor %vm1309, %vm1310
    %v1312 = vsel %vm1311, %v1304, %v1308
    %v1313 = vand.u32 2147483647, %v1303
    %vm1314 = vcmp.eq.f32.partialorder %v1313, 8.507059e+37
    %v1315 = vand.u32 %v1303, 2147483648
    %v1316 = vor.u32 1.1754944e-38, %v1315
    %v1317 = vsel %vm1314, %v1316, %v1312
    %v1318 = vmul.f32 1.0, %v1317
    %v1319 = vmul.f32 %v1318, %v1294
    %v1320 = vadd.f32 %v1298, %v1319
    %v1321 = vtanh.pop %v1320
    %v1322 = vsub.f32 1.0, %v1318
    %1324 = vrot.lane.b32.xlu0 %v1321, 64
    %v1325 = vpop.permute.xlu0 %1324
    %v1327 = vmul.f32 %v1322, %v1325
    %v1328 = vmul.f32 %v1318, %v1114
    %v1329 = vadd.f32 %v1327, %v1328
    %1331 = vrot.lane.b32.xlu0 %v1329, 64
    %v1332 = vpop.permute.xlu0 %1331
    %s1334 = scalar_lea.vmem %s11, 32
    %1335 = vst.msk [vmem:[%s1334] sm:$0xff] %vm217, %v1332
    %s1336 = scalar_lea.vmem [#allocation3], 64
    %v1337 = vld [vmem:[%s1336] sm:$0xff]
    %v1338 = vld [vmem:[%s1336 + $0x8] sm:$0xff]
    %v1339 = vld [vmem:[%s7] sm:$0xff]
    %v1340 = vld [vmem:[%s7 + $0x8] sm:$0xff]
    %v1341 = vld [vmem:[%s7 + $0x10] sm:$0xff]
    %v1342 = vld [vmem:[%s7 + $0x18] sm:$0xff]
    %v1343 = vld [vmem:[%s7 + $0x20] sm:$0xff]
    %v1344 = vld [vmem:[%s7 + $0x28] sm:$0xff]
    %v1345 = vld [vmem:[%s7 + $0x30] sm:$0xff]
    %v1346 = vld [vmem:[%s7 + $0x38] sm:$0xff]
    %v1347 = vld [vmem:[%s7 + $0x40] sm:$0xff]
    %v1348 = vld [vmem:[%s7 + $0x48] sm:$0xff]
    %v1349 = vld [vmem:[%s7 + $0x50] sm:$0xff]
    %v1350 = vld [vmem:[%s7 + $0x58] sm:$0xff]
    %v1351 = vld [vmem:[%s7 + $0x60] sm:$0xff]
    %v1352 = vld [vmem:[%s7 + $0x68] sm:$0xff]
    %v1353 = vld [vmem:[%s7 + $0x70] sm:$0xff]
    %v1354 = vld [vmem:[%s7 + $0x78] sm:$0xff]
    %v1355 = vsel %vm217, %v1234, 0
    %1357 = vmatpush.msra.mxu0 0.0
    %1358 = vmatpush.msra.mxu0 0.0
    %1359 = vmatpush.msra.mxu0 0.0
    %1360 = vmatpush.msra.mxu0 0.0
    %1361 = vmatpush.msra.mxu0 0.0
    %1362 = vmatpush.msra.mxu0 0.0
    %1363 = vmatpush.msra.mxu0 0.0
    %1364 = vmatpush.msra.mxu0 0.0
    %1365 = vmatpush.msra.mxu0 %v1353
    %1366 = vmatpush.msra.mxu0 %v1351
    %1367 = vmatpush.msra.mxu0 %v1349
    %1368 = vmatpush.msra.mxu0 %v1347
    %1369 = vmatpush.msra.mxu0 %v1345
    %1370 = vmatpush.msra.mxu0 %v1343
    %1371 = vmatpush.msra.mxu0 %v1341
    %1372 = vmatpush.msra.mxu0 %v1339
    %1373 = vmatmul.f32.gmra.mxu0 %v1355
    %v1374 = vpop.f32.mrf.mxu0
    %v1375 = vadd.f32 0.0, %v1374
    %1376 = vdwg.mxu0
    %1377 = vmatpush.msra.mxu0 0.0
    %1378 = vmatpush.msra.mxu0 0.0
    %1379 = vmatpush.msra.mxu0 0.0
    %1380 = vmatpush.msra.mxu0 0.0
    %1381 = vmatpush.msra.mxu0 0.0
    %1382 = vmatpush.msra.mxu0 0.0
    %1383 = vmatpush.msra.mxu0 0.0
    %1384 = vmatpush.msra.mxu0 0.0
    %1385 = vmatpush.msra.mxu0 %v1354
    %1386 = vmatpush.msra.mxu0 %v1352
    %1387 = vmatpush.msra.mxu0 %v1350
    %1388 = vmatpush.msra.mxu0 %v1348
    %1389 = vmatpush.msra.mxu0 %v1346
    %1390 = vmatpush.msra.mxu0 %v1344
    %1391 = vmatpush.msra.mxu0 %v1342
    %1392 = vmatpush.msra.mxu0 %v1340
    %1393 = vmatmul.f32.gmra.mxu0 %v1355
    %v1394 = vpop.f32.mrf.mxu0
    %v1395 = vadd.f32 0.0, %v1394
    %1396 = vdwg.mxu0
    %v1397 = vadd.f32 %v1337, %v1375
    %v1398 = vadd.f32 %v1338, %v1395
    %v1399 = vxor.u32 %v1397, 2147483648
    %v1400 = vxor.u32 %v1398, 2147483648
    %v1401 = vmul.f32 %v1399, 1.442695
    %v1402 = vpow.pop %v1401
    %v1403 = vmul.f32 %v1400, 1.442695
    %v1404 = vpow.pop %v1403
    %v1405 = vadd.f32 %v1402, 1.0
    %v1406 = vadd.f32 %v1404, 1.0
    %v1407 = vrcp.pop %v1405
    %v1408 = vmul.f32 %v1405, %v1407
    %v1409 = vsub.f32 1.0, %v1408
    %v1410 = vmul.f32 %v1407, %v1409
    %v1411 = vadd.f32 %v1407, %v1410
    %vm1412 = vweird.f32 %v1405
    %vm1413 = vweird.f32 %v1407
    %vm1414 = vmor %vm1412, %vm1413
    %v1415 = vsel %vm1414, %v1407, %v1411
    %v1416 = vand.u32 2147483647, %v1405
    %vm1417 = vcmp.eq.f32.partialorder %v1416, 8.507059e+37
    %v1418 = vand.u32 %v1405, 2147483648
    %v1419 = vor.u32 1.1754944e-38, %v1418
    %v1420 = vsel %vm1417, %v1419, %v1415
    %v1421 = vmul.f32 1.0, %v1420
    %v1422 = vrcp.pop %v1406
    %v1423 = vmul.f32 %v1406, %v1422
    %v1424 = vsub.f32 1.0, %v1423
    %v1425 = vmul.f32 %v1422, %v1424
    %v1426 = vadd.f32 %v1422, %v1425
    %vm1427 = vweird.f32 %v1406
    %vm1428 = vweird.f32 %v1422
    %vm1429 = vmor %vm1427, %vm1428
    %v1430 = vsel %vm1429, %v1422, %v1426
    %v1431 = vand.u32 2147483647, %v1406
    %vm1432 = vcmp.eq.f32.partialorder %v1431, 8.507059e+37
    %v1433 = vand.u32 %v1406, 2147483648
    %v1434 = vor.u32 1.1754944e-38, %v1433
    %v1435 = vsel %vm1432, %v1434, %v1430
    %v1436 = vmul.f32 1.0, %v1435
    %v1437 = vtanh.pop %v1398
    %v1438 = vmul.f32 %v1421, %v1229
    %v1439 = vmul.f32 %v1421, %v1437
    %1441 = vrot.lane.b32.xlu0 %v1439, 64
    %v1442 = vpop.permute.xlu0 %1441
    %v1444 = vadd.f32 %v1438, %v1442
    %v1445 = vtanh.pop %v1444
    %v1446 = vmul.f32 %v1436, %v1445
    %1448 = vrot.lane.b32.xlu0 %v1446, 64
    %v1449 = vpop.permute.xlu0 %1448
    %s1451 = scalar_lea.vmem %s12, 32
    %1452 = vst.msk [vmem:[%s1451] sm:$0xff] %vm217, %v1449
    %v1453 = vld [vmem:[%s3] sm:$0xff]
    %v1454 = vld [vmem:[%s3 + $0x8] sm:$0xff]
    %v1455 = vld [vmem:[%s3 + $0x10] sm:$0xff]
    %v1456 = vld [vmem:[%s3 + $0x18] sm:$0xff]
    %v1457 = vld [vmem:[%s3 + $0x20] sm:$0xff]
    %v1458 = vld [vmem:[%s3 + $0x28] sm:$0xff]
    %v1459 = vld [vmem:[%s3 + $0x30] sm:$0xff]
    %v1460 = vld [vmem:[%s3 + $0x38] sm:$0xff]
    %v1461 = vld [vmem:[%s3 + $0x40] sm:$0xff]
    %v1462 = vld [vmem:[%s3 + $0x48] sm:$0xff]
    %v1463 = vld [vmem:[%s3 + $0x50] sm:$0xff]
    %v1464 = vld [vmem:[%s3 + $0x58] sm:$0xff]
    %v1465 = vld [vmem:[%s3 + $0x60] sm:$0xff]
    %v1466 = vld [vmem:[%s3 + $0x68] sm:$0xff]
    %v1467 = vld [vmem:[%s3 + $0x70] sm:$0xff]
    %v1468 = vld [vmem:[%s3 + $0x78] sm:$0xff]
    %v1469 = vsel %vm217, %v1332, 0
    %1471 = vmatpush.msra.mxu0 0.0
    %1472 = vmatpush.msra.mxu0 0.0
    %1473 = vmatpush.msra.mxu0 0.0
    %1474 = vmatpush.msra.mxu0 0.0
    %1475 = vmatpush.msra.mxu0 0.0
    %1476 = vmatpush.msra.mxu0 0.0
    %1477 = vmatpush.msra.mxu0 0.0
    %1478 = vmatpush.msra.mxu0 0.0
    %1479 = vmatpush.msra.mxu0 %v1467
    %1480 = vmatpush.msra.mxu0 %v1465
    %1481 = vmatpush.msra.mxu0 %v1463
    %1482 = vmatpush.msra.mxu0 %v1461
    %1483 = vmatpush.msra.mxu0 %v1459
    %1484 = vmatpush.msra.mxu0 %v1457
    %1485 = vmatpush.msra.mxu0 %v1455
    %1486 = vmatpush.msra.mxu0 %v1453
    %1487 = vmatmul.f32.gmra.mxu0 %v1469
    %v1488 = vpop.f32.mrf.mxu0
    %v1489 = vadd.f32 %v395, %v1488
    %1490 = vdwg.mxu0
    %1491 = vmatpush.msra.mxu0 0.0
    %1492 = vmatpush.msra.mxu0 0.0
    %1493 = vmatpush.msra.mxu0 0.0
    %1494 = vmatpush.msra.mxu0 0.0
    %1495 = vmatpush.msra.mxu0 0.0
    %1496 = vmatpush.msra.mxu0 0.0
    %1497 = vmatpush.msra.mxu0 0.0
    %1498 = vmatpush.msra.mxu0 0.0
    %1499 = vmatpush.msra.mxu0 %v1468
    %1500 = vmatpush.msra.mxu0 %v1466
    %1501 = vmatpush.msra.mxu0 %v1464
    %1502 = vmatpush.msra.mxu0 %v1462
    %1503 = vmatpush.msra.mxu0 %v1460
    %1504 = vmatpush.msra.mxu0 %v1458
    %1505 = vmatpush.msra.mxu0 %v1456
    %1506 = vmatpush.msra.mxu0 %v1454
    %1507 = vmatmul.f32.gmra.mxu0 %v1469
    %v1508 = vpop.f32.mrf.mxu0
    %v1509 = vadd.f32 %v396, %v1508
    %1510 = vdwg.mxu0
    %s1511 = scalar_lea.vmem [#allocation2], 80
    %v1512 = vld [vmem:[%s1511] sm:$0xff]
    %v1513 = vld [vmem:[%s1511 + $0x8] sm:$0xff]
    %v1514 = vadd.f32 %v1512, %v1489
    %v1515 = vxor.u32 %v1514, 2147483648
    %v1516 = vmul.f32 %v1515, 1.442695
    %v1517 = vpow.pop %v1516
    %v1518 = vadd.f32 %v1517, 1.0
    %v1519 = vrcp.pop %v1518
    %v1520 = vmul.f32 %v1518, %v1519
    %v1521 = vsub.f32 1.0, %v1520
    %v1522 = vmul.f32 %v1519, %v1521
    %v1523 = vadd.f32 %v1519, %v1522
    %vm1524 = vweird.f32 %v1518
    %vm1525 = vweird.f32 %v1519
    %vm1526 = vmor %vm1524, %vm1525
    %v1527 = vsel %vm1526, %v1519, %v1523
    %v1528 = vand.u32 2147483647, %v1518
    %vm1529 = vcmp.eq.f32.partialorder %v1528, 8.507059e+37
    %v1530 = vand.u32 %v1518, 2147483648
    %v1531 = vor.u32 1.1754944e-38, %v1530
    %v1532 = vsel %vm1529, %v1531, %v1527
    %v1533 = vmul.f32 1.0, %v1532
    %v1534 = vmul.f32 %v1533, %v1509
    %v1535 = vadd.f32 %v1513, %v1534
    %v1536 = vtanh.pop %v1535
    %v1537 = vsub.f32 1.0, %v1533
    %1539 = vrot.lane.b32.xlu0 %v1536, 64
    %v1540 = vpop.permute.xlu0 %1539
    %v1542 = vmul.f32 %v1537, %v1540
    %v1543 = vmul.f32 %v1533, %v1329
    %v1544 = vadd.f32 %v1542, %v1543
    %1546 = vrot.lane.b32.xlu0 %v1544, 64
    %v1547 = vpop.permute.xlu0 %1546
    %s1549 = scalar_lea.vmem %s11, 40
    %1550 = vst.msk [vmem:[%s1549] sm:$0xff] %vm217, %v1547
    %s1551 = scalar_lea.vmem [#allocation3], 80
    %v1552 = vld [vmem:[%s1551] sm:$0xff]
    %v1553 = vld [vmem:[%s1551 + $0x8] sm:$0xff]
    %v1554 = vld [vmem:[%s7] sm:$0xff]
    %v1555 = vld [vmem:[%s7 + $0x8] sm:$0xff]
    %v1556 = vld [vmem:[%s7 + $0x10] sm:$0xff]
    %v1557 = vld [vmem:[%s7 + $0x18] sm:$0xff]
    %v1558 = vld [vmem:[%s7 + $0x20] sm:$0xff]
    %v1559 = vld [vmem:[%s7 + $0x28] sm:$0xff]
    %v1560 = vld [vmem:[%s7 + $0x30] sm:$0xff]
    %v1561 = vld [vmem:[%s7 + $0x38] sm:$0xff]
    %v1562 = vld [vmem:[%s7 + $0x40] sm:$0xff]
    %v1563 = vld [vmem:[%s7 + $0x48] sm:$0xff]
    %v1564 = vld [vmem:[%s7 + $0x50] sm:$0xff]
    %v1565 = vld [vmem:[%s7 + $0x58] sm:$0xff]
    %v1566 = vld [vmem:[%s7 + $0x60] sm:$0xff]
    %v1567 = vld [vmem:[%s7 + $0x68] sm:$0xff]
    %v1568 = vld [vmem:[%s7 + $0x70] sm:$0xff]
    %v1569 = vld [vmem:[%s7 + $0x78] sm:$0xff]
    %v1570 = vsel %vm217, %v1449, 0
    %1572 = vmatpush.msra.mxu0 0.0
    %1573 = vmatpush.msra.mxu0 0.0
    %1574 = vmatpush.msra.mxu0 0.0
    %1575 = vmatpush.msra.mxu0 0.0
    %1576 = vmatpush.msra.mxu0 0.0
    %1577 = vmatpush.msra.mxu0 0.0
    %1578 = vmatpush.msra.mxu0 0.0
    %1579 = vmatpush.msra.mxu0 0.0
    %1580 = vmatpush.msra.mxu0 %v1568
    %1581 = vmatpush.msra.mxu0 %v1566
    %1582 = vmatpush.msra.mxu0 %v1564
    %1583 = vmatpush.msra.mxu0 %v1562
    %1584 = vmatpush.msra.mxu0 %v1560
    %1585 = vmatpush.msra.mxu0 %v1558
    %1586 = vmatpush.msra.mxu0 %v1556
    %1587 = vmatpush.msra.mxu0 %v1554
    %1588 = vmatmul.f32.gmra.mxu0 %v1570
    %v1589 = vpop.f32.mrf.mxu0
    %v1590 = vadd.f32 0.0, %v1589
    %1591 = vdwg.mxu0
    %1592 = vmatpush.msra.mxu0 0.0
    %1593 = vmatpush.msra.mxu0 0.0
    %1594 = vmatpush.msra.mxu0 0.0
    %1595 = vmatpush.msra.mxu0 0.0
    %1596 = vmatpush.msra.mxu0 0.0
    %1597 = vmatpush.msra.mxu0 0.0
    %1598 = vmatpush.msra.mxu0 0.0
    %1599 = vmatpush.msra.mxu0 0.0
    %1600 = vmatpush.msra.mxu0 %v1569
    %1601 = vmatpush.msra.mxu0 %v1567
    %1602 = vmatpush.msra.mxu0 %v1565
    %1603 = vmatpush.msra.mxu0 %v1563
    %1604 = vmatpush.msra.mxu0 %v1561
    %1605 = vmatpush.msra.mxu0 %v1559
    %1606 = vmatpush.msra.mxu0 %v1557
    %1607 = vmatpush.msra.mxu0 %v1555
    %1608 = vmatmul.f32.gmra.mxu0 %v1570
    %v1609 = vpop.f32.mrf.mxu0
    %v1610 = vadd.f32 0.0, %v1609
    %1611 = vdwg.mxu0
    %v1612 = vadd.f32 %v1552, %v1590
    %v1613 = vadd.f32 %v1553, %v1610
    %v1614 = vxor.u32 %v1612, 2147483648
    %v1615 = vxor.u32 %v1613, 2147483648
    %v1616 = vmul.f32 %v1614, 1.442695
    %v1617 = vpow.pop %v1616
    %v1618 = vmul.f32 %v1615, 1.442695
    %v1619 = vpow.pop %v1618
    %v1620 = vadd.f32 %v1617, 1.0
    %v1621 = vadd.f32 %v1619, 1.0
    %v1622 = vrcp.pop %v1620
    %v1623 = vmul.f32 %v1620, %v1622
    %v1624 = vsub.f32 1.0, %v1623
    %v1625 = vmul.f32 %v1622, %v1624
    %v1626 = vadd.f32 %v1622, %v1625
    %vm1627 = vweird.f32 %v1620
    %vm1628 = vweird.f32 %v1622
    %vm1629 = vmor %vm1627, %vm1628
    %v1630 = vsel %vm1629, %v1622, %v1626
    %v1631 = vand.u32 2147483647, %v1620
    %vm1632 = vcmp.eq.f32.partialorder %v1631, 8.507059e+37
    %v1633 = vand.u32 %v1620, 2147483648
    %v1634 = vor.u32 1.1754944e-38, %v1633
    %v1635 = vsel %vm1632, %v1634, %v1630
    %v1636 = vmul.f32 1.0, %v1635
    %v1637 = vrcp.pop %v1621
    %v1638 = vmul.f32 %v1621, %v1637
    %v1639 = vsub.f32 1.0, %v1638
    %v1640 = vmul.f32 %v1637, %v1639
    %v1641 = vadd.f32 %v1637, %v1640
    %vm1642 = vweird.f32 %v1621
    %vm1643 = vweird.f32 %v1637
    %vm1644 = vmor %vm1642, %vm1643
    %v1645 = vsel %vm1644, %v1637, %v1641
    %v1646 = vand.u32 2147483647, %v1621
    %vm1647 = vcmp.eq.f32.partialorder %v1646, 8.507059e+37
    %v1648 = vand.u32 %v1621, 2147483648
    %v1649 = vor.u32 1.1754944e-38, %v1648
    %v1650 = vsel %vm1647, %v1649, %v1645
    %v1651 = vmul.f32 1.0, %v1650
    %v1652 = vtanh.pop %v1613
    %v1653 = vmul.f32 %v1636, %v1444
    %v1654 = vmul.f32 %v1636, %v1652
    %1656 = vrot.lane.b32.xlu0 %v1654, 64
    %v1657 = vpop.permute.xlu0 %1656
    %v1659 = vadd.f32 %v1653, %v1657
    %v1660 = vtanh.pop %v1659
    %v1661 = vmul.f32 %v1651, %v1660
    %1663 = vrot.lane.b32.xlu0 %v1661, 64
    %v1664 = vpop.permute.xlu0 %1663
    %s1666 = scalar_lea.vmem %s12, 40
    %1667 = vst.msk [vmem:[%s1666] sm:$0xff] %vm217, %v1664
    %v1668 = vld [vmem:[%s3] sm:$0xff]
    %v1669 = vld [vmem:[%s3 + $0x8] sm:$0xff]
    %v1670 = vld [vmem:[%s3 + $0x10] sm:$0xff]
    %v1671 = vld [vmem:[%s3 + $0x18] sm:$0xff]
    %v1672 = vld [vmem:[%s3 + $0x20] sm:$0xff]
    %v1673 = vld [vmem:[%s3 + $0x28] sm:$0xff]
    %v1674 = vld [vmem:[%s3 + $0x30] sm:$0xff]
    %v1675 = vld [vmem:[%s3 + $0x38] sm:$0xff]
    %v1676 = vld [vmem:[%s3 + $0x40] sm:$0xff]
    %v1677 = vld [vmem:[%s3 + $0x48] sm:$0xff]
    %v1678 = vld [vmem:[%s3 + $0x50] sm:$0xff]
    %v1679 = vld [vmem:[%s3 + $0x58] sm:$0xff]
    %v1680 = vld [vmem:[%s3 + $0x60] sm:$0xff]
    %v1681 = vld [vmem:[%s3 + $0x68] sm:$0xff]
    %v1682 = vld [vmem:[%s3 + $0x70] sm:$0xff]
    %v1683 = vld [vmem:[%s3 + $0x78] sm:$0xff]
    %v1684 = vsel %vm217, %v1547, 0
    %1686 = vmatpush.msra.mxu0 0.0
    %1687 = vmatpush.msra.mxu0 0.0
    %1688 = vmatpush.msra.mxu0 0.0
    %1689 = vmatpush.msra.mxu0 0.0
    %1690 = vmatpush.msra.mxu0 0.0
    %1691 = vmatpush.msra.mxu0 0.0
    %1692 = vmatpush.msra.mxu0 0.0
    %1693 = vmatpush.msra.mxu0 0.0
    %1694 = vmatpush.msra.mxu0 %v1682
    %1695 = vmatpush.msra.mxu0 %v1680
    %1696 = vmatpush.msra.mxu0 %v1678
    %1697 = vmatpush.msra.mxu0 %v1676
    %1698 = vmatpush.msra.mxu0 %v1674
    %1699 = vmatpush.msra.mxu0 %v1672
    %1700 = vmatpush.msra.mxu0 %v1670
    %1701 = vmatpush.msra.mxu0 %v1668
    %1702 = vmatmul.f32.gmra.mxu0 %v1684
    %v1703 = vpop.f32.mrf.mxu0
    %v1704 = vadd.f32 %v395, %v1703
    %1705 = vdwg.mxu0
    %1706 = vmatpush.msra.mxu0 0.0
    %1707 = vmatpush.msra.mxu0 0.0
    %1708 = vmatpush.msra.mxu0 0.0
    %1709 = vmatpush.msra.mxu0 0.0
    %1710 = vmatpush.msra.mxu0 0.0
    %1711 = vmatpush.msra.mxu0 0.0
    %1712 = vmatpush.msra.mxu0 0.0
    %1713 = vmatpush.msra.mxu0 0.0
    %1714 = vmatpush.msra.mxu0 %v1683
    %1715 = vmatpush.msra.mxu0 %v1681
    %1716 = vmatpush.msra.mxu0 %v1679
    %1717 = vmatpush.msra.mxu0 %v1677
    %1718 = vmatpush.msra.mxu0 %v1675
    %1719 = vmatpush.msra.mxu0 %v1673
    %1720 = vmatpush.msra.mxu0 %v1671
    %1721 = vmatpush.msra.mxu0 %v1669
    %1722 = vmatmul.f32.gmra.mxu0 %v1684
    %v1723 = vpop.f32.mrf.mxu0
    %v1724 = vadd.f32 %v396, %v1723
    %1725 = vdwg.mxu0
    %s1726 = scalar_lea.vmem [#allocation2], 96
    %v1727 = vld [vmem:[%s1726] sm:$0xff]
    %v1728 = vld [vmem:[%s1726 + $0x8] sm:$0xff]
    %v1729 = vadd.f32 %v1727, %v1704
    %v1730 = vxor.u32 %v1729, 2147483648
    %v1731 = vmul.f32 %v1730, 1.442695
    %v1732 = vpow.pop %v1731
    %v1733 = vadd.f32 %v1732, 1.0
    %v1734 = vrcp.pop %v1733
    %v1735 = vmul.f32 %v1733, %v1734
    %v1736 = vsub.f32 1.0, %v1735
    %v1737 = vmul.f32 %v1734, %v1736
    %v1738 = vadd.f32 %v1734, %v1737
    %vm1739 = vweird.f32 %v1733
    %vm1740 = vweird.f32 %v1734
    %vm1741 = vmor %vm1739, %vm1740
    %v1742 = vsel %vm1741, %v1734, %v1738
    %v1743 = vand.u32 2147483647, %v1733
    %vm1744 = vcmp.eq.f32.partialorder %v1743, 8.507059e+37
    %v1745 = vand.u32 %v1733, 2147483648
    %v1746 = vor.u32 1.1754944e-38, %v1745
    %v1747 = vsel %vm1744, %v1746, %v1742
    %v1748 = vmul.f32 1.0, %v1747
    %v1749 = vmul.f32 %v1748, %v1724
    %v1750 = vadd.f32 %v1728, %v1749
    %v1751 = vtanh.pop %v1750
    %v1752 = vsub.f32 1.0, %v1748
    %1754 = vrot.lane.b32.xlu0 %v1751, 64
    %v1755 = vpop.permute.xlu0 %1754
    %v1757 = vmul.f32 %v1752, %v1755
    %v1758 = vmul.f32 %v1748, %v1544
    %v1759 = vadd.f32 %v1757, %v1758
    %1761 = vrot.lane.b32.xlu0 %v1759, 64
    %v1762 = vpop.permute.xlu0 %1761
    %s1764 = scalar_lea.vmem %s11, 48
    %1765 = vst.msk [vmem:[%s1764] sm:$0xff] %vm217, %v1762
    %s1766 = scalar_lea.vmem [#allocation3], 96
    %v1767 = vld [vmem:[%s1766] sm:$0xff]
    %v1768 = vld [vmem:[%s1766 + $0x8] sm:$0xff]
    %v1769 = vld [vmem:[%s7] sm:$0xff]
    %v1770 = vld [vmem:[%s7 + $0x8] sm:$0xff]
    %v1771 = vld [vmem:[%s7 + $0x10] sm:$0xff]
    %v1772 = vld [vmem:[%s7 + $0x18] sm:$0xff]
    %v1773 = vld [vmem:[%s7 + $0x20] sm:$0xff]
    %v1774 = vld [vmem:[%s7 + $0x28] sm:$0xff]
    %v1775 = vld [vmem:[%s7 + $0x30] sm:$0xff]
    %v1776 = vld [vmem:[%s7 + $0x38] sm:$0xff]
    %v1777 = vld [vmem:[%s7 + $0x40] sm:$0xff]
    %v1778 = vld [vmem:[%s7 + $0x48] sm:$0xff]
    %v1779 = vld [vmem:[%s7 + $0x50] sm:$0xff]
    %v1780 = vld [vmem:[%s7 + $0x58] sm:$0xff]
    %v1781 = vld [vmem:[%s7 + $0x60] sm:$0xff]
    %v1782 = vld [vmem:[%s7 + $0x68] sm:$0xff]
    %v1783 = vld [vmem:[%s7 + $0x70] sm:$0xff]
    %v1784 = vld [vmem:[%s7 + $0x78] sm:$0xff]
    %v1785 = vsel %vm217, %v1664, 0
    %1787 = vmatpush.msra.mxu0 0.0
    %1788 = vmatpush.msra.mxu0 0.0
    %1789 = vmatpush.msra.mxu0 0.0
    %1790 = vmatpush.msra.mxu0 0.0
    %1791 = vmatpush.msra.mxu0 0.0
    %1792 = vmatpush.msra.mxu0 0.0
    %1793 = vmatpush.msra.mxu0 0.0
    %1794 = vmatpush.msra.mxu0 0.0
    %1795 = vmatpush.msra.mxu0 %v1783
    %1796 = vmatpush.msra.mxu0 %v1781
    %1797 = vmatpush.msra.mxu0 %v1779
    %1798 = vmatpush.msra.mxu0 %v1777
    %1799 = vmatpush.msra.mxu0 %v1775
    %1800 = vmatpush.msra.mxu0 %v1773
    %1801 = vmatpush.msra.mxu0 %v1771
    %1802 = vmatpush.msra.mxu0 %v1769
    %1803 = vmatmul.f32.gmra.mxu0 %v1785
    %v1804 = vpop.f32.mrf.mxu0
    %v1805 = vadd.f32 0.0, %v1804
    %1806 = vdwg.mxu0
    %1807 = vmatpush.msra.mxu0 0.0
    %1808 = vmatpush.msra.mxu0 0.0
    %1809 = vmatpush.msra.mxu0 0.0
    %1810 = vmatpush.msra.mxu0 0.0
    %1811 = vmatpush.msra.mxu0 0.0
    %1812 = vmatpush.msra.mxu0 0.0
    %1813 = vmatpush.msra.mxu0 0.0
    %1814 = vmatpush.msra.mxu0 0.0
    %1815 = vmatpush.msra.mxu0 %v1784
    %1816 = vmatpush.msra.mxu0 %v1782
    %1817 = vmatpush.msra.mxu0 %v1780
    %1818 = vmatpush.msra.mxu0 %v1778
    %1819 = vmatpush.msra.mxu0 %v1776
    %1820 = vmatpush.msra.mxu0 %v1774
    %1821 = vmatpush.msra.mxu0 %v1772
    %1822 = vmatpush.msra.mxu0 %v1770
    %1823 = vmatmul.f32.gmra.mxu0 %v1785
    %v1824 = vpop.f32.mrf.mxu0
    %v1825 = vadd.f32 0.0, %v1824
    %1826 = vdwg.mxu0
    %v1827 = vadd.f32 %v1767, %v1805
    %v1828 = vadd.f32 %v1768, %v1825
    %v1829 = vxor.u32 %v1827, 2147483648
    %v1830 = vxor.u32 %v1828, 2147483648
    %v1831 = vmul.f32 %v1829, 1.442695
    %v1832 = vpow.pop %v1831
    %v1833 = vmul.f32 %v1830, 1.442695
    %v1834 = vpow.pop %v1833
    %v1835 = vadd.f32 %v1832, 1.0
    %v1836 = vadd.f32 %v1834, 1.0
    %v1837 = vrcp.pop %v1835
    %v1838 = vmul.f32 %v1835, %v1837
    %v1839 = vsub.f32 1.0, %v1838
    %v1840 = vmul.f32 %v1837, %v1839
    %v1841 = vadd.f32 %v1837, %v1840
    %vm1842 = vweird.f32 %v1835
    %vm1843 = vweird.f32 %v1837
    %vm1844 = vmor %vm1842, %vm1843
    %v1845 = vsel %vm1844, %v1837, %v1841
    %v1846 = vand.u32 2147483647, %v1835
    %vm1847 = vcmp.eq.f32.partialorder %v1846, 8.507059e+37
    %v1848 = vand.u32 %v1835, 2147483648
    %v1849 = vor.u32 1.1754944e-38, %v1848
    %v1850 = vsel %vm1847, %v1849, %v1845
    %v1851 = vmul.f32 1.0, %v1850
    %v1852 = vrcp.pop %v1836
    %v1853 = vmul.f32 %v1836, %v1852
    %v1854 = vsub.f32 1.0, %v1853
    %v1855 = vmul.f32 %v1852, %v1854
    %v1856 = vadd.f32 %v1852, %v1855
    %vm1857 = vweird.f32 %v1836
    %vm1858 = vweird.f32 %v1852
    %vm1859 = vmor %vm1857, %vm1858
    %v1860 = vsel %vm1859, %v1852, %v1856
    %v1861 = vand.u32 2147483647, %v1836
    %vm1862 = vcmp.eq.f32.partialorder %v1861, 8.507059e+37
    %v1863 = vand.u32 %v1836, 2147483648
    %v1864 = vor.u32 1.1754944e-38, %v1863
    %v1865 = vsel %vm1862, %v1864, %v1860
    %v1866 = vmul.f32 1.0, %v1865
    %v1867 = vtanh.pop %v1828
    %v1868 = vmul.f32 %v1851, %v1659
    %v1869 = vmul.f32 %v1851, %v1867
    %1871 = vrot.lane.b32.xlu0 %v1869, 64
    %v1872 = vpop.permute.xlu0 %1871
    %v1874 = vadd.f32 %v1868, %v1872
    %v1875 = vtanh.pop %v1874
    %v1876 = vmul.f32 %v1866, %v1875
    %1878 = vrot.lane.b32.xlu0 %v1876, 64
    %v1879 = vpop.permute.xlu0 %1878
    %s1881 = scalar_lea.vmem %s12, 48
    %1882 = vst.msk [vmem:[%s1881] sm:$0xff] %vm217, %v1879
    %v1883 = vld [vmem:[%s3] sm:$0xff]
    %v1884 = vld [vmem:[%s3 + $0x8] sm:$0xff]
    %v1885 = vld [vmem:[%s3 + $0x10] sm:$0xff]
    %v1886 = vld [vmem:[%s3 + $0x18] sm:$0xff]
    %v1887 = vld [vmem:[%s3 + $0x20] sm:$0xff]
    %v1888 = vld [vmem:[%s3 + $0x28] sm:$0xff]
    %v1889 = vld [vmem:[%s3 + $0x30] sm:$0xff]
    %v1890 = vld [vmem:[%s3 + $0x38] sm:$0xff]
    %v1891 = vld [vmem:[%s3 + $0x40] sm:$0xff]
    %v1892 = vld [vmem:[%s3 + $0x48] sm:$0xff]
    %v1893 = vld [vmem:[%s3 + $0x50] sm:$0xff]
    %v1894 = vld [vmem:[%s3 + $0x58] sm:$0xff]
    %v1895 = vld [vmem:[%s3 + $0x60] sm:$0xff]
    %v1896 = vld [vmem:[%s3 + $0x68] sm:$0xff]
    %v1897 = vld [vmem:[%s3 + $0x70] sm:$0xff]
    %v1898 = vld [vmem:[%s3 + $0x78] sm:$0xff]
    %v1899 = vsel %vm217, %v1762, 0
    %1901 = vmatpush.msra.mxu0 0.0
    %1902 = vmatpush.msra.mxu0 0.0
    %1903 = vmatpush.msra.mxu0 0.0
    %1904 = vmatpush.msra.mxu0 0.0
    %1905 = vmatpush.msra.mxu0 0.0
    %1906 = vmatpush.msra.mxu0 0.0
    %1907 = vmatpush.msra.mxu0 0.0
    %1908 = vmatpush.msra.mxu0 0.0
    %1909 = vmatpush.msra.mxu0 %v1897
    %1910 = vmatpush.msra.mxu0 %v1895
    %1911 = vmatpush.msra.mxu0 %v1893
    %1912 = vmatpush.msra.mxu0 %v1891
    %1913 = vmatpush.msra.mxu0 %v1889
    %1914 = vmatpush.msra.mxu0 %v1887
    %1915 = vmatpush.msra.mxu0 %v1885
    %1916 = vmatpush.msra.mxu0 %v1883
    %1917 = vmatmul.f32.gmra.mxu0 %v1899
    %v1918 = vpop.f32.mrf.mxu0
    %v1919 = vadd.f32 %v395, %v1918
    %1920 = vdwg.mxu0
    %1921 = vmatpush.msra.mxu0 0.0
    %1922 = vmatpush.msra.mxu0 0.0
    %1923 = vmatpush.msra.mxu0 0.0
    %1924 = vmatpush.msra.mxu0 0.0
    %1925 = vmatpush.msra.mxu0 0.0
    %1926 = vmatpush.msra.mxu0 0.0
    %1927 = vmatpush.msra.mxu0 0.0
    %1928 = vmatpush.msra.mxu0 0.0
    %1929 = vmatpush.msra.mxu0 %v1898
    %1930 = vmatpush.msra.mxu0 %v1896
    %1931 = vmatpush.msra.mxu0 %v1894
    %1932 = vmatpush.msra.mxu0 %v1892
    %1933 = vmatpush.msra.mxu0 %v1890
    %1934 = vmatpush.msra.mxu0 %v1888
    %1935 = vmatpush.msra.mxu0 %v1886
    %1936 = vmatpush.msra.mxu0 %v1884
    %1937 = vmatmul.f32.gmra.mxu0 %v1899
    %v1938 = vpop.f32.mrf.mxu0
    %v1939 = vadd.f32 %v396, %v1938
    %1940 = vdwg.mxu0
    %s1941 = scalar_lea.vmem [#allocation2], 112
    %v1942 = vld [vmem:[%s1941] sm:$0xff]
    %v1943 = vld [vmem:[%s1941 + $0x8] sm:$0xff]
    %v1944 = vadd.f32 %v1942, %v1919
    %v1945 = vxor.u32 %v1944, 2147483648
    %v1946 = vmul.f32 %v1945, 1.442695
    %v1947 = vpow.pop %v1946
    %v1948 = vadd.f32 %v1947, 1.0
    %v1949 = vrcp.pop %v1948
    %v1950 = vmul.f32 %v1948, %v1949
    %v1951 = vsub.f32 1.0, %v1950
    %v1952 = vmul.f32 %v1949, %v1951
    %v1953 = vadd.f32 %v1949, %v1952
    %vm1954 = vweird.f32 %v1948
    %vm1955 = vweird.f32 %v1949
    %vm1956 = vmor %vm1954, %vm1955
    %v1957 = vsel %vm1956, %v1949, %v1953
    %v1958 = vand.u32 2147483647, %v1948
    %vm1959 = vcmp.eq.f32.partialorder %v1958, 8.507059e+37
    %v1960 = vand.u32 %v1948, 2147483648
    %v1961 = vor.u32 1.1754944e-38, %v1960
    %v1962 = vsel %vm1959, %v1961, %v1957
    %v1963 = vmul.f32 1.0, %v1962
    %v1964 = vmul.f32 %v1963, %v1939
    %v1965 = vadd.f32 %v1943, %v1964
    %v1966 = vtanh.pop %v1965
    %v1967 = vsub.f32 1.0, %v1963
    %1969 = vrot.lane.b32.xlu0 %v1966, 64
    %v1970 = vpop.permute.xlu0 %1969
    %v1972 = vmul.f32 %v1967, %v1970
    %v1973 = vmul.f32 %v1963, %v1759
    %v1974 = vadd.f32 %v1972, %v1973
    %1976 = vrot.lane.b32.xlu0 %v1974, 64
    %v1977 = vpop.permute.xlu0 %1976
    %s1979 = scalar_lea.vmem %s11, 56
    %1980 = vst.msk [vmem:[%s1979] sm:$0xff] %vm217, %v1977
    %s1981 = scalar_lea.vmem [#allocation3], 112
    %v1982 = vld [vmem:[%s1981] sm:$0xff]
    %v1983 = vld [vmem:[%s1981 + $0x8] sm:$0xff]
    %v1984 = vld [vmem:[%s7] sm:$0xff]
    %v1985 = vld [vmem:[%s7 + $0x8] sm:$0xff]
    %v1986 = vld [vmem:[%s7 + $0x10] sm:$0xff]
    %v1987 = vld [vmem:[%s7 + $0x18] sm:$0xff]
    %v1988 = vld [vmem:[%s7 + $0x20] sm:$0xff]
    %v1989 = vld [vmem:[%s7 + $0x28] sm:$0xff]
    %v1990 = vld [vmem:[%s7 + $0x30] sm:$0xff]
    %v1991 = vld [vmem:[%s7 + $0x38] sm:$0xff]
    %v1992 = vld [vmem:[%s7 + $0x40] sm:$0xff]
    %v1993 = vld [vmem:[%s7 + $0x48] sm:$0xff]
    %v1994 = vld [vmem:[%s7 + $0x50] sm:$0xff]
    %v1995 = vld [vmem:[%s7 + $0x58] sm:$0xff]
    %v1996 = vld [vmem:[%s7 + $0x60] sm:$0xff]
    %v1997 = vld [vmem:[%s7 + $0x68] sm:$0xff]
    %v1998 = vld [vmem:[%s7 + $0x70] sm:$0xff]
    %v1999 = vld [vmem:[%s7 + $0x78] sm:$0xff]
    %v2000 = vsel %vm217, %v1879, 0
    %2002 = vmatpush.msra.mxu0 0.0
    %2003 = vmatpush.msra.mxu0 0.0
    %2004 = vmatpush.msra.mxu0 0.0
    %2005 = vmatpush.msra.mxu0 0.0
    %2006 = vmatpush.msra.mxu0 0.0
    %2007 = vmatpush.msra.mxu0 0.0
    %2008 = vmatpush.msra.mxu0 0.0
    %2009 = vmatpush.msra.mxu0 0.0
    %2010 = vmatpush.msra.mxu0 %v1998
    %2011 = vmatpush.msra.mxu0 %v1996
    %2012 = vmatpush.msra.mxu0 %v1994
    %2013 = vmatpush.msra.mxu0 %v1992
    %2014 = vmatpush.msra.mxu0 %v1990
    %2015 = vmatpush.msra.mxu0 %v1988
    %2016 = vmatpush.msra.mxu0 %v1986
    %2017 = vmatpush.msra.mxu0 %v1984
    %2018 = vmatmul.f32.gmra.mxu0 %v2000
    %v2019 = vpop.f32.mrf.mxu0
    %v2020 = vadd.f32 0.0, %v2019
    %2021 = vdwg.mxu0
    %2022 = vmatpush.msra.mxu0 0.0
    %2023 = vmatpush.msra.mxu0 0.0
    %2024 = vmatpush.msra.mxu0 0.0
    %2025 = vmatpush.msra.mxu0 0.0
    %2026 = vmatpush.msra.mxu0 0.0
    %2027 = vmatpush.msra.mxu0 0.0
    %2028 = vmatpush.msra.mxu0 0.0
    %2029 = vmatpush.msra.mxu0 0.0
    %2030 = vmatpush.msra.mxu0 %v1999
    %2031 = vmatpush.msra.mxu0 %v1997
    %2032 = vmatpush.msra.mxu0 %v1995
    %2033 = vmatpush.msra.mxu0 %v1993
    %2034 = vmatpush.msra.mxu0 %v1991
    %2035 = vmatpush.msra.mxu0 %v1989
    %2036 = vmatpush.msra.mxu0 %v1987
    %2037 = vmatpush.msra.mxu0 %v1985
    %2038 = vmatmul.f32.gmra.mxu0 %v2000
    %v2039 = vpop.f32.mrf.mxu0
    %v2040 = vadd.f32 0.0, %v2039
    %2041 = vdwg.mxu0
    %v2042 = vadd.f32 %v1982, %v2020
    %v2043 = vadd.f32 %v1983, %v2040
    %v2044 = vxor.u32 %v2042, 2147483648
    %v2045 = vxor.u32 %v2043, 2147483648
    %v2046 = vmul.f32 %v2044, 1.442695
    %v2047 = vpow.pop %v2046
    %v2048 = vmul.f32 %v2045, 1.442695
    %v2049 = vpow.pop %v2048
    %v2050 = vadd.f32 %v2047, 1.0
    %v2051 = vadd.f32 %v2049, 1.0
    %v2052 = vrcp.pop %v2050
    %v2053 = vmul.f32 %v2050, %v2052
    %v2054 = vsub.f32 1.0, %v2053
    %v2055 = vmul.f32 %v2052, %v2054
    %v2056 = vadd.f32 %v2052, %v2055
    %vm2057 = vweird.f32 %v2050
    %vm2058 = vweird.f32 %v2052
    %vm2059 = vmor %vm2057, %vm2058
    %v2060 = vsel %vm2059, %v2052, %v2056
    %v2061 = vand.u32 2147483647, %v2050
    %vm2062 = vcmp.eq.f32.partialorder %v2061, 8.507059e+37
    %v2063 = vand.u32 %v2050, 2147483648
    %v2064 = vor.u32 1.1754944e-38, %v2063
    %v2065 = vsel %vm2062, %v2064, %v2060
    %v2066 = vmul.f32 1.0, %v2065
    %v2067 = vrcp.pop %v2051
    %v2068 = vmul.f32 %v2051, %v2067
    %v2069 = vsub.f32 1.0, %v2068
    %v2070 = vmul.f32 %v2067, %v2069
    %v2071 = vadd.f32 %v2067, %v2070
    %vm2072 = vweird.f32 %v2051
    %vm2073 = vweird.f32 %v2067
    %vm2074 = vmor %vm2072, %vm2073
    %v2075 = vsel %vm2074, %v2067, %v2071
    %v2076 = vand.u32 2147483647, %v2051
    %vm2077 = vcmp.eq.f32.partialorder %v2076, 8.507059e+37
    %v2078 = vand.u32 %v2051, 2147483648
    %v2079 = vor.u32 1.1754944e-38, %v2078
    %v2080 = vsel %vm2077, %v2079, %v2075
    %v2081 = vmul.f32 1.0, %v2080
    %v2082 = vtanh.pop %v2043
    %v2083 = vmul.f32 %v2066, %v1874
    %v2084 = vmul.f32 %v2066, %v2082
    %2086 = vrot.lane.b32.xlu0 %v2084, 64
    %v2087 = vpop.permute.xlu0 %2086
    %v2089 = vadd.f32 %v2083, %v2087
    %v2090 = vtanh.pop %v2089
    %v2091 = vmul.f32 %v2081, %v2090
    %2093 = vrot.lane.b32.xlu0 %v2091, 64
    %v2094 = vpop.permute.xlu0 %2093
    %s2096 = scalar_lea.vmem %s12, 56
    %2097 = vst.msk [vmem:[%s2096] sm:$0xff] %vm217, %v2094
    %v2098 = vld [vmem:[%s11] sm:$0xff]
    %v2099 = vld [vmem:[%s11 + $0x8] sm:$0xff]
    %v2100 = vld [vmem:[%s11 + $0x10] sm:$0xff]
    %v2101 = vld [vmem:[%s11 + $0x18] sm:$0xff]
    %v2102 = vld [vmem:[%s11 + $0x20] sm:$0xff]
    %v2103 = vld [vmem:[%s11 + $0x28] sm:$0xff]
    %v2104 = vld [vmem:[%s11 + $0x30] sm:$0xff]
    %v2105 = vld [vmem:[%s11 + $0x38] sm:$0xff]
    %v2106 = vld [vmem:[#allocation9] sm:$0xff]
    %v2107 = vld [vmem:[#allocation9 + $0x8] sm:$0xff]
    %v2108 = vld [vmem:[#allocation9 + $0x10] sm:$0xff]
    %v2109 = vld [vmem:[#allocation9 + $0x18] sm:$0xff]
    %v2110 = vld [vmem:[#allocation9 + $0x20] sm:$0xff]
    %v2111 = vld [vmem:[#allocation9 + $0x28] sm:$0xff]
    %v2112 = vld [vmem:[#allocation9 + $0x30] sm:$0xff]
    %v2113 = vld [vmem:[#allocation9 + $0x38] sm:$0xff]
    %v2114 = vld [vmem:[%s10] sm:$0x1]
    %v2116 = vperm.slane %v2114, 0
    %v2119 = vsel %vm217, %v2098, 0
    %v2122 = vsel %vm217, %v2099, 0
    %v2125 = vsel %vm217, %v2100, 0
    %v2128 = vsel %vm217, %v2101, 0
    %v2131 = vsel %vm217, %v2102, 0
    %v2134 = vsel %vm217, %v2103, 0
    %v2137 = vsel %vm217, %v2104, 0
    %v2140 = vsel %vm217, %v2105, 0
    %2142 = vmatpush.msra.mxu0 0.0
    %2143 = vmatpush.msra.mxu0 0.0
    %2144 = vmatpush.msra.mxu0 0.0
    %2145 = vmatpush.msra.mxu0 0.0
    %2146 = vmatpush.msra.mxu0 0.0
    %2147 = vmatpush.msra.mxu0 0.0
    %2148 = vmatpush.msra.mxu0 0.0
    %2149 = vmatpush.msra.mxu0 0.0
    %2150 = vmatpush.msra.mxu0 %v2113
    %2151 = vmatpush.msra.mxu0 %v2112
    %2152 = vmatpush.msra.mxu0 %v2111
    %2153 = vmatpush.msra.mxu0 %v2110
    %2154 = vmatpush.msra.mxu0 %v2109
    %2155 = vmatpush.msra.mxu0 %v2108
    %2156 = vmatpush.msra.mxu0 %v2107
    %2157 = vmatpush.msra.mxu0 %v2106
    %2158 = vmatmul.f32.gmra.mxu0 %v2119
    %v2159 = vpop.f32.mrf.mxu0
    %v2160 = vadd.f32 %v2116, %v2159
    %2161 = vmatmul.f32.gmra.mxu0 %v2122
    %v2162 = vpop.f32.mrf.mxu0
    %v2163 = vadd.f32 %v2116, %v2162
    %2164 = vmatmul.f32.gmra.mxu0 %v2125
    %v2165 = vpop.f32.mrf.mxu0
    %v2166 = vadd.f32 %v2116, %v2165
    %2167 = vmatmul.f32.gmra.mxu0 %v2128
    %v2168 = vpop.f32.mrf.mxu0
    %v2169 = vadd.f32 %v2116, %v2168
    %2170 = vmatmul.f32.gmra.mxu0 %v2131
    %v2171 = vpop.f32.mrf.mxu0
    %v2172 = vadd.f32 %v2116, %v2171
    %2173 = vmatmul.f32.gmra.mxu0 %v2134
    %v2174 = vpop.f32.mrf.mxu0
    %v2175 = vadd.f32 %v2116, %v2174
    %2176 = vmatmul.f32.gmra.mxu0 %v2137
    %v2177 = vpop.f32.mrf.mxu0
    %v2178 = vadd.f32 %v2116, %v2177
    %2179 = vmatmul.f32.gmra.mxu0 %v2140
    %v2180 = vpop.f32.mrf.mxu0
    %v2181 = vadd.f32 %v2116, %v2180
    %2182 = vdwg.mxu0
    %2183 = vst.msk [vmem:[#allocation10] sm:$0xff] %vm217, %v2160
    %2184 = vst.msk [vmem:[#allocation10 + $0x8] sm:$0xff] %vm217, %v2163
    %2185 = vst.msk [vmem:[#allocation10 + $0x10] sm:$0xff] %vm217, %v2166
    %2186 = vst.msk [vmem:[#allocation10 + $0x18] sm:$0xff] %vm217, %v2169
    %2187 = vst.msk [vmem:[#allocation10 + $0x20] sm:$0xff] %vm217, %v2172
    %2188 = vst.msk [vmem:[#allocation10 + $0x28] sm:$0xff] %vm217, %v2175
    %2189 = vst.msk [vmem:[#allocation10 + $0x30] sm:$0xff] %vm217, %v2178
    %2190 = vst.msk [vmem:[#allocation10 + $0x38] sm:$0xff] %vm217, %v2181
    // Predicated region
    $region58: #{pipeline.1} parent=1 // pred_check
      _
    $region59: #{pipeline.1} parent=1 // pred_check_branch
      %2192 = sbr.rel (0) target = $region61
    $region60: #{pipeline.1} parent=1 // pred_region
      _
    $region61: #{pipeline.1} parent=1 // pred_fallthru
      _
    // Predicated region
    $region62: #{pipeline.1} parent=1 // pred_check
      _
    $region63: #{pipeline.1} parent=1 // pred_check_branch
      %2194 = sbr.rel (0) target = $region65
    $region64: #{pipeline.1} parent=1 // pred_region
      _
    $region65: #{pipeline.1} parent=1 // pred_fallthru
      _
    // Predicated region
    $region66: #{pipeline.1} parent=1 // pred_check
      _
    $region67: #{pipeline.1} parent=1 // pred_check_branch
      %2196 = sbr.rel (0) target = $region69
    $region68: #{pipeline.1} parent=1 // pred_region
      %2198 = vsyncadd [#allocation6], 0
      %s2199 = sshll.u32 [#allocation10], 4
      %s2200 = int_to_ptr.vmem [resolvable:$true] %s2199
      %s2201 = sshll.u32 %s13, 4
      %s2202 = int_to_ptr.hbm [resolvable:$true] %s2201
      %2207 = dma.vmem_to_hbm [thread:$0]  %s2200, 1024, %s2202, [#allocation6], 128, 128, 8
    $region69: #{pipeline.1} parent=1 // pred_fallthru
      _
    // Predicated region
    $region70: #{pipeline.1} parent=1 // pred_check
      _
    $region71: #{pipeline.1} parent=1 // pred_check_branch
      %2209 = sbr.rel (0) target = $region73
    $region72: #{pipeline.1} parent=1 // pred_region
      _
    $region73: #{pipeline.1} parent=1 // pred_fallthru
      _
    // Predicated region
    $region74: #{pipeline.1} parent=1 // pred_check
      _
    $region75: #{pipeline.1} parent=1 // pred_check_branch
      %2211 = sbr.rel (0) target = $region77
    $region76: #{pipeline.1} parent=1 // pred_region
      _
    $region77: #{pipeline.1} parent=1 // pred_fallthru
      _
    // Predicated region
    $region78: #{pipeline.1} parent=1 // pred_check
      _
    $region79: #{pipeline.1} parent=1 // pred_check_branch
      %2213 = sbr.rel (0) target = $region81
    $region80: #{pipeline.1} parent=1 // pred_region
      %2215 = dma.done [#allocation6], 1024
    $region81: #{pipeline.1} parent=1 // pred_fallthru
      _
    %2216 = vsyncpa [#allocation5], 1
    %2217 = vsyncpa [#allocation8], 1
    %2218 = vsyncpa [#allocation6], 1

</llo_original>
